<compile_context>
chip_gen: v5e
topology: v5e:2x2
jax: 0.10.0
libtpu: 0.0.40
codegen_flags: <defaults>
</compile_context>

<pallas_src>
import jax
import jax.numpy as jnp
from jax.experimental import pallas as pl
from jax.experimental.pallas import tpu as pltpu


def net_kernel(x_ref, w_ref, b_ref, o_ref):
    # TODO(synk): the external backbone's conv stack is not reconstructible from this
    # module; only its final global-average-pool plus Net's flatten + Linear are here.
    x = x_ref[...].astype(jnp.float32)                 # (tb, C, HW), f32 accumulation
    feat = jnp.sum(x, axis=-1)                         # global sum pool -> (tb, C)
    logits = jnp.dot(feat, w_ref[...],                 # (tb, C) @ (C, N_PAD) on MXU
                     preferred_element_type=jnp.float32)
    o_ref[...] = (logits + b_ref[...]).astype(o_ref.dtype)


def net_forward(x_nchw, fc_weight, fc_bias, *, x_dtype=None):
    """x_nchw: (B, 2048, H, W); fc_weight: (CLASS, 2048); fc_bias: (CLASS,)."""
    B, C, H, W = x_nchw.shape
    CLASS = fc_weight.shape[0]
    HW = H * W
    N_PAD = 128 * pl.cdiv(CLASS, 128)                  # lane-dense output width

    # Free view (no transpose, no HBM round-trip); optional bf16 storage cast.
    x_flat = x_nchw.reshape(B, C, HW)
    if x_dtype is not None:
        x_flat = x_flat.astype(x_dtype)

    # Fold the 1/(H*W) pooling scale into the (transposed) fc weight; pad N to 128.
    w_t = (jnp.transpose(fc_weight, (1, 0)) / HW).astype(jnp.float32)   # (C, CLASS)
    w_pad = jnp.zeros((C, N_PAD), jnp.float32).at[:, :CLASS].set(w_t)
    b_pad = jnp.zeros((1, N_PAD), jnp.float32).at[:, :CLASS].set(
        fc_bias.astype(jnp.float32).reshape(1, CLASS))

    # Batch tile: full B for small batches, otherwise 8-row tiles (keeps the
    # double-buffered x block well inside VMEM and exposes megacore parallelism).
    tb = B if B < 8 else 8
    grid = (pl.cdiv(B, tb),)

    out = pl.pallas_call(
        net_kernel,
        out_shape=jax.ShapeDtypeStruct((B, N_PAD), jnp.float32),
        grid=grid,
        in_specs=[
            pl.BlockSpec((tb, C, HW), lambda i: (i, 0, 0)),
            pl.BlockSpec((C, N_PAD), lambda i: (0, 0)),
            pl.BlockSpec((1, N_PAD), lambda i: (0, 0)),
        ],
        out_specs=pl.BlockSpec((tb, N_PAD), lambda i: (i, 0)),
        compiler_params=pltpu.CompilerParams(
            dimension_semantics=("parallel",)),
    )(x_flat, w_pad, b_pad)

    return out[:, :CLASS]


if __name__ == "__main__":
    B, C, H, W = 2, 2048, 4, 4        # 2048 channels required by fc in_features
    CLASS = 102

    key = jax.random.PRNGKey(0)
    kx, kw, kb = jax.random.split(key, 3)

    # deterministic synthetic feature map + fc parameters (PyTorch Linear shapes)
    x = jax.random.normal(kx, (B, C, H, W), dtype=jnp.float32)
    bound = 1.0 / (C ** 0.5)
    fc_weight = jax.random.uniform(kw, (CLASS, C), jnp.float32, -bound, bound)
    fc_bias = jax.random.uniform(kb, (CLASS,), jnp.float32, -bound, bound)

    # reference in plain JAX
    feat_ref = jnp.mean(x, axis=(2, 3))                # (B, 2048)
    ref = feat_ref @ fc_weight.T + fc_bias             # (B, 102)

    # f32 path (exact-tolerance check)
    out = jax.block_until_ready(net_forward(x, fc_weight, fc_bias))
    assert out.shape == (B, CLASS)
    assert jnp.allclose(out, ref, atol=1e-4, rtol=1e-4)

    # bf16-storage path (halves HBM traffic on v6e/v7x; f32 accumulation in-kernel)
    out_bf16 = jax.block_until_ready(
        net_forward(x, fc_weight, fc_bias, x_dtype=jnp.bfloat16))
    assert out_bf16.shape == (B, CLASS)
    assert jnp.allclose(out_bf16, ref, atol=2e-2, rtol=2e-2)

    print("KERNEL_OK")
</pallas_src>

<mosaic_0001>
module attributes {stable_mosaic.version = 11 : i64} {
  func.func @net_kernel(%arg0: i32, %arg1: memref<2x2048x16xf32, #tpu.memory_space<vmem>>, %arg2: memref<2048x128xf32, #tpu.memory_space<vmem>>, %arg3: memref<1x128xf32, #tpu.memory_space<vmem>>, %arg4: memref<2x128xf32, #tpu.memory_space<vmem>>) attributes {dimension_semantics = [#tpu.dimension_semantics<parallel>], iteration_bounds = array<i64: 1>, scalar_prefetch = 0 : i64, scratch_operands = 0 : i64, tpu.core_type = #tpu.core_type<tc>, window_params = [{transform_indices = @transform_0, window_bounds = array<i64: 2, 2048, 16>}, {pipeline_mode = #tpu.pipeline_mode<synchronous>, transform_indices = @transform_1, window_bounds = array<i64: 2048, 128>}, {pipeline_mode = #tpu.pipeline_mode<synchronous>, transform_indices = @transform_2, window_bounds = array<i64: 1, 128>}, {transform_indices = @transform_3, window_bounds = array<i64: 2, 128>}]} {
    %c0 = arith.constant 0 : index
    %c0_0 = arith.constant 0 : index
    %c0_1 = arith.constant 0 : index
    %0 = vector.load %arg1[%c0, %c0_0, %c0_1] : memref<2x2048x16xf32, #tpu.memory_space<vmem>>, vector<2x2048x16xf32>
    %cst = arith.constant dense<0.000000e+00> : vector<2x2048xf32>
    %1 = vector.multi_reduction <add>, %0, %cst [2] : vector<2x2048x16xf32> to vector<2x2048xf32>
    %c0_2 = arith.constant 0 : index
    %c0_3 = arith.constant 0 : index
    %2 = vector.load %arg2[%c0_2, %c0_3] : memref<2048x128xf32, #tpu.memory_space<vmem>>, vector<2048x128xf32>
    %cst_4 = arith.constant dense<0.000000e+00> : vector<2x128xf32>
    %3 = tpu.matmul %1, %2, %cst_4 {dimension_numbers = #tpu.dot_dimension_numbers<[1], [0], [0], [1], [0, 0, 1, 1], [], []>} : vector<2x2048xf32>, vector<2048x128xf32>, vector<2x128xf32> -> vector<2x128xf32>
    %c0_5 = arith.constant 0 : index
    %c0_6 = arith.constant 0 : index
    %4 = vector.load %arg3[%c0_5, %c0_6] : memref<1x128xf32, #tpu.memory_space<vmem>>, vector<1x128xf32>
    %5 = vector.broadcast %4 : vector<1x128xf32> to vector<2x128xf32>
    %6 = arith.addf %3, %5 : vector<2x128xf32>
    %c0_7 = arith.constant 0 : index
    %c0_8 = arith.constant 0 : index
    %7 = vector.load %arg4[%c0_7, %c0_8] : memref<2x128xf32, #tpu.memory_space<vmem>>, vector<2x128xf32>
    tpu.vector_store %arg4[%c0_7, %c0_8], %6 {strides = array<i32>} : memref<2x128xf32, #tpu.memory_space<vmem>>, vector<2x128xf32>,
    return
  }
  func.func @transform_0(%arg0: i32) -> (i32, i32, i32) {
    %c0_i32 = arith.constant 0 : i32
    %c0_i32_0 = arith.constant 0 : i32
    %c0_i32_1 = arith.constant 0 : i32
    return %arg0, %c0_i32, %c0_i32_0 : i32, i32, i32
  }
  func.func @transform_1(%arg0: i32) -> (i32, i32) {
    %c0_i32 = arith.constant 0 : i32
    %c0_i32_0 = arith.constant 0 : i32
    %c0_i32_1 = arith.constant 0 : i32
    return %c0_i32, %c0_i32_0 : i32, i32
  }
  func.func @transform_2(%arg0: i32) -> (i32, i32) {
    %c0_i32 = arith.constant 0 : i32
    %c0_i32_0 = arith.constant 0 : i32
    %c0_i32_1 = arith.constant 0 : i32
    return %c0_i32, %c0_i32_0 : i32, i32
  }
  func.func @transform_3(%arg0: i32) -> (i32, i32) {
    %c0_i32 = arith.constant 0 : i32
    %c0_i32_0 = arith.constant 0 : i32
    return %arg0, %c0_i32 : i32, i32
  }
}

</mosaic_0001>

<llo_original>
// kernel: tpu_custom_call.1
$region0: #{tpu_custom_call.1}
  #allocation0 [shape = 'u32[]', space=smem, size = 0x4, offset = 0x4, fixed_abs, tag = 'smem constant byte address 0x4 - core index']
  #allocation1 [shape = 'u32[72,128]{1,0:T(1,128)}', space=vmem, size = 0x9000, scoped, tag = 'internal scratch']
  %s0 = inlined_call_operand.vmem [shape: f32[2,2048,16], index: 0, kind: input, shape index: {}]
  %s1 = inlined_call_operand.vmem [shape: f32[2048,128], index: 1, kind: input, shape index: {}]
  %s2 = inlined_call_operand.vmem [shape: f32[1,128], index: 2, kind: input, shape index: {}]
  %s3 = inlined_call_operand.hbm [shape: f32[2,128], index: 3, kind: output, shape index: {}]
  %s4 = sld [smem:[#allocation0]]
  $region22: #{tpu_custom_call.1} parent=0
    _
  %s6 = ssub.s32 1, %s4
  %s7 = scalar_select 0, %s6, %s4
  $region1: #{tpu_custom_call.1} parent=0
    #allocation2 [shape = 'u8[1024]{0}', space=vmem, size = 0x400, scoped, tag = 'output window, operand 0, single buffered']
    #allocation3 [shape = 's32[1]{0}', space=sflag, size = 0x4, scoped, tag = 'scoped memory for tpu_custom_call.1']
    %8 = vsyncpa [#allocation3], 0
    // Predicated region
    $region2: #{tpu_custom_call.1} parent=1 // pred_check
      _
    $region3: #{tpu_custom_call.1} parent=1 // pred_check_branch
      %10 = sbr.rel (0) target = $region5
    $region4: #{tpu_custom_call.1} parent=1 // pred_region
      _
    $region5: #{tpu_custom_call.1} parent=1 // pred_fallthru
      _
    // Predicated region
    $region6: #{tpu_custom_call.1} parent=1 // pred_check
      _
    $region7: #{tpu_custom_call.1} parent=1 // pred_check_branch
      %12 = sbr.rel (0) target = $region9
    $region8: #{tpu_custom_call.1} parent=1 // pred_region
      _
    $region9: #{tpu_custom_call.1} parent=1 // pred_fallthru
      _
    // Predicated region
    $region10: #{tpu_custom_call.1} parent=1 // pred_check
      _
    $region11: #{tpu_custom_call.1} parent=1 // pred_check_branch
      %14 = sbr.rel (0) target = $region13
    $region12: #{tpu_custom_call.1} parent=1 // pred_region
      _
    $region13: #{tpu_custom_call.1} parent=1 // pred_fallthru
      _
    %v15 = vld [vmem:[%s0] sm:$0xff]
    %v16 = vld [vmem:[%s0 + $0x8] sm:$0xff]
    %v17 = vld [vmem:[%s0 + $0x10] sm:$0xff]
    %v18 = vld [vmem:[%s0 + $0x18] sm:$0xff]
    %v19 = vld [vmem:[%s0 + $0x20] sm:$0xff]
    %v20 = vld [vmem:[%s0 + $0x28] sm:$0xff]
    %v21 = vld [vmem:[%s0 + $0x30] sm:$0xff]
    %v22 = vld [vmem:[%s0 + $0x38] sm:$0xff]
    %v23 = vld [vmem:[%s0 + $0x40] sm:$0xff]
    %v24 = vld [vmem:[%s0 + $0x48] sm:$0xff]
    %v25 = vld [vmem:[%s0 + $0x50] sm:$0xff]
    %v26 = vld [vmem:[%s0 + $0x58] sm:$0xff]
    %v27 = vld [vmem:[%s0 + $0x60] sm:$0xff]
    %v28 = vld [vmem:[%s0 + $0x68] sm:$0xff]
    %v29 = vld [vmem:[%s0 + $0x70] sm:$0xff]
    %v30 = vld [vmem:[%s0 + $0x78] sm:$0xff]
    %v31 = vld [vmem:[%s0 + $0x80] sm:$0xff]
    %v32 = vld [vmem:[%s0 + $0x88] sm:$0xff]
    %v33 = vld [vmem:[%s0 + $0x90] sm:$0xff]
    %v34 = vld [vmem:[%s0 + $0x98] sm:$0xff]
    %v35 = vld [vmem:[%s0 + $0xa0] sm:$0xff]
    %v36 = vld [vmem:[%s0 + $0xa8] sm:$0xff]
    %v37 = vld [vmem:[%s0 + $0xb0] sm:$0xff]
    %v38 = vld [vmem:[%s0 + $0xb8] sm:$0xff]
    %v39 = vld [vmem:[%s0 + $0xc0] sm:$0xff]
    %v40 = vld [vmem:[%s0 + $0xc8] sm:$0xff]
    %v41 = vld [vmem:[%s0 + $0xd0] sm:$0xff]
    %v42 = vld [vmem:[%s0 + $0xd8] sm:$0xff]
    %v43 = vld [vmem:[%s0 + $0xe0] sm:$0xff]
    %v44 = vld [vmem:[%s0 + $0xe8] sm:$0xff]
    %v45 = vld [vmem:[%s0 + $0xf0] sm:$0xff]
    %v46 = vld [vmem:[%s0 + $0xf8] sm:$0xff]
    %v47 = vld [vmem:[%s0 + $0x100] sm:$0xff]
    %v48 = vld [vmem:[%s0 + $0x108] sm:$0xff]
    %v49 = vld [vmem:[%s0 + $0x110] sm:$0xff]
    %v50 = vld [vmem:[%s0 + $0x118] sm:$0xff]
    %v51 = vld [vmem:[%s0 + $0x120] sm:$0xff]
    %v52 = vld [vmem:[%s0 + $0x128] sm:$0xff]
    %v53 = vld [vmem:[%s0 + $0x130] sm:$0xff]
    %v54 = vld [vmem:[%s0 + $0x138] sm:$0xff]
    %v55 = vld [vmem:[%s0 + $0x140] sm:$0xff]
    %v56 = vld [vmem:[%s0 + $0x148] sm:$0xff]
    %v57 = vld [vmem:[%s0 + $0x150] sm:$0xff]
    %v58 = vld [vmem:[%s0 + $0x158] sm:$0xff]
    %v59 = vld [vmem:[%s0 + $0x160] sm:$0xff]
    %v60 = vld [vmem:[%s0 + $0x168] sm:$0xff]
    %v61 = vld [vmem:[%s0 + $0x170] sm:$0xff]
    %v62 = vld [vmem:[%s0 + $0x178] sm:$0xff]
    %v63 = vld [vmem:[%s0 + $0x180] sm:$0xff]
    %v64 = vld [vmem:[%s0 + $0x188] sm:$0xff]
    %v65 = vld [vmem:[%s0 + $0x190] sm:$0xff]
    %v66 = vld [vmem:[%s0 + $0x198] sm:$0xff]
    %v67 = vld [vmem:[%s0 + $0x1a0] sm:$0xff]
    %v68 = vld [vmem:[%s0 + $0x1a8] sm:$0xff]
    %v69 = vld [vmem:[%s0 + $0x1b0] sm:$0xff]
    %v70 = vld [vmem:[%s0 + $0x1b8] sm:$0xff]
    %v71 = vld [vmem:[%s0 + $0x1c0] sm:$0xff]
    %v72 = vld [vmem:[%s0 + $0x1c8] sm:$0xff]
    %v73 = vld [vmem:[%s0 + $0x1d0] sm:$0xff]
    %v74 = vld [vmem:[%s0 + $0x1d8] sm:$0xff]
    %v75 = vld [vmem:[%s0 + $0x1e0] sm:$0xff]
    %v76 = vld [vmem:[%s0 + $0x1e8] sm:$0xff]
    %v77 = vld [vmem:[%s0 + $0x1f0] sm:$0xff]
    %v78 = vld [vmem:[%s0 + $0x1f8] sm:$0xff]
    %v79 = vld [vmem:[%s0 + $0x200] sm:$0xff]
    %v80 = vld [vmem:[%s0 + $0x208] sm:$0xff]
    %v81 = vld [vmem:[%s0 + $0x210] sm:$0xff]
    %v82 = vld [vmem:[%s0 + $0x218] sm:$0xff]
    %v83 = vld [vmem:[%s0 + $0x220] sm:$0xff]
    %v84 = vld [vmem:[%s0 + $0x228] sm:$0xff]
    %v85 = vld [vmem:[%s0 + $0x230] sm:$0xff]
    %v86 = vld [vmem:[%s0 + $0x238] sm:$0xff]
    %v87 = vld [vmem:[%s0 + $0x240] sm:$0xff]
    %v88 = vld [vmem:[%s0 + $0x248] sm:$0xff]
    %v89 = vld [vmem:[%s0 + $0x250] sm:$0xff]
    %v90 = vld [vmem:[%s0 + $0x258] sm:$0xff]
    %v91 = vld [vmem:[%s0 + $0x260] sm:$0xff]
    %v92 = vld [vmem:[%s0 + $0x268] sm:$0xff]
    %v93 = vld [vmem:[%s0 + $0x270] sm:$0xff]
    %v94 = vld [vmem:[%s0 + $0x278] sm:$0xff]
    %v95 = vld [vmem:[%s0 + $0x280] sm:$0xff]
    %v96 = vld [vmem:[%s0 + $0x288] sm:$0xff]
    %v97 = vld [vmem:[%s0 + $0x290] sm:$0xff]
    %v98 = vld [vmem:[%s0 + $0x298] sm:$0xff]
    %v99 = vld [vmem:[%s0 + $0x2a0] sm:$0xff]
    %v100 = vld [vmem:[%s0 + $0x2a8] sm:$0xff]
    %v101 = vld [vmem:[%s0 + $0x2b0] sm:$0xff]
    %v102 = vld [vmem:[%s0 + $0x2b8] sm:$0xff]
    %v103 = vld [vmem:[%s0 + $0x2c0] sm:$0xff]
    %v104 = vld [vmem:[%s0 + $0x2c8] sm:$0xff]
    %v105 = vld [vmem:[%s0 + $0x2d0] sm:$0xff]
    %v106 = vld [vmem:[%s0 + $0x2d8] sm:$0xff]
    %v107 = vld [vmem:[%s0 + $0x2e0] sm:$0xff]
    %v108 = vld [vmem:[%s0 + $0x2e8] sm:$0xff]
    %v109 = vld [vmem:[%s0 + $0x2f0] sm:$0xff]
    %v110 = vld [vmem:[%s0 + $0x2f8] sm:$0xff]
    %v111 = vld [vmem:[%s0 + $0x300] sm:$0xff]
    %v112 = vld [vmem:[%s0 + $0x308] sm:$0xff]
    %v113 = vld [vmem:[%s0 + $0x310] sm:$0xff]
    %v114 = vld [vmem:[%s0 + $0x318] sm:$0xff]
    %v115 = vld [vmem:[%s0 + $0x320] sm:$0xff]
    %v116 = vld [vmem:[%s0 + $0x328] sm:$0xff]
    %v117 = vld [vmem:[%s0 + $0x330] sm:$0xff]
    %v118 = vld [vmem:[%s0 + $0x338] sm:$0xff]
    %v119 = vld [vmem:[%s0 + $0x340] sm:$0xff]
    %v120 = vld [vmem:[%s0 + $0x348] sm:$0xff]
    %v121 = vld [vmem:[%s0 + $0x350] sm:$0xff]
    %v122 = vld [vmem:[%s0 + $0x358] sm:$0xff]
    %v123 = vld [vmem:[%s0 + $0x360] sm:$0xff]
    %v124 = vld [vmem:[%s0 + $0x368] sm:$0xff]
    %v125 = vld [vmem:[%s0 + $0x370] sm:$0xff]
    %v126 = vld [vmem:[%s0 + $0x378] sm:$0xff]
    %v127 = vld [vmem:[%s0 + $0x380] sm:$0xff]
    %v128 = vld [vmem:[%s0 + $0x388] sm:$0xff]
    %v129 = vld [vmem:[%s0 + $0x390] sm:$0xff]
    %v130 = vld [vmem:[%s0 + $0x398] sm:$0xff]
    %v131 = vld [vmem:[%s0 + $0x3a0] sm:$0xff]
    %v132 = vld [vmem:[%s0 + $0x3a8] sm:$0xff]
    %v133 = vld [vmem:[%s0 + $0x3b0] sm:$0xff]
    %v134 = vld [vmem:[%s0 + $0x3b8] sm:$0xff]
    %v135 = vld [vmem:[%s0 + $0x3c0] sm:$0xff]
    %v136 = vld [vmem:[%s0 + $0x3c8] sm:$0xff]
    %v137 = vld [vmem:[%s0 + $0x3d0] sm:$0xff]
    %v138 = vld [vmem:[%s0 + $0x3d8] sm:$0xff]
    %v139 = vld [vmem:[%s0 + $0x3e0] sm:$0xff]
    %v140 = vld [vmem:[%s0 + $0x3e8] sm:$0xff]
    %v141 = vld [vmem:[%s0 + $0x3f0] sm:$0xff]
    %v142 = vld [vmem:[%s0 + $0x3f8] sm:$0xff]
    %v143 = vld [vmem:[%s0 + $0x400] sm:$0xff]
    %v144 = vld [vmem:[%s0 + $0x408] sm:$0xff]
    %v145 = vld [vmem:[%s0 + $0x410] sm:$0xff]
    %v146 = vld [vmem:[%s0 + $0x418] sm:$0xff]
    %v147 = vld [vmem:[%s0 + $0x420] sm:$0xff]
    %v148 = vld [vmem:[%s0 + $0x428] sm:$0xff]
    %v149 = vld [vmem:[%s0 + $0x430] sm:$0xff]
    %v150 = vld [vmem:[%s0 + $0x438] sm:$0xff]
    %v151 = vld [vmem:[%s0 + $0x440] sm:$0xff]
    %v152 = vld [vmem:[%s0 + $0x448] sm:$0xff]
    %v153 = vld [vmem:[%s0 + $0x450] sm:$0xff]
    %v154 = vld [vmem:[%s0 + $0x458] sm:$0xff]
    %v155 = vld [vmem:[%s0 + $0x460] sm:$0xff]
    %v156 = vld [vmem:[%s0 + $0x468] sm:$0xff]
    %v157 = vld [vmem:[%s0 + $0x470] sm:$0xff]
    %v158 = vld [vmem:[%s0 + $0x478] sm:$0xff]
    %v159 = vld [vmem:[%s0 + $0x480] sm:$0xff]
    %v160 = vld [vmem:[%s0 + $0x488] sm:$0xff]
    %v161 = vld [vmem:[%s0 + $0x490] sm:$0xff]
    %v162 = vld [vmem:[%s0 + $0x498] sm:$0xff]
    %v163 = vld [vmem:[%s0 + $0x4a0] sm:$0xff]
    %v164 = vld [vmem:[%s0 + $0x4a8] sm:$0xff]
    %v165 = vld [vmem:[%s0 + $0x4b0] sm:$0xff]
    %v166 = vld [vmem:[%s0 + $0x4b8] sm:$0xff]
    %v167 = vld [vmem:[%s0 + $0x4c0] sm:$0xff]
    %v168 = vld [vmem:[%s0 + $0x4c8] sm:$0xff]
    %v169 = vld [vmem:[%s0 + $0x4d0] sm:$0xff]
    %v170 = vld [vmem:[%s0 + $0x4d8] sm:$0xff]
    %v171 = vld [vmem:[%s0 + $0x4e0] sm:$0xff]
    %v172 = vld [vmem:[%s0 + $0x4e8] sm:$0xff]
    %v173 = vld [vmem:[%s0 + $0x4f0] sm:$0xff]
    %v174 = vld [vmem:[%s0 + $0x4f8] sm:$0xff]
    %v175 = vld [vmem:[%s0 + $0x500] sm:$0xff]
    %v176 = vld [vmem:[%s0 + $0x508] sm:$0xff]
    %v177 = vld [vmem:[%s0 + $0x510] sm:$0xff]
    %v178 = vld [vmem:[%s0 + $0x518] sm:$0xff]
    %v179 = vld [vmem:[%s0 + $0x520] sm:$0xff]
    %v180 = vld [vmem:[%s0 + $0x528] sm:$0xff]
    %v181 = vld [vmem:[%s0 + $0x530] sm:$0xff]
    %v182 = vld [vmem:[%s0 + $0x538] sm:$0xff]
    %v183 = vld [vmem:[%s0 + $0x540] sm:$0xff]
    %v184 = vld [vmem:[%s0 + $0x548] sm:$0xff]
    %v185 = vld [vmem:[%s0 + $0x550] sm:$0xff]
    %v186 = vld [vmem:[%s0 + $0x558] sm:$0xff]
    %v187 = vld [vmem:[%s0 + $0x560] sm:$0xff]
    %v188 = vld [vmem:[%s0 + $0x568] sm:$0xff]
    %v189 = vld [vmem:[%s0 + $0x570] sm:$0xff]
    %v190 = vld [vmem:[%s0 + $0x578] sm:$0xff]
    %v191 = vld [vmem:[%s0 + $0x580] sm:$0xff]
    %v192 = vld [vmem:[%s0 + $0x588] sm:$0xff]
    %v193 = vld [vmem:[%s0 + $0x590] sm:$0xff]
    %v194 = vld [vmem:[%s0 + $0x598] sm:$0xff]
    %v195 = vld [vmem:[%s0 + $0x5a0] sm:$0xff]
    %v196 = vld [vmem:[%s0 + $0x5a8] sm:$0xff]
    %v197 = vld [vmem:[%s0 + $0x5b0] sm:$0xff]
    %v198 = vld [vmem:[%s0 + $0x5b8] sm:$0xff]
    %v199 = vld [vmem:[%s0 + $0x5c0] sm:$0xff]
    %v200 = vld [vmem:[%s0 + $0x5c8] sm:$0xff]
    %v201 = vld [vmem:[%s0 + $0x5d0] sm:$0xff]
    %v202 = vld [vmem:[%s0 + $0x5d8] sm:$0xff]
    %v203 = vld [vmem:[%s0 + $0x5e0] sm:$0xff]
    %v204 = vld [vmem:[%s0 + $0x5e8] sm:$0xff]
    %v205 = vld [vmem:[%s0 + $0x5f0] sm:$0xff]
    %v206 = vld [vmem:[%s0 + $0x5f8] sm:$0xff]
    %v207 = vld [vmem:[%s0 + $0x600] sm:$0xff]
    %v208 = vld [vmem:[%s0 + $0x608] sm:$0xff]
    %v209 = vld [vmem:[%s0 + $0x610] sm:$0xff]
    %v210 = vld [vmem:[%s0 + $0x618] sm:$0xff]
    %v211 = vld [vmem:[%s0 + $0x620] sm:$0xff]
    %v212 = vld [vmem:[%s0 + $0x628] sm:$0xff]
    %v213 = vld [vmem:[%s0 + $0x630] sm:$0xff]
    %v214 = vld [vmem:[%s0 + $0x638] sm:$0xff]
    %v215 = vld [vmem:[%s0 + $0x640] sm:$0xff]
    %v216 = vld [vmem:[%s0 + $0x648] sm:$0xff]
    %v217 = vld [vmem:[%s0 + $0x650] sm:$0xff]
    %v218 = vld [vmem:[%s0 + $0x658] sm:$0xff]
    %v219 = vld [vmem:[%s0 + $0x660] sm:$0xff]
    %v220 = vld [vmem:[%s0 + $0x668] sm:$0xff]
    %v221 = vld [vmem:[%s0 + $0x670] sm:$0xff]
    %v222 = vld [vmem:[%s0 + $0x678] sm:$0xff]
    %v223 = vld [vmem:[%s0 + $0x680] sm:$0xff]
    %v224 = vld [vmem:[%s0 + $0x688] sm:$0xff]
    %v225 = vld [vmem:[%s0 + $0x690] sm:$0xff]
    %v226 = vld [vmem:[%s0 + $0x698] sm:$0xff]
    %v227 = vld [vmem:[%s0 + $0x6a0] sm:$0xff]
    %v228 = vld [vmem:[%s0 + $0x6a8] sm:$0xff]
    %v229 = vld [vmem:[%s0 + $0x6b0] sm:$0xff]
    %v230 = vld [vmem:[%s0 + $0x6b8] sm:$0xff]
    %v231 = vld [vmem:[%s0 + $0x6c0] sm:$0xff]
    %v232 = vld [vmem:[%s0 + $0x6c8] sm:$0xff]
    %v233 = vld [vmem:[%s0 + $0x6d0] sm:$0xff]
    %v234 = vld [vmem:[%s0 + $0x6d8] sm:$0xff]
    %v235 = vld [vmem:[%s0 + $0x6e0] sm:$0xff]
    %v236 = vld [vmem:[%s0 + $0x6e8] sm:$0xff]
    %v237 = vld [vmem:[%s0 + $0x6f0] sm:$0xff]
    %v238 = vld [vmem:[%s0 + $0x6f8] sm:$0xff]
    %v239 = vld [vmem:[%s0 + $0x700] sm:$0xff]
    %v240 = vld [vmem:[%s0 + $0x708] sm:$0xff]
    %v241 = vld [vmem:[%s0 + $0x710] sm:$0xff]
    %v242 = vld [vmem:[%s0 + $0x718] sm:$0xff]
    %v243 = vld [vmem:[%s0 + $0x720] sm:$0xff]
    %v244 = vld [vmem:[%s0 + $0x728] sm:$0xff]
    %v245 = vld [vmem:[%s0 + $0x730] sm:$0xff]
    %v246 = vld [vmem:[%s0 + $0x738] sm:$0xff]
    %v247 = vld [vmem:[%s0 + $0x740] sm:$0xff]
    %v248 = vld [vmem:[%s0 + $0x748] sm:$0xff]
    %v249 = vld [vmem:[%s0 + $0x750] sm:$0xff]
    %v250 = vld [vmem:[%s0 + $0x758] sm:$0xff]
    %v251 = vld [vmem:[%s0 + $0x760] sm:$0xff]
    %v252 = vld [vmem:[%s0 + $0x768] sm:$0xff]
    %v253 = vld [vmem:[%s0 + $0x770] sm:$0xff]
    %v254 = vld [vmem:[%s0 + $0x778] sm:$0xff]
    %v255 = vld [vmem:[%s0 + $0x780] sm:$0xff]
    %v256 = vld [vmem:[%s0 + $0x788] sm:$0xff]
    %v257 = vld [vmem:[%s0 + $0x790] sm:$0xff]
    %v258 = vld [vmem:[%s0 + $0x798] sm:$0xff]
    %v259 = vld [vmem:[%s0 + $0x7a0] sm:$0xff]
    %v260 = vld [vmem:[%s0 + $0x7a8] sm:$0xff]
    %v261 = vld [vmem:[%s0 + $0x7b0] sm:$0xff]
    %v262 = vld [vmem:[%s0 + $0x7b8] sm:$0xff]
    %v263 = vld [vmem:[%s0 + $0x7c0] sm:$0xff]
    %v264 = vld [vmem:[%s0 + $0x7c8] sm:$0xff]
    %v265 = vld [vmem:[%s0 + $0x7d0] sm:$0xff]
    %v266 = vld [vmem:[%s0 + $0x7d8] sm:$0xff]
    %v267 = vld [vmem:[%s0 + $0x7e0] sm:$0xff]
    %v268 = vld [vmem:[%s0 + $0x7e8] sm:$0xff]
    %v269 = vld [vmem:[%s0 + $0x7f0] sm:$0xff]
    %v270 = vld [vmem:[%s0 + $0x7f8] sm:$0xff]
    %v271 = vld [vmem:[%s0 + $0x800] sm:$0xff]
    %v272 = vld [vmem:[%s0 + $0x808] sm:$0xff]
    %v273 = vld [vmem:[%s0 + $0x810] sm:$0xff]
    %v274 = vld [vmem:[%s0 + $0x818] sm:$0xff]
    %v275 = vld [vmem:[%s0 + $0x820] sm:$0xff]
    %v276 = vld [vmem:[%s0 + $0x828] sm:$0xff]
    %v277 = vld [vmem:[%s0 + $0x830] sm:$0xff]
    %v278 = vld [vmem:[%s0 + $0x838] sm:$0xff]
    %v279 = vld [vmem:[%s0 + $0x840] sm:$0xff]
    %v280 = vld [vmem:[%s0 + $0x848] sm:$0xff]
    %v281 = vld [vmem:[%s0 + $0x850] sm:$0xff]
    %v282 = vld [vmem:[%s0 + $0x858] sm:$0xff]
    %v283 = vld [vmem:[%s0 + $0x860] sm:$0xff]
    %v284 = vld [vmem:[%s0 + $0x868] sm:$0xff]
    %v285 = vld [vmem:[%s0 + $0x870] sm:$0xff]
    %v286 = vld [vmem:[%s0 + $0x878] sm:$0xff]
    %v287 = vld [vmem:[%s0 + $0x880] sm:$0xff]
    %v288 = vld [vmem:[%s0 + $0x888] sm:$0xff]
    %v289 = vld [vmem:[%s0 + $0x890] sm:$0xff]
    %v290 = vld [vmem:[%s0 + $0x898] sm:$0xff]
    %v291 = vld [vmem:[%s0 + $0x8a0] sm:$0xff]
    %v292 = vld [vmem:[%s0 + $0x8a8] sm:$0xff]
    %v293 = vld [vmem:[%s0 + $0x8b0] sm:$0xff]
    %v294 = vld [vmem:[%s0 + $0x8b8] sm:$0xff]
    %v295 = vld [vmem:[%s0 + $0x8c0] sm:$0xff]
    %v296 = vld [vmem:[%s0 + $0x8c8] sm:$0xff]
    %v297 = vld [vmem:[%s0 + $0x8d0] sm:$0xff]
    %v298 = vld [vmem:[%s0 + $0x8d8] sm:$0xff]
    %v299 = vld [vmem:[%s0 + $0x8e0] sm:$0xff]
    %v300 = vld [vmem:[%s0 + $0x8e8] sm:$0xff]
    %v301 = vld [vmem:[%s0 + $0x8f0] sm:$0xff]
    %v302 = vld [vmem:[%s0 + $0x8f8] sm:$0xff]
    %v303 = vld [vmem:[%s0 + $0x900] sm:$0xff]
    %v304 = vld [vmem:[%s0 + $0x908] sm:$0xff]
    %v305 = vld [vmem:[%s0 + $0x910] sm:$0xff]
    %v306 = vld [vmem:[%s0 + $0x918] sm:$0xff]
    %v307 = vld [vmem:[%s0 + $0x920] sm:$0xff]
    %v308 = vld [vmem:[%s0 + $0x928] sm:$0xff]
    %v309 = vld [vmem:[%s0 + $0x930] sm:$0xff]
    %v310 = vld [vmem:[%s0 + $0x938] sm:$0xff]
    %v311 = vld [vmem:[%s0 + $0x940] sm:$0xff]
    %v312 = vld [vmem:[%s0 + $0x948] sm:$0xff]
    %v313 = vld [vmem:[%s0 + $0x950] sm:$0xff]
    %v314 = vld [vmem:[%s0 + $0x958] sm:$0xff]
    %v315 = vld [vmem:[%s0 + $0x960] sm:$0xff]
    %v316 = vld [vmem:[%s0 + $0x968] sm:$0xff]
    %v317 = vld [vmem:[%s0 + $0x970] sm:$0xff]
    %v318 = vld [vmem:[%s0 + $0x978] sm:$0xff]
    %v319 = vld [vmem:[%s0 + $0x980] sm:$0xff]
    %v320 = vld [vmem:[%s0 + $0x988] sm:$0xff]
    %v321 = vld [vmem:[%s0 + $0x990] sm:$0xff]
    %v322 = vld [vmem:[%s0 + $0x998] sm:$0xff]
    %v323 = vld [vmem:[%s0 + $0x9a0] sm:$0xff]
    %v324 = vld [vmem:[%s0 + $0x9a8] sm:$0xff]
    %v325 = vld [vmem:[%s0 + $0x9b0] sm:$0xff]
    %v326 = vld [vmem:[%s0 + $0x9b8] sm:$0xff]
    %v327 = vld [vmem:[%s0 + $0x9c0] sm:$0xff]
    %v328 = vld [vmem:[%s0 + $0x9c8] sm:$0xff]
    %v329 = vld [vmem:[%s0 + $0x9d0] sm:$0xff]
    %v330 = vld [vmem:[%s0 + $0x9d8] sm:$0xff]
    %v331 = vld [vmem:[%s0 + $0x9e0] sm:$0xff]
    %v332 = vld [vmem:[%s0 + $0x9e8] sm:$0xff]
    %v333 = vld [vmem:[%s0 + $0x9f0] sm:$0xff]
    %v334 = vld [vmem:[%s0 + $0x9f8] sm:$0xff]
    %v335 = vld [vmem:[%s0 + $0xa00] sm:$0xff]
    %v336 = vld [vmem:[%s0 + $0xa08] sm:$0xff]
    %v337 = vld [vmem:[%s0 + $0xa10] sm:$0xff]
    %v338 = vld [vmem:[%s0 + $0xa18] sm:$0xff]
    %v339 = vld [vmem:[%s0 + $0xa20] sm:$0xff]
    %v340 = vld [vmem:[%s0 + $0xa28] sm:$0xff]
    %v341 = vld [vmem:[%s0 + $0xa30] sm:$0xff]
    %v342 = vld [vmem:[%s0 + $0xa38] sm:$0xff]
    %v343 = vld [vmem:[%s0 + $0xa40] sm:$0xff]
    %v344 = vld [vmem:[%s0 + $0xa48] sm:$0xff]
    %v345 = vld [vmem:[%s0 + $0xa50] sm:$0xff]
    %v346 = vld [vmem:[%s0 + $0xa58] sm:$0xff]
    %v347 = vld [vmem:[%s0 + $0xa60] sm:$0xff]
    %v348 = vld [vmem:[%s0 + $0xa68] sm:$0xff]
    %v349 = vld [vmem:[%s0 + $0xa70] sm:$0xff]
    %v350 = vld [vmem:[%s0 + $0xa78] sm:$0xff]
    %v351 = vld [vmem:[%s0 + $0xa80] sm:$0xff]
    %v352 = vld [vmem:[%s0 + $0xa88] sm:$0xff]
    %v353 = vld [vmem:[%s0 + $0xa90] sm:$0xff]
    %v354 = vld [vmem:[%s0 + $0xa98] sm:$0xff]
    %v355 = vld [vmem:[%s0 + $0xaa0] sm:$0xff]
    %v356 = vld [vmem:[%s0 + $0xaa8] sm:$0xff]
    %v357 = vld [vmem:[%s0 + $0xab0] sm:$0xff]
    %v358 = vld [vmem:[%s0 + $0xab8] sm:$0xff]
    %v359 = vld [vmem:[%s0 + $0xac0] sm:$0xff]
    %v360 = vld [vmem:[%s0 + $0xac8] sm:$0xff]
    %v361 = vld [vmem:[%s0 + $0xad0] sm:$0xff]
    %v362 = vld [vmem:[%s0 + $0xad8] sm:$0xff]
    %v363 = vld [vmem:[%s0 + $0xae0] sm:$0xff]
    %v364 = vld [vmem:[%s0 + $0xae8] sm:$0xff]
    %v365 = vld [vmem:[%s0 + $0xaf0] sm:$0xff]
    %v366 = vld [vmem:[%s0 + $0xaf8] sm:$0xff]
    %v367 = vld [vmem:[%s0 + $0xb00] sm:$0xff]
    %v368 = vld [vmem:[%s0 + $0xb08] sm:$0xff]
    %v369 = vld [vmem:[%s0 + $0xb10] sm:$0xff]
    %v370 = vld [vmem:[%s0 + $0xb18] sm:$0xff]
    %v371 = vld [vmem:[%s0 + $0xb20] sm:$0xff]
    %v372 = vld [vmem:[%s0 + $0xb28] sm:$0xff]
    %v373 = vld [vmem:[%s0 + $0xb30] sm:$0xff]
    %v374 = vld [vmem:[%s0 + $0xb38] sm:$0xff]
    %v375 = vld [vmem:[%s0 + $0xb40] sm:$0xff]
    %v376 = vld [vmem:[%s0 + $0xb48] sm:$0xff]
    %v377 = vld [vmem:[%s0 + $0xb50] sm:$0xff]
    %v378 = vld [vmem:[%s0 + $0xb58] sm:$0xff]
    %v379 = vld [vmem:[%s0 + $0xb60] sm:$0xff]
    %v380 = vld [vmem:[%s0 + $0xb68] sm:$0xff]
    %v381 = vld [vmem:[%s0 + $0xb70] sm:$0xff]
    %v382 = vld [vmem:[%s0 + $0xb78] sm:$0xff]
    %v383 = vld [vmem:[%s0 + $0xb80] sm:$0xff]
    %v384 = vld [vmem:[%s0 + $0xb88] sm:$0xff]
    %v385 = vld [vmem:[%s0 + $0xb90] sm:$0xff]
    %v386 = vld [vmem:[%s0 + $0xb98] sm:$0xff]
    %v387 = vld [vmem:[%s0 + $0xba0] sm:$0xff]
    %v388 = vld [vmem:[%s0 + $0xba8] sm:$0xff]
    %v389 = vld [vmem:[%s0 + $0xbb0] sm:$0xff]
    %v390 = vld [vmem:[%s0 + $0xbb8] sm:$0xff]
    %v391 = vld [vmem:[%s0 + $0xbc0] sm:$0xff]
    %v392 = vld [vmem:[%s0 + $0xbc8] sm:$0xff]
    %v393 = vld [vmem:[%s0 + $0xbd0] sm:$0xff]
    %v394 = vld [vmem:[%s0 + $0xbd8] sm:$0xff]
    %v395 = vld [vmem:[%s0 + $0xbe0] sm:$0xff]
    %v396 = vld [vmem:[%s0 + $0xbe8] sm:$0xff]
    %v397 = vld [vmem:[%s0 + $0xbf0] sm:$0xff]
    %v398 = vld [vmem:[%s0 + $0xbf8] sm:$0xff]
    %v399 = vld [vmem:[%s0 + $0xc00] sm:$0xff]
    %v400 = vld [vmem:[%s0 + $0xc08] sm:$0xff]
    %v401 = vld [vmem:[%s0 + $0xc10] sm:$0xff]
    %v402 = vld [vmem:[%s0 + $0xc18] sm:$0xff]
    %v403 = vld [vmem:[%s0 + $0xc20] sm:$0xff]
    %v404 = vld [vmem:[%s0 + $0xc28] sm:$0xff]
    %v405 = vld [vmem:[%s0 + $0xc30] sm:$0xff]
    %v406 = vld [vmem:[%s0 + $0xc38] sm:$0xff]
    %v407 = vld [vmem:[%s0 + $0xc40] sm:$0xff]
    %v408 = vld [vmem:[%s0 + $0xc48] sm:$0xff]
    %v409 = vld [vmem:[%s0 + $0xc50] sm:$0xff]
    %v410 = vld [vmem:[%s0 + $0xc58] sm:$0xff]
    %v411 = vld [vmem:[%s0 + $0xc60] sm:$0xff]
    %v412 = vld [vmem:[%s0 + $0xc68] sm:$0xff]
    %v413 = vld [vmem:[%s0 + $0xc70] sm:$0xff]
    %v414 = vld [vmem:[%s0 + $0xc78] sm:$0xff]
    %v415 = vld [vmem:[%s0 + $0xc80] sm:$0xff]
    %v416 = vld [vmem:[%s0 + $0xc88] sm:$0xff]
    %v417 = vld [vmem:[%s0 + $0xc90] sm:$0xff]
    %v418 = vld [vmem:[%s0 + $0xc98] sm:$0xff]
    %v419 = vld [vmem:[%s0 + $0xca0] sm:$0xff]
    %v420 = vld [vmem:[%s0 + $0xca8] sm:$0xff]
    %v421 = vld [vmem:[%s0 + $0xcb0] sm:$0xff]
    %v422 = vld [vmem:[%s0 + $0xcb8] sm:$0xff]
    %v423 = vld [vmem:[%s0 + $0xcc0] sm:$0xff]
    %v424 = vld [vmem:[%s0 + $0xcc8] sm:$0xff]
    %v425 = vld [vmem:[%s0 + $0xcd0] sm:$0xff]
    %v426 = vld [vmem:[%s0 + $0xcd8] sm:$0xff]
    %v427 = vld [vmem:[%s0 + $0xce0] sm:$0xff]
    %v428 = vld [vmem:[%s0 + $0xce8] sm:$0xff]
    %v429 = vld [vmem:[%s0 + $0xcf0] sm:$0xff]
    %v430 = vld [vmem:[%s0 + $0xcf8] sm:$0xff]
    %v431 = vld [vmem:[%s0 + $0xd00] sm:$0xff]
    %v432 = vld [vmem:[%s0 + $0xd08] sm:$0xff]
    %v433 = vld [vmem:[%s0 + $0xd10] sm:$0xff]
    %v434 = vld [vmem:[%s0 + $0xd18] sm:$0xff]
    %v435 = vld [vmem:[%s0 + $0xd20] sm:$0xff]
    %v436 = vld [vmem:[%s0 + $0xd28] sm:$0xff]
    %v437 = vld [vmem:[%s0 + $0xd30] sm:$0xff]
    %v438 = vld [vmem:[%s0 + $0xd38] sm:$0xff]
    %v439 = vld [vmem:[%s0 + $0xd40] sm:$0xff]
    %v440 = vld [vmem:[%s0 + $0xd48] sm:$0xff]
    %v441 = vld [vmem:[%s0 + $0xd50] sm:$0xff]
    %v442 = vld [vmem:[%s0 + $0xd58] sm:$0xff]
    %v443 = vld [vmem:[%s0 + $0xd60] sm:$0xff]
    %v444 = vld [vmem:[%s0 + $0xd68] sm:$0xff]
    %v445 = vld [vmem:[%s0 + $0xd70] sm:$0xff]
    %v446 = vld [vmem:[%s0 + $0xd78] sm:$0xff]
    %v447 = vld [vmem:[%s0 + $0xd80] sm:$0xff]
    %v448 = vld [vmem:[%s0 + $0xd88] sm:$0xff]
    %v449 = vld [vmem:[%s0 + $0xd90] sm:$0xff]
    %v450 = vld [vmem:[%s0 + $0xd98] sm:$0xff]
    %v451 = vld [vmem:[%s0 + $0xda0] sm:$0xff]
    %v452 = vld [vmem:[%s0 + $0xda8] sm:$0xff]
    %v453 = vld [vmem:[%s0 + $0xdb0] sm:$0xff]
    %v454 = vld [vmem:[%s0 + $0xdb8] sm:$0xff]
    %v455 = vld [vmem:[%s0 + $0xdc0] sm:$0xff]
    %v456 = vld [vmem:[%s0 + $0xdc8] sm:$0xff]
    %v457 = vld [vmem:[%s0 + $0xdd0] sm:$0xff]
    %v458 = vld [vmem:[%s0 + $0xdd8] sm:$0xff]
    %v459 = vld [vmem:[%s0 + $0xde0] sm:$0xff]
    %v460 = vld [vmem:[%s0 + $0xde8] sm:$0xff]
    %v461 = vld [vmem:[%s0 + $0xdf0] sm:$0xff]
    %v462 = vld [vmem:[%s0 + $0xdf8] sm:$0xff]
    %v463 = vld [vmem:[%s0 + $0xe00] sm:$0xff]
    %v464 = vld [vmem:[%s0 + $0xe08] sm:$0xff]
    %v465 = vld [vmem:[%s0 + $0xe10] sm:$0xff]
    %v466 = vld [vmem:[%s0 + $0xe18] sm:$0xff]
    %v467 = vld [vmem:[%s0 + $0xe20] sm:$0xff]
    %v468 = vld [vmem:[%s0 + $0xe28] sm:$0xff]
    %v469 = vld [vmem:[%s0 + $0xe30] sm:$0xff]
    %v470 = vld [vmem:[%s0 + $0xe38] sm:$0xff]
    %v471 = vld [vmem:[%s0 + $0xe40] sm:$0xff]
    %v472 = vld [vmem:[%s0 + $0xe48] sm:$0xff]
    %v473 = vld [vmem:[%s0 + $0xe50] sm:$0xff]
    %v474 = vld [vmem:[%s0 + $0xe58] sm:$0xff]
    %v475 = vld [vmem:[%s0 + $0xe60] sm:$0xff]
    %v476 = vld [vmem:[%s0 + $0xe68] sm:$0xff]
    %v477 = vld [vmem:[%s0 + $0xe70] sm:$0xff]
    %v478 = vld [vmem:[%s0 + $0xe78] sm:$0xff]
    %v479 = vld [vmem:[%s0 + $0xe80] sm:$0xff]
    %v480 = vld [vmem:[%s0 + $0xe88] sm:$0xff]
    %v481 = vld [vmem:[%s0 + $0xe90] sm:$0xff]
    %v482 = vld [vmem:[%s0 + $0xe98] sm:$0xff]
    %v483 = vld [vmem:[%s0 + $0xea0] sm:$0xff]
    %v484 = vld [vmem:[%s0 + $0xea8] sm:$0xff]
    %v485 = vld [vmem:[%s0 + $0xeb0] sm:$0xff]
    %v486 = vld [vmem:[%s0 + $0xeb8] sm:$0xff]
    %v487 = vld [vmem:[%s0 + $0xec0] sm:$0xff]
    %v488 = vld [vmem:[%s0 + $0xec8] sm:$0xff]
    %v489 = vld [vmem:[%s0 + $0xed0] sm:$0xff]
    %v490 = vld [vmem:[%s0 + $0xed8] sm:$0xff]
    %v491 = vld [vmem:[%s0 + $0xee0] sm:$0xff]
    %v492 = vld [vmem:[%s0 + $0xee8] sm:$0xff]
    %v493 = vld [vmem:[%s0 + $0xef0] sm:$0xff]
    %v494 = vld [vmem:[%s0 + $0xef8] sm:$0xff]
    %v495 = vld [vmem:[%s0 + $0xf00] sm:$0xff]
    %v496 = vld [vmem:[%s0 + $0xf08] sm:$0xff]
    %v497 = vld [vmem:[%s0 + $0xf10] sm:$0xff]
    %v498 = vld [vmem:[%s0 + $0xf18] sm:$0xff]
    %v499 = vld [vmem:[%s0 + $0xf20] sm:$0xff]
    %v500 = vld [vmem:[%s0 + $0xf28] sm:$0xff]
    %v501 = vld [vmem:[%s0 + $0xf30] sm:$0xff]
    %v502 = vld [vmem:[%s0 + $0xf38] sm:$0xff]
    %v503 = vld [vmem:[%s0 + $0xf40] sm:$0xff]
    %v504 = vld [vmem:[%s0 + $0xf48] sm:$0xff]
    %v505 = vld [vmem:[%s0 + $0xf50] sm:$0xff]
    %v506 = vld [vmem:[%s0 + $0xf58] sm:$0xff]
    %v507 = vld [vmem:[%s0 + $0xf60] sm:$0xff]
    %v508 = vld [vmem:[%s0 + $0xf68] sm:$0xff]
    %v509 = vld [vmem:[%s0 + $0xf70] sm:$0xff]
    %v510 = vld [vmem:[%s0 + $0xf78] sm:$0xff]
    %v511 = vld [vmem:[%s0 + $0xf80] sm:$0xff]
    %v512 = vld [vmem:[%s0 + $0xf88] sm:$0xff]
    %v513 = vld [vmem:[%s0 + $0xf90] sm:$0xff]
    %v514 = vld [vmem:[%s0 + $0xf98] sm:$0xff]
    %v515 = vld [vmem:[%s0 + $0xfa0] sm:$0xff]
    %v516 = vld [vmem:[%s0 + $0xfa8] sm:$0xff]
    %v517 = vld [vmem:[%s0 + $0xfb0] sm:$0xff]
    %v518 = vld [vmem:[%s0 + $0xfb8] sm:$0xff]
    %v519 = vld [vmem:[%s0 + $0xfc0] sm:$0xff]
    %v520 = vld [vmem:[%s0 + $0xfc8] sm:$0xff]
    %v521 = vld [vmem:[%s0 + $0xfd0] sm:$0xff]
    %v522 = vld [vmem:[%s0 + $0xfd8] sm:$0xff]
    %v523 = vld [vmem:[%s0 + $0xfe0] sm:$0xff]
    %v524 = vld [vmem:[%s0 + $0xfe8] sm:$0xff]
    %v525 = vld [vmem:[%s0 + $0xff0] sm:$0xff]
    %v526 = vld [vmem:[%s0 + $0xff8] sm:$0xff]
    %vm527 = vcmask 130048
    %v528 = vsel %vm527, %v15, 0.0
    %529 = vadd.xlane.f32.xlu0 %v528
    %v530 = vpop.xlane.xlu0 %529
    %v531 = vsel %vm527, %v16, 0.0
    %532 = vadd.xlane.f32.xlu0 %v531
    %v533 = vpop.xlane.xlu0 %532
    %v534 = vsel %vm527, %v17, 0.0
    %535 = vadd.xlane.f32.xlu0 %v534
    %v536 = vpop.xlane.xlu0 %535
    %v537 = vsel %vm527, %v18, 0.0
    %538 = vadd.xlane.f32.xlu0 %v537
    %v539 = vpop.xlane.xlu0 %538
    %v540 = vsel %vm527, %v19, 0.0
    %541 = vadd.xlane.f32.xlu0 %v540
    %v542 = vpop.xlane.xlu0 %541
    %v543 = vsel %vm527, %v20, 0.0
    %544 = vadd.xlane.f32.xlu0 %v543
    %v545 = vpop.xlane.xlu0 %544
    %v546 = vsel %vm527, %v21, 0.0
    %547 = vadd.xlane.f32.xlu0 %v546
    %v548 = vpop.xlane.xlu0 %547
    %v549 = vsel %vm527, %v22, 0.0
    %550 = vadd.xlane.f32.xlu0 %v549
    %v551 = vpop.xlane.xlu0 %550
    %v552 = vsel %vm527, %v23, 0.0
    %553 = vadd.xlane.f32.xlu0 %v552
    %v554 = vpop.xlane.xlu0 %553
    %v555 = vsel %vm527, %v24, 0.0
    %556 = vadd.xlane.f32.xlu0 %v555
    %v557 = vpop.xlane.xlu0 %556
    %v558 = vsel %vm527, %v25, 0.0
    %559 = vadd.xlane.f32.xlu0 %v558
    %v560 = vpop.xlane.xlu0 %559
    %v561 = vsel %vm527, %v26, 0.0
    %562 = vadd.xlane.f32.xlu0 %v561
    %v563 = vpop.xlane.xlu0 %562
    %v564 = vsel %vm527, %v27, 0.0
    %565 = vadd.xlane.f32.xlu0 %v564
    %v566 = vpop.xlane.xlu0 %565
    %v567 = vsel %vm527, %v28, 0.0
    %568 = vadd.xlane.f32.xlu0 %v567
    %v569 = vpop.xlane.xlu0 %568
    %v570 = vsel %vm527, %v29, 0.0
    %571 = vadd.xlane.f32.xlu0 %v570
    %v572 = vpop.xlane.xlu0 %571
    %v573 = vsel %vm527, %v30, 0.0
    %574 = vadd.xlane.f32.xlu0 %v573
    %v575 = vpop.xlane.xlu0 %574
    %v576 = vsel %vm527, %v31, 0.0
    %577 = vadd.xlane.f32.xlu0 %v576
    %v578 = vpop.xlane.xlu0 %577
    %v579 = vsel %vm527, %v32, 0.0
    %580 = vadd.xlane.f32.xlu0 %v579
    %v581 = vpop.xlane.xlu0 %580
    %v582 = vsel %vm527, %v33, 0.0
    %583 = vadd.xlane.f32.xlu0 %v582
    %v584 = vpop.xlane.xlu0 %583
    %v585 = vsel %vm527, %v34, 0.0
    %586 = vadd.xlane.f32.xlu0 %v585
    %v587 = vpop.xlane.xlu0 %586
    %v588 = vsel %vm527, %v35, 0.0
    %589 = vadd.xlane.f32.xlu0 %v588
    %v590 = vpop.xlane.xlu0 %589
    %v591 = vsel %vm527, %v36, 0.0
    %592 = vadd.xlane.f32.xlu0 %v591
    %v593 = vpop.xlane.xlu0 %592
    %v594 = vsel %vm527, %v37, 0.0
    %595 = vadd.xlane.f32.xlu0 %v594
    %v596 = vpop.xlane.xlu0 %595
    %v597 = vsel %vm527, %v38, 0.0
    %598 = vadd.xlane.f32.xlu0 %v597
    %v599 = vpop.xlane.xlu0 %598
    %v600 = vsel %vm527, %v39, 0.0
    %601 = vadd.xlane.f32.xlu0 %v600
    %v602 = vpop.xlane.xlu0 %601
    %v603 = vsel %vm527, %v40, 0.0
    %604 = vadd.xlane.f32.xlu0 %v603
    %v605 = vpop.xlane.xlu0 %604
    %v606 = vsel %vm527, %v41, 0.0
    %607 = vadd.xlane.f32.xlu0 %v606
    %v608 = vpop.xlane.xlu0 %607
    %v609 = vsel %vm527, %v42, 0.0
    %610 = vadd.xlane.f32.xlu0 %v609
    %v611 = vpop.xlane.xlu0 %610
    %v612 = vsel %vm527, %v43, 0.0
    %613 = vadd.xlane.f32.xlu0 %v612
    %v614 = vpop.xlane.xlu0 %613
    %v615 = vsel %vm527, %v44, 0.0
    %616 = vadd.xlane.f32.xlu0 %v615
    %v617 = vpop.xlane.xlu0 %616
    %v618 = vsel %vm527, %v45, 0.0
    %619 = vadd.xlane.f32.xlu0 %v618
    %v620 = vpop.xlane.xlu0 %619
    %v621 = vsel %vm527, %v46, 0.0
    %622 = vadd.xlane.f32.xlu0 %v621
    %v623 = vpop.xlane.xlu0 %622
    %v624 = vsel %vm527, %v47, 0.0
    %625 = vadd.xlane.f32.xlu0 %v624
    %v626 = vpop.xlane.xlu0 %625
    %v627 = vsel %vm527, %v48, 0.0
    %628 = vadd.xlane.f32.xlu0 %v627
    %v629 = vpop.xlane.xlu0 %628
    %v630 = vsel %vm527, %v49, 0.0
    %631 = vadd.xlane.f32.xlu0 %v630
    %v632 = vpop.xlane.xlu0 %631
    %v633 = vsel %vm527, %v50, 0.0
    %634 = vadd.xlane.f32.xlu0 %v633
    %v635 = vpop.xlane.xlu0 %634
    %v636 = vsel %vm527, %v51, 0.0
    %637 = vadd.xlane.f32.xlu0 %v636
    %v638 = vpop.xlane.xlu0 %637
    %v639 = vsel %vm527, %v52, 0.0
    %640 = vadd.xlane.f32.xlu0 %v639
    %v641 = vpop.xlane.xlu0 %640
    %v642 = vsel %vm527, %v53, 0.0
    %643 = vadd.xlane.f32.xlu0 %v642
    %v644 = vpop.xlane.xlu0 %643
    %v645 = vsel %vm527, %v54, 0.0
    %646 = vadd.xlane.f32.xlu0 %v645
    %v647 = vpop.xlane.xlu0 %646
    %v648 = vsel %vm527, %v55, 0.0
    %649 = vadd.xlane.f32.xlu0 %v648
    %v650 = vpop.xlane.xlu0 %649
    %v651 = vsel %vm527, %v56, 0.0
    %652 = vadd.xlane.f32.xlu0 %v651
    %v653 = vpop.xlane.xlu0 %652
    %v654 = vsel %vm527, %v57, 0.0
    %655 = vadd.xlane.f32.xlu0 %v654
    %v656 = vpop.xlane.xlu0 %655
    %v657 = vsel %vm527, %v58, 0.0
    %658 = vadd.xlane.f32.xlu0 %v657
    %v659 = vpop.xlane.xlu0 %658
    %v660 = vsel %vm527, %v59, 0.0
    %661 = vadd.xlane.f32.xlu0 %v660
    %v662 = vpop.xlane.xlu0 %661
    %v663 = vsel %vm527, %v60, 0.0
    %664 = vadd.xlane.f32.xlu0 %v663
    %v665 = vpop.xlane.xlu0 %664
    %v666 = vsel %vm527, %v61, 0.0
    %667 = vadd.xlane.f32.xlu0 %v666
    %v668 = vpop.xlane.xlu0 %667
    %v669 = vsel %vm527, %v62, 0.0
    %670 = vadd.xlane.f32.xlu0 %v669
    %v671 = vpop.xlane.xlu0 %670
    %v672 = vsel %vm527, %v63, 0.0
    %673 = vadd.xlane.f32.xlu0 %v672
    %v674 = vpop.xlane.xlu0 %673
    %v675 = vsel %vm527, %v64, 0.0
    %676 = vadd.xlane.f32.xlu0 %v675
    %v677 = vpop.xlane.xlu0 %676
    %v678 = vsel %vm527, %v65, 0.0
    %679 = vadd.xlane.f32.xlu0 %v678
    %v680 = vpop.xlane.xlu0 %679
    %v681 = vsel %vm527, %v66, 0.0
    %682 = vadd.xlane.f32.xlu0 %v681
    %v683 = vpop.xlane.xlu0 %682
    %v684 = vsel %vm527, %v67, 0.0
    %685 = vadd.xlane.f32.xlu0 %v684
    %v686 = vpop.xlane.xlu0 %685
    %v687 = vsel %vm527, %v68, 0.0
    %688 = vadd.xlane.f32.xlu0 %v687
    %v689 = vpop.xlane.xlu0 %688
    %v690 = vsel %vm527, %v69, 0.0
    %691 = vadd.xlane.f32.xlu0 %v690
    %v692 = vpop.xlane.xlu0 %691
    %v693 = vsel %vm527, %v70, 0.0
    %694 = vadd.xlane.f32.xlu0 %v693
    %v695 = vpop.xlane.xlu0 %694
    %v696 = vsel %vm527, %v71, 0.0
    %697 = vadd.xlane.f32.xlu0 %v696
    %v698 = vpop.xlane.xlu0 %697
    %v699 = vsel %vm527, %v72, 0.0
    %700 = vadd.xlane.f32.xlu0 %v699
    %v701 = vpop.xlane.xlu0 %700
    %v702 = vsel %vm527, %v73, 0.0
    %703 = vadd.xlane.f32.xlu0 %v702
    %v704 = vpop.xlane.xlu0 %703
    %v705 = vsel %vm527, %v74, 0.0
    %706 = vadd.xlane.f32.xlu0 %v705
    %v707 = vpop.xlane.xlu0 %706
    %v708 = vsel %vm527, %v75, 0.0
    %709 = vadd.xlane.f32.xlu0 %v708
    %v710 = vpop.xlane.xlu0 %709
    %v711 = vsel %vm527, %v76, 0.0
    %712 = vadd.xlane.f32.xlu0 %v711
    %v713 = vpop.xlane.xlu0 %712
    %v714 = vsel %vm527, %v77, 0.0
    %715 = vadd.xlane.f32.xlu0 %v714
    %v716 = vpop.xlane.xlu0 %715
    %v717 = vsel %vm527, %v78, 0.0
    %718 = vadd.xlane.f32.xlu0 %v717
    %v719 = vpop.xlane.xlu0 %718
    %v720 = vsel %vm527, %v79, 0.0
    %721 = vadd.xlane.f32.xlu0 %v720
    %v722 = vpop.xlane.xlu0 %721
    %v723 = vsel %vm527, %v80, 0.0
    %724 = vadd.xlane.f32.xlu0 %v723
    %v725 = vpop.xlane.xlu0 %724
    %v726 = vsel %vm527, %v81, 0.0
    %727 = vadd.xlane.f32.xlu0 %v726
    %v728 = vpop.xlane.xlu0 %727
    %v729 = vsel %vm527, %v82, 0.0
    %730 = vadd.xlane.f32.xlu0 %v729
    %v731 = vpop.xlane.xlu0 %730
    %v732 = vsel %vm527, %v83, 0.0
    %733 = vadd.xlane.f32.xlu0 %v732
    %v734 = vpop.xlane.xlu0 %733
    %v735 = vsel %vm527, %v84, 0.0
    %736 = vadd.xlane.f32.xlu0 %v735
    %v737 = vpop.xlane.xlu0 %736
    %v738 = vsel %vm527, %v85, 0.0
    %739 = vadd.xlane.f32.xlu0 %v738
    %v740 = vpop.xlane.xlu0 %739
    %v741 = vsel %vm527, %v86, 0.0
    %742 = vadd.xlane.f32.xlu0 %v741
    %v743 = vpop.xlane.xlu0 %742
    %v744 = vsel %vm527, %v87, 0.0
    %745 = vadd.xlane.f32.xlu0 %v744
    %v746 = vpop.xlane.xlu0 %745
    %v747 = vsel %vm527, %v88, 0.0
    %748 = vadd.xlane.f32.xlu0 %v747
    %v749 = vpop.xlane.xlu0 %748
    %v750 = vsel %vm527, %v89, 0.0
    %751 = vadd.xlane.f32.xlu0 %v750
    %v752 = vpop.xlane.xlu0 %751
    %v753 = vsel %vm527, %v90, 0.0
    %754 = vadd.xlane.f32.xlu0 %v753
    %v755 = vpop.xlane.xlu0 %754
    %v756 = vsel %vm527, %v91, 0.0
    %757 = vadd.xlane.f32.xlu0 %v756
    %v758 = vpop.xlane.xlu0 %757
    %v759 = vsel %vm527, %v92, 0.0
    %760 = vadd.xlane.f32.xlu0 %v759
    %v761 = vpop.xlane.xlu0 %760
    %v762 = vsel %vm527, %v93, 0.0
    %763 = vadd.xlane.f32.xlu0 %v762
    %v764 = vpop.xlane.xlu0 %763
    %v765 = vsel %vm527, %v94, 0.0
    %766 = vadd.xlane.f32.xlu0 %v765
    %v767 = vpop.xlane.xlu0 %766
    %v768 = vsel %vm527, %v95, 0.0
    %769 = vadd.xlane.f32.xlu0 %v768
    %v770 = vpop.xlane.xlu0 %769
    %v771 = vsel %vm527, %v96, 0.0
    %772 = vadd.xlane.f32.xlu0 %v771
    %v773 = vpop.xlane.xlu0 %772
    %v774 = vsel %vm527, %v97, 0.0
    %775 = vadd.xlane.f32.xlu0 %v774
    %v776 = vpop.xlane.xlu0 %775
    %v777 = vsel %vm527, %v98, 0.0
    %778 = vadd.xlane.f32.xlu0 %v777
    %v779 = vpop.xlane.xlu0 %778
    %v780 = vsel %vm527, %v99, 0.0
    %781 = vadd.xlane.f32.xlu0 %v780
    %v782 = vpop.xlane.xlu0 %781
    %v783 = vsel %vm527, %v100, 0.0
    %784 = vadd.xlane.f32.xlu0 %v783
    %v785 = vpop.xlane.xlu0 %784
    %v786 = vsel %vm527, %v101, 0.0
    %787 = vadd.xlane.f32.xlu0 %v786
    %v788 = vpop.xlane.xlu0 %787
    %v789 = vsel %vm527, %v102, 0.0
    %790 = vadd.xlane.f32.xlu0 %v789
    %v791 = vpop.xlane.xlu0 %790
    %v792 = vsel %vm527, %v103, 0.0
    %793 = vadd.xlane.f32.xlu0 %v792
    %v794 = vpop.xlane.xlu0 %793
    %v795 = vsel %vm527, %v104, 0.0
    %796 = vadd.xlane.f32.xlu0 %v795
    %v797 = vpop.xlane.xlu0 %796
    %v798 = vsel %vm527, %v105, 0.0
    %799 = vadd.xlane.f32.xlu0 %v798
    %v800 = vpop.xlane.xlu0 %799
    %v801 = vsel %vm527, %v106, 0.0
    %802 = vadd.xlane.f32.xlu0 %v801
    %v803 = vpop.xlane.xlu0 %802
    %v804 = vsel %vm527, %v107, 0.0
    %805 = vadd.xlane.f32.xlu0 %v804
    %v806 = vpop.xlane.xlu0 %805
    %v807 = vsel %vm527, %v108, 0.0
    %808 = vadd.xlane.f32.xlu0 %v807
    %v809 = vpop.xlane.xlu0 %808
    %v810 = vsel %vm527, %v109, 0.0
    %811 = vadd.xlane.f32.xlu0 %v810
    %v812 = vpop.xlane.xlu0 %811
    %v813 = vsel %vm527, %v110, 0.0
    %814 = vadd.xlane.f32.xlu0 %v813
    %v815 = vpop.xlane.xlu0 %814
    %v816 = vsel %vm527, %v111, 0.0
    %817 = vadd.xlane.f32.xlu0 %v816
    %v818 = vpop.xlane.xlu0 %817
    %v819 = vsel %vm527, %v112, 0.0
    %820 = vadd.xlane.f32.xlu0 %v819
    %v821 = vpop.xlane.xlu0 %820
    %v822 = vsel %vm527, %v113, 0.0
    %823 = vadd.xlane.f32.xlu0 %v822
    %v824 = vpop.xlane.xlu0 %823
    %v825 = vsel %vm527, %v114, 0.0
    %826 = vadd.xlane.f32.xlu0 %v825
    %v827 = vpop.xlane.xlu0 %826
    %v828 = vsel %vm527, %v115, 0.0
    %829 = vadd.xlane.f32.xlu0 %v828
    %v830 = vpop.xlane.xlu0 %829
    %v831 = vsel %vm527, %v116, 0.0
    %832 = vadd.xlane.f32.xlu0 %v831
    %v833 = vpop.xlane.xlu0 %832
    %v834 = vsel %vm527, %v117, 0.0
    %835 = vadd.xlane.f32.xlu0 %v834
    %v836 = vpop.xlane.xlu0 %835
    %v837 = vsel %vm527, %v118, 0.0
    %838 = vadd.xlane.f32.xlu0 %v837
    %v839 = vpop.xlane.xlu0 %838
    %v840 = vsel %vm527, %v119, 0.0
    %841 = vadd.xlane.f32.xlu0 %v840
    %v842 = vpop.xlane.xlu0 %841
    %v843 = vsel %vm527, %v120, 0.0
    %844 = vadd.xlane.f32.xlu0 %v843
    %v845 = vpop.xlane.xlu0 %844
    %v846 = vsel %vm527, %v121, 0.0
    %847 = vadd.xlane.f32.xlu0 %v846
    %v848 = vpop.xlane.xlu0 %847
    %v849 = vsel %vm527, %v122, 0.0
    %850 = vadd.xlane.f32.xlu0 %v849
    %v851 = vpop.xlane.xlu0 %850
    %v852 = vsel %vm527, %v123, 0.0
    %853 = vadd.xlane.f32.xlu0 %v852
    %v854 = vpop.xlane.xlu0 %853
    %v855 = vsel %vm527, %v124, 0.0
    %856 = vadd.xlane.f32.xlu0 %v855
    %v857 = vpop.xlane.xlu0 %856
    %v858 = vsel %vm527, %v125, 0.0
    %859 = vadd.xlane.f32.xlu0 %v858
    %v860 = vpop.xlane.xlu0 %859
    %v861 = vsel %vm527, %v126, 0.0
    %862 = vadd.xlane.f32.xlu0 %v861
    %v863 = vpop.xlane.xlu0 %862
    %v864 = vsel %vm527, %v127, 0.0
    %865 = vadd.xlane.f32.xlu0 %v864
    %v866 = vpop.xlane.xlu0 %865
    %v867 = vsel %vm527, %v128, 0.0
    %868 = vadd.xlane.f32.xlu0 %v867
    %v869 = vpop.xlane.xlu0 %868
    %v870 = vsel %vm527, %v129, 0.0
    %871 = vadd.xlane.f32.xlu0 %v870
    %v872 = vpop.xlane.xlu0 %871
    %v873 = vsel %vm527, %v130, 0.0
    %874 = vadd.xlane.f32.xlu0 %v873
    %v875 = vpop.xlane.xlu0 %874
    %v876 = vsel %vm527, %v131, 0.0
    %877 = vadd.xlane.f32.xlu0 %v876
    %v878 = vpop.xlane.xlu0 %877
    %v879 = vsel %vm527, %v132, 0.0
    %880 = vadd.xlane.f32.xlu0 %v879
    %v881 = vpop.xlane.xlu0 %880
    %v882 = vsel %vm527, %v133, 0.0
    %883 = vadd.xlane.f32.xlu0 %v882
    %v884 = vpop.xlane.xlu0 %883
    %v885 = vsel %vm527, %v134, 0.0
    %886 = vadd.xlane.f32.xlu0 %v885
    %v887 = vpop.xlane.xlu0 %886
    %v888 = vsel %vm527, %v135, 0.0
    %889 = vadd.xlane.f32.xlu0 %v888
    %v890 = vpop.xlane.xlu0 %889
    %v891 = vsel %vm527, %v136, 0.0
    %892 = vadd.xlane.f32.xlu0 %v891
    %v893 = vpop.xlane.xlu0 %892
    %v894 = vsel %vm527, %v137, 0.0
    %895 = vadd.xlane.f32.xlu0 %v894
    %v896 = vpop.xlane.xlu0 %895
    %v897 = vsel %vm527, %v138, 0.0
    %898 = vadd.xlane.f32.xlu0 %v897
    %v899 = vpop.xlane.xlu0 %898
    %v900 = vsel %vm527, %v139, 0.0
    %901 = vadd.xlane.f32.xlu0 %v900
    %v902 = vpop.xlane.xlu0 %901
    %v903 = vsel %vm527, %v140, 0.0
    %904 = vadd.xlane.f32.xlu0 %v903
    %v905 = vpop.xlane.xlu0 %904
    %v906 = vsel %vm527, %v141, 0.0
    %907 = vadd.xlane.f32.xlu0 %v906
    %v908 = vpop.xlane.xlu0 %907
    %v909 = vsel %vm527, %v142, 0.0
    %910 = vadd.xlane.f32.xlu0 %v909
    %v911 = vpop.xlane.xlu0 %910
    %v912 = vsel %vm527, %v143, 0.0
    %913 = vadd.xlane.f32.xlu0 %v912
    %v914 = vpop.xlane.xlu0 %913
    %v915 = vsel %vm527, %v144, 0.0
    %916 = vadd.xlane.f32.xlu0 %v915
    %v917 = vpop.xlane.xlu0 %916
    %v918 = vsel %vm527, %v145, 0.0
    %919 = vadd.xlane.f32.xlu0 %v918
    %v920 = vpop.xlane.xlu0 %919
    %v921 = vsel %vm527, %v146, 0.0
    %922 = vadd.xlane.f32.xlu0 %v921
    %v923 = vpop.xlane.xlu0 %922
    %v924 = vsel %vm527, %v147, 0.0
    %925 = vadd.xlane.f32.xlu0 %v924
    %v926 = vpop.xlane.xlu0 %925
    %v927 = vsel %vm527, %v148, 0.0
    %928 = vadd.xlane.f32.xlu0 %v927
    %v929 = vpop.xlane.xlu0 %928
    %v930 = vsel %vm527, %v149, 0.0
    %931 = vadd.xlane.f32.xlu0 %v930
    %v932 = vpop.xlane.xlu0 %931
    %v933 = vsel %vm527, %v150, 0.0
    %934 = vadd.xlane.f32.xlu0 %v933
    %v935 = vpop.xlane.xlu0 %934
    %v936 = vsel %vm527, %v151, 0.0
    %937 = vadd.xlane.f32.xlu0 %v936
    %v938 = vpop.xlane.xlu0 %937
    %v939 = vsel %vm527, %v152, 0.0
    %940 = vadd.xlane.f32.xlu0 %v939
    %v941 = vpop.xlane.xlu0 %940
    %v942 = vsel %vm527, %v153, 0.0
    %943 = vadd.xlane.f32.xlu0 %v942
    %v944 = vpop.xlane.xlu0 %943
    %v945 = vsel %vm527, %v154, 0.0
    %946 = vadd.xlane.f32.xlu0 %v945
    %v947 = vpop.xlane.xlu0 %946
    %v948 = vsel %vm527, %v155, 0.0
    %949 = vadd.xlane.f32.xlu0 %v948
    %v950 = vpop.xlane.xlu0 %949
    %v951 = vsel %vm527, %v156, 0.0
    %952 = vadd.xlane.f32.xlu0 %v951
    %v953 = vpop.xlane.xlu0 %952
    %v954 = vsel %vm527, %v157, 0.0
    %955 = vadd.xlane.f32.xlu0 %v954
    %v956 = vpop.xlane.xlu0 %955
    %v957 = vsel %vm527, %v158, 0.0
    %958 = vadd.xlane.f32.xlu0 %v957
    %v959 = vpop.xlane.xlu0 %958
    %v960 = vsel %vm527, %v159, 0.0
    %961 = vadd.xlane.f32.xlu0 %v960
    %v962 = vpop.xlane.xlu0 %961
    %v963 = vsel %vm527, %v160, 0.0
    %964 = vadd.xlane.f32.xlu0 %v963
    %v965 = vpop.xlane.xlu0 %964
    %v966 = vsel %vm527, %v161, 0.0
    %967 = vadd.xlane.f32.xlu0 %v966
    %v968 = vpop.xlane.xlu0 %967
    %v969 = vsel %vm527, %v162, 0.0
    %970 = vadd.xlane.f32.xlu0 %v969
    %v971 = vpop.xlane.xlu0 %970
    %v972 = vsel %vm527, %v163, 0.0
    %973 = vadd.xlane.f32.xlu0 %v972
    %v974 = vpop.xlane.xlu0 %973
    %v975 = vsel %vm527, %v164, 0.0
    %976 = vadd.xlane.f32.xlu0 %v975
    %v977 = vpop.xlane.xlu0 %976
    %v978 = vsel %vm527, %v165, 0.0
    %979 = vadd.xlane.f32.xlu0 %v978
    %v980 = vpop.xlane.xlu0 %979
    %v981 = vsel %vm527, %v166, 0.0
    %982 = vadd.xlane.f32.xlu0 %v981
    %v983 = vpop.xlane.xlu0 %982
    %v984 = vsel %vm527, %v167, 0.0
    %985 = vadd.xlane.f32.xlu0 %v984
    %v986 = vpop.xlane.xlu0 %985
    %v987 = vsel %vm527, %v168, 0.0
    %988 = vadd.xlane.f32.xlu0 %v987
    %v989 = vpop.xlane.xlu0 %988
    %v990 = vsel %vm527, %v169, 0.0
    %991 = vadd.xlane.f32.xlu0 %v990
    %v992 = vpop.xlane.xlu0 %991
    %v993 = vsel %vm527, %v170, 0.0
    %994 = vadd.xlane.f32.xlu0 %v993
    %v995 = vpop.xlane.xlu0 %994
    %v996 = vsel %vm527, %v171, 0.0
    %997 = vadd.xlane.f32.xlu0 %v996
    %v998 = vpop.xlane.xlu0 %997
    %v999 = vsel %vm527, %v172, 0.0
    %1000 = vadd.xlane.f32.xlu0 %v999
    %v1001 = vpop.xlane.xlu0 %1000
    %v1002 = vsel %vm527, %v173, 0.0
    %1003 = vadd.xlane.f32.xlu0 %v1002
    %v1004 = vpop.xlane.xlu0 %1003
    %v1005 = vsel %vm527, %v174, 0.0
    %1006 = vadd.xlane.f32.xlu0 %v1005
    %v1007 = vpop.xlane.xlu0 %1006
    %v1008 = vsel %vm527, %v175, 0.0
    %1009 = vadd.xlane.f32.xlu0 %v1008
    %v1010 = vpop.xlane.xlu0 %1009
    %v1011 = vsel %vm527, %v176, 0.0
    %1012 = vadd.xlane.f32.xlu0 %v1011
    %v1013 = vpop.xlane.xlu0 %1012
    %v1014 = vsel %vm527, %v177, 0.0
    %1015 = vadd.xlane.f32.xlu0 %v1014
    %v1016 = vpop.xlane.xlu0 %1015
    %v1017 = vsel %vm527, %v178, 0.0
    %1018 = vadd.xlane.f32.xlu0 %v1017
    %v1019 = vpop.xlane.xlu0 %1018
    %v1020 = vsel %vm527, %v179, 0.0
    %1021 = vadd.xlane.f32.xlu0 %v1020
    %v1022 = vpop.xlane.xlu0 %1021
    %v1023 = vsel %vm527, %v180, 0.0
    %1024 = vadd.xlane.f32.xlu0 %v1023
    %v1025 = vpop.xlane.xlu0 %1024
    %v1026 = vsel %vm527, %v181, 0.0
    %1027 = vadd.xlane.f32.xlu0 %v1026
    %v1028 = vpop.xlane.xlu0 %1027
    %v1029 = vsel %vm527, %v182, 0.0
    %1030 = vadd.xlane.f32.xlu0 %v1029
    %v1031 = vpop.xlane.xlu0 %1030
    %v1032 = vsel %vm527, %v183, 0.0
    %1033 = vadd.xlane.f32.xlu0 %v1032
    %v1034 = vpop.xlane.xlu0 %1033
    %v1035 = vsel %vm527, %v184, 0.0
    %1036 = vadd.xlane.f32.xlu0 %v1035
    %v1037 = vpop.xlane.xlu0 %1036
    %v1038 = vsel %vm527, %v185, 0.0
    %1039 = vadd.xlane.f32.xlu0 %v1038
    %v1040 = vpop.xlane.xlu0 %1039
    %v1041 = vsel %vm527, %v186, 0.0
    %1042 = vadd.xlane.f32.xlu0 %v1041
    %v1043 = vpop.xlane.xlu0 %1042
    %v1044 = vsel %vm527, %v187, 0.0
    %1045 = vadd.xlane.f32.xlu0 %v1044
    %v1046 = vpop.xlane.xlu0 %1045
    %v1047 = vsel %vm527, %v188, 0.0
    %1048 = vadd.xlane.f32.xlu0 %v1047
    %v1049 = vpop.xlane.xlu0 %1048
    %v1050 = vsel %vm527, %v189, 0.0
    %1051 = vadd.xlane.f32.xlu0 %v1050
    %v1052 = vpop.xlane.xlu0 %1051
    %v1053 = vsel %vm527, %v190, 0.0
    %1054 = vadd.xlane.f32.xlu0 %v1053
    %v1055 = vpop.xlane.xlu0 %1054
    %v1056 = vsel %vm527, %v191, 0.0
    %1057 = vadd.xlane.f32.xlu0 %v1056
    %v1058 = vpop.xlane.xlu0 %1057
    %v1059 = vsel %vm527, %v192, 0.0
    %1060 = vadd.xlane.f32.xlu0 %v1059
    %v1061 = vpop.xlane.xlu0 %1060
    %v1062 = vsel %vm527, %v193, 0.0
    %1063 = vadd.xlane.f32.xlu0 %v1062
    %v1064 = vpop.xlane.xlu0 %1063
    %v1065 = vsel %vm527, %v194, 0.0
    %1066 = vadd.xlane.f32.xlu0 %v1065
    %v1067 = vpop.xlane.xlu0 %1066
    %v1068 = vsel %vm527, %v195, 0.0
    %1069 = vadd.xlane.f32.xlu0 %v1068
    %v1070 = vpop.xlane.xlu0 %1069
    %v1071 = vsel %vm527, %v196, 0.0
    %1072 = vadd.xlane.f32.xlu0 %v1071
    %v1073 = vpop.xlane.xlu0 %1072
    %v1074 = vsel %vm527, %v197, 0.0
    %1075 = vadd.xlane.f32.xlu0 %v1074
    %v1076 = vpop.xlane.xlu0 %1075
    %v1077 = vsel %vm527, %v198, 0.0
    %1078 = vadd.xlane.f32.xlu0 %v1077
    %v1079 = vpop.xlane.xlu0 %1078
    %v1080 = vsel %vm527, %v199, 0.0
    %1081 = vadd.xlane.f32.xlu0 %v1080
    %v1082 = vpop.xlane.xlu0 %1081
    %v1083 = vsel %vm527, %v200, 0.0
    %1084 = vadd.xlane.f32.xlu0 %v1083
    %v1085 = vpop.xlane.xlu0 %1084
    %v1086 = vsel %vm527, %v201, 0.0
    %1087 = vadd.xlane.f32.xlu0 %v1086
    %v1088 = vpop.xlane.xlu0 %1087
    %v1089 = vsel %vm527, %v202, 0.0
    %1090 = vadd.xlane.f32.xlu0 %v1089
    %v1091 = vpop.xlane.xlu0 %1090
    %v1092 = vsel %vm527, %v203, 0.0
    %1093 = vadd.xlane.f32.xlu0 %v1092
    %v1094 = vpop.xlane.xlu0 %1093
    %v1095 = vsel %vm527, %v204, 0.0
    %1096 = vadd.xlane.f32.xlu0 %v1095
    %v1097 = vpop.xlane.xlu0 %1096
    %v1098 = vsel %vm527, %v205, 0.0
    %1099 = vadd.xlane.f32.xlu0 %v1098
    %v1100 = vpop.xlane.xlu0 %1099
    %v1101 = vsel %vm527, %v206, 0.0
    %1102 = vadd.xlane.f32.xlu0 %v1101
    %v1103 = vpop.xlane.xlu0 %1102
    %v1104 = vsel %vm527, %v207, 0.0
    %1105 = vadd.xlane.f32.xlu0 %v1104
    %v1106 = vpop.xlane.xlu0 %1105
    %v1107 = vsel %vm527, %v208, 0.0
    %1108 = vadd.xlane.f32.xlu0 %v1107
    %v1109 = vpop.xlane.xlu0 %1108
    %v1110 = vsel %vm527, %v209, 0.0
    %1111 = vadd.xlane.f32.xlu0 %v1110
    %v1112 = vpop.xlane.xlu0 %1111
    %v1113 = vsel %vm527, %v210, 0.0
    %1114 = vadd.xlane.f32.xlu0 %v1113
    %v1115 = vpop.xlane.xlu0 %1114
    %v1116 = vsel %vm527, %v211, 0.0
    %1117 = vadd.xlane.f32.xlu0 %v1116
    %v1118 = vpop.xlane.xlu0 %1117
    %v1119 = vsel %vm527, %v212, 0.0
    %1120 = vadd.xlane.f32.xlu0 %v1119
    %v1121 = vpop.xlane.xlu0 %1120
    %v1122 = vsel %vm527, %v213, 0.0
    %1123 = vadd.xlane.f32.xlu0 %v1122
    %v1124 = vpop.xlane.xlu0 %1123
    %v1125 = vsel %vm527, %v214, 0.0
    %1126 = vadd.xlane.f32.xlu0 %v1125
    %v1127 = vpop.xlane.xlu0 %1126
    %v1128 = vsel %vm527, %v215, 0.0
    %1129 = vadd.xlane.f32.xlu0 %v1128
    %v1130 = vpop.xlane.xlu0 %1129
    %v1131 = vsel %vm527, %v216, 0.0
    %1132 = vadd.xlane.f32.xlu0 %v1131
    %v1133 = vpop.xlane.xlu0 %1132
    %v1134 = vsel %vm527, %v217, 0.0
    %1135 = vadd.xlane.f32.xlu0 %v1134
    %v1136 = vpop.xlane.xlu0 %1135
    %v1137 = vsel %vm527, %v218, 0.0
    %1138 = vadd.xlane.f32.xlu0 %v1137
    %v1139 = vpop.xlane.xlu0 %1138
    %v1140 = vsel %vm527, %v219, 0.0
    %1141 = vadd.xlane.f32.xlu0 %v1140
    %v1142 = vpop.xlane.xlu0 %1141
    %v1143 = vsel %vm527, %v220, 0.0
    %1144 = vadd.xlane.f32.xlu0 %v1143
    %v1145 = vpop.xlane.xlu0 %1144
    %v1146 = vsel %vm527, %v221, 0.0
    %1147 = vadd.xlane.f32.xlu0 %v1146
    %v1148 = vpop.xlane.xlu0 %1147
    %v1149 = vsel %vm527, %v222, 0.0
    %1150 = vadd.xlane.f32.xlu0 %v1149
    %v1151 = vpop.xlane.xlu0 %1150
    %v1152 = vsel %vm527, %v223, 0.0
    %1153 = vadd.xlane.f32.xlu0 %v1152
    %v1154 = vpop.xlane.xlu0 %1153
    %v1155 = vsel %vm527, %v224, 0.0
    %1156 = vadd.xlane.f32.xlu0 %v1155
    %v1157 = vpop.xlane.xlu0 %1156
    %v1158 = vsel %vm527, %v225, 0.0
    %1159 = vadd.xlane.f32.xlu0 %v1158
    %v1160 = vpop.xlane.xlu0 %1159
    %v1161 = vsel %vm527, %v226, 0.0
    %1162 = vadd.xlane.f32.xlu0 %v1161
    %v1163 = vpop.xlane.xlu0 %1162
    %v1164 = vsel %vm527, %v227, 0.0
    %1165 = vadd.xlane.f32.xlu0 %v1164
    %v1166 = vpop.xlane.xlu0 %1165
    %v1167 = vsel %vm527, %v228, 0.0
    %1168 = vadd.xlane.f32.xlu0 %v1167
    %v1169 = vpop.xlane.xlu0 %1168
    %v1170 = vsel %vm527, %v229, 0.0
    %1171 = vadd.xlane.f32.xlu0 %v1170
    %v1172 = vpop.xlane.xlu0 %1171
    %v1173 = vsel %vm527, %v230, 0.0
    %1174 = vadd.xlane.f32.xlu0 %v1173
    %v1175 = vpop.xlane.xlu0 %1174
    %v1176 = vsel %vm527, %v231, 0.0
    %1177 = vadd.xlane.f32.xlu0 %v1176
    %v1178 = vpop.xlane.xlu0 %1177
    %v1179 = vsel %vm527, %v232, 0.0
    %1180 = vadd.xlane.f32.xlu0 %v1179
    %v1181 = vpop.xlane.xlu0 %1180
    %v1182 = vsel %vm527, %v233, 0.0
    %1183 = vadd.xlane.f32.xlu0 %v1182
    %v1184 = vpop.xlane.xlu0 %1183
    %v1185 = vsel %vm527, %v234, 0.0
    %1186 = vadd.xlane.f32.xlu0 %v1185
    %v1187 = vpop.xlane.xlu0 %1186
    %v1188 = vsel %vm527, %v235, 0.0
    %1189 = vadd.xlane.f32.xlu0 %v1188
    %v1190 = vpop.xlane.xlu0 %1189
    %v1191 = vsel %vm527, %v236, 0.0
    %1192 = vadd.xlane.f32.xlu0 %v1191
    %v1193 = vpop.xlane.xlu0 %1192
    %v1194 = vsel %vm527, %v237, 0.0
    %1195 = vadd.xlane.f32.xlu0 %v1194
    %v1196 = vpop.xlane.xlu0 %1195
    %v1197 = vsel %vm527, %v238, 0.0
    %1198 = vadd.xlane.f32.xlu0 %v1197
    %v1199 = vpop.xlane.xlu0 %1198
    %v1200 = vsel %vm527, %v239, 0.0
    %1201 = vadd.xlane.f32.xlu0 %v1200
    %v1202 = vpop.xlane.xlu0 %1201
    %v1203 = vsel %vm527, %v240, 0.0
    %1204 = vadd.xlane.f32.xlu0 %v1203
    %v1205 = vpop.xlane.xlu0 %1204
    %v1206 = vsel %vm527, %v241, 0.0
    %1207 = vadd.xlane.f32.xlu0 %v1206
    %v1208 = vpop.xlane.xlu0 %1207
    %v1209 = vsel %vm527, %v242, 0.0
    %1210 = vadd.xlane.f32.xlu0 %v1209
    %v1211 = vpop.xlane.xlu0 %1210
    %v1212 = vsel %vm527, %v243, 0.0
    %1213 = vadd.xlane.f32.xlu0 %v1212
    %v1214 = vpop.xlane.xlu0 %1213
    %v1215 = vsel %vm527, %v244, 0.0
    %1216 = vadd.xlane.f32.xlu0 %v1215
    %v1217 = vpop.xlane.xlu0 %1216
    %v1218 = vsel %vm527, %v245, 0.0
    %1219 = vadd.xlane.f32.xlu0 %v1218
    %v1220 = vpop.xlane.xlu0 %1219
    %v1221 = vsel %vm527, %v246, 0.0
    %1222 = vadd.xlane.f32.xlu0 %v1221
    %v1223 = vpop.xlane.xlu0 %1222
    %v1224 = vsel %vm527, %v247, 0.0
    %1225 = vadd.xlane.f32.xlu0 %v1224
    %v1226 = vpop.xlane.xlu0 %1225
    %v1227 = vsel %vm527, %v248, 0.0
    %1228 = vadd.xlane.f32.xlu0 %v1227
    %v1229 = vpop.xlane.xlu0 %1228
    %v1230 = vsel %vm527, %v249, 0.0
    %1231 = vadd.xlane.f32.xlu0 %v1230
    %v1232 = vpop.xlane.xlu0 %1231
    %v1233 = vsel %vm527, %v250, 0.0
    %1234 = vadd.xlane.f32.xlu0 %v1233
    %v1235 = vpop.xlane.xlu0 %1234
    %v1236 = vsel %vm527, %v251, 0.0
    %1237 = vadd.xlane.f32.xlu0 %v1236
    %v1238 = vpop.xlane.xlu0 %1237
    %v1239 = vsel %vm527, %v252, 0.0
    %1240 = vadd.xlane.f32.xlu0 %v1239
    %v1241 = vpop.xlane.xlu0 %1240
    %v1242 = vsel %vm527, %v253, 0.0
    %1243 = vadd.xlane.f32.xlu0 %v1242
    %v1244 = vpop.xlane.xlu0 %1243
    %v1245 = vsel %vm527, %v254, 0.0
    %1246 = vadd.xlane.f32.xlu0 %v1245
    %v1247 = vpop.xlane.xlu0 %1246
    %v1248 = vsel %vm527, %v255, 0.0
    %1249 = vadd.xlane.f32.xlu0 %v1248
    %v1250 = vpop.xlane.xlu0 %1249
    %v1251 = vsel %vm527, %v256, 0.0
    %1252 = vadd.xlane.f32.xlu0 %v1251
    %v1253 = vpop.xlane.xlu0 %1252
    %v1254 = vsel %vm527, %v257, 0.0
    %1255 = vadd.xlane.f32.xlu0 %v1254
    %v1256 = vpop.xlane.xlu0 %1255
    %v1257 = vsel %vm527, %v258, 0.0
    %1258 = vadd.xlane.f32.xlu0 %v1257
    %v1259 = vpop.xlane.xlu0 %1258
    %v1260 = vsel %vm527, %v259, 0.0
    %1261 = vadd.xlane.f32.xlu0 %v1260
    %v1262 = vpop.xlane.xlu0 %1261
    %v1263 = vsel %vm527, %v260, 0.0
    %1264 = vadd.xlane.f32.xlu0 %v1263
    %v1265 = vpop.xlane.xlu0 %1264
    %v1266 = vsel %vm527, %v261, 0.0
    %1267 = vadd.xlane.f32.xlu0 %v1266
    %v1268 = vpop.xlane.xlu0 %1267
    %v1269 = vsel %vm527, %v262, 0.0
    %1270 = vadd.xlane.f32.xlu0 %v1269
    %v1271 = vpop.xlane.xlu0 %1270
    %v1272 = vsel %vm527, %v263, 0.0
    %1273 = vadd.xlane.f32.xlu0 %v1272
    %v1274 = vpop.xlane.xlu0 %1273
    %v1275 = vsel %vm527, %v264, 0.0
    %1276 = vadd.xlane.f32.xlu0 %v1275
    %v1277 = vpop.xlane.xlu0 %1276
    %v1278 = vsel %vm527, %v265, 0.0
    %1279 = vadd.xlane.f32.xlu0 %v1278
    %v1280 = vpop.xlane.xlu0 %1279
    %v1281 = vsel %vm527, %v266, 0.0
    %1282 = vadd.xlane.f32.xlu0 %v1281
    %v1283 = vpop.xlane.xlu0 %1282
    %v1284 = vsel %vm527, %v267, 0.0
    %1285 = vadd.xlane.f32.xlu0 %v1284
    %v1286 = vpop.xlane.xlu0 %1285
    %v1287 = vsel %vm527, %v268, 0.0
    %1288 = vadd.xlane.f32.xlu0 %v1287
    %v1289 = vpop.xlane.xlu0 %1288
    %v1290 = vsel %vm527, %v269, 0.0
    %1291 = vadd.xlane.f32.xlu0 %v1290
    %v1292 = vpop.xlane.xlu0 %1291
    %v1293 = vsel %vm527, %v270, 0.0
    %1294 = vadd.xlane.f32.xlu0 %v1293
    %v1295 = vpop.xlane.xlu0 %1294
    %v1296 = vsel %vm527, %v271, 0.0
    %1297 = vadd.xlane.f32.xlu0 %v1296
    %v1298 = vpop.xlane.xlu0 %1297
    %v1299 = vsel %vm527, %v272, 0.0
    %1300 = vadd.xlane.f32.xlu0 %v1299
    %v1301 = vpop.xlane.xlu0 %1300
    %v1302 = vsel %vm527, %v273, 0.0
    %1303 = vadd.xlane.f32.xlu0 %v1302
    %v1304 = vpop.xlane.xlu0 %1303
    %v1305 = vsel %vm527, %v274, 0.0
    %1306 = vadd.xlane.f32.xlu0 %v1305
    %v1307 = vpop.xlane.xlu0 %1306
    %v1308 = vsel %vm527, %v275, 0.0
    %1309 = vadd.xlane.f32.xlu0 %v1308
    %v1310 = vpop.xlane.xlu0 %1309
    %v1311 = vsel %vm527, %v276, 0.0
    %1312 = vadd.xlane.f32.xlu0 %v1311
    %v1313 = vpop.xlane.xlu0 %1312
    %v1314 = vsel %vm527, %v277, 0.0
    %1315 = vadd.xlane.f32.xlu0 %v1314
    %v1316 = vpop.xlane.xlu0 %1315
    %v1317 = vsel %vm527, %v278, 0.0
    %1318 = vadd.xlane.f32.xlu0 %v1317
    %v1319 = vpop.xlane.xlu0 %1318
    %v1320 = vsel %vm527, %v279, 0.0
    %1321 = vadd.xlane.f32.xlu0 %v1320
    %v1322 = vpop.xlane.xlu0 %1321
    %v1323 = vsel %vm527, %v280, 0.0
    %1324 = vadd.xlane.f32.xlu0 %v1323
    %v1325 = vpop.xlane.xlu0 %1324
    %v1326 = vsel %vm527, %v281, 0.0
    %1327 = vadd.xlane.f32.xlu0 %v1326
    %v1328 = vpop.xlane.xlu0 %1327
    %v1329 = vsel %vm527, %v282, 0.0
    %1330 = vadd.xlane.f32.xlu0 %v1329
    %v1331 = vpop.xlane.xlu0 %1330
    %v1332 = vsel %vm527, %v283, 0.0
    %1333 = vadd.xlane.f32.xlu0 %v1332
    %v1334 = vpop.xlane.xlu0 %1333
    %v1335 = vsel %vm527, %v284, 0.0
    %1336 = vadd.xlane.f32.xlu0 %v1335
    %v1337 = vpop.xlane.xlu0 %1336
    %v1338 = vsel %vm527, %v285, 0.0
    %1339 = vadd.xlane.f32.xlu0 %v1338
    %v1340 = vpop.xlane.xlu0 %1339
    %v1341 = vsel %vm527, %v286, 0.0
    %1342 = vadd.xlane.f32.xlu0 %v1341
    %v1343 = vpop.xlane.xlu0 %1342
    %v1344 = vsel %vm527, %v287, 0.0
    %1345 = vadd.xlane.f32.xlu0 %v1344
    %v1346 = vpop.xlane.xlu0 %1345
    %v1347 = vsel %vm527, %v288, 0.0
    %1348 = vadd.xlane.f32.xlu0 %v1347
    %v1349 = vpop.xlane.xlu0 %1348
    %v1350 = vsel %vm527, %v289, 0.0
    %1351 = vadd.xlane.f32.xlu0 %v1350
    %v1352 = vpop.xlane.xlu0 %1351
    %v1353 = vsel %vm527, %v290, 0.0
    %1354 = vadd.xlane.f32.xlu0 %v1353
    %v1355 = vpop.xlane.xlu0 %1354
    %v1356 = vsel %vm527, %v291, 0.0
    %1357 = vadd.xlane.f32.xlu0 %v1356
    %v1358 = vpop.xlane.xlu0 %1357
    %v1359 = vsel %vm527, %v292, 0.0
    %1360 = vadd.xlane.f32.xlu0 %v1359
    %v1361 = vpop.xlane.xlu0 %1360
    %v1362 = vsel %vm527, %v293, 0.0
    %1363 = vadd.xlane.f32.xlu0 %v1362
    %v1364 = vpop.xlane.xlu0 %1363
    %v1365 = vsel %vm527, %v294, 0.0
    %1366 = vadd.xlane.f32.xlu0 %v1365
    %v1367 = vpop.xlane.xlu0 %1366
    %v1368 = vsel %vm527, %v295, 0.0
    %1369 = vadd.xlane.f32.xlu0 %v1368
    %v1370 = vpop.xlane.xlu0 %1369
    %v1371 = vsel %vm527, %v296, 0.0
    %1372 = vadd.xlane.f32.xlu0 %v1371
    %v1373 = vpop.xlane.xlu0 %1372
    %v1374 = vsel %vm527, %v297, 0.0
    %1375 = vadd.xlane.f32.xlu0 %v1374
    %v1376 = vpop.xlane.xlu0 %1375
    %v1377 = vsel %vm527, %v298, 0.0
    %1378 = vadd.xlane.f32.xlu0 %v1377
    %v1379 = vpop.xlane.xlu0 %1378
    %v1380 = vsel %vm527, %v299, 0.0
    %1381 = vadd.xlane.f32.xlu0 %v1380
    %v1382 = vpop.xlane.xlu0 %1381
    %v1383 = vsel %vm527, %v300, 0.0
    %1384 = vadd.xlane.f32.xlu0 %v1383
    %v1385 = vpop.xlane.xlu0 %1384
    %v1386 = vsel %vm527, %v301, 0.0
    %1387 = vadd.xlane.f32.xlu0 %v1386
    %v1388 = vpop.xlane.xlu0 %1387
    %v1389 = vsel %vm527, %v302, 0.0
    %1390 = vadd.xlane.f32.xlu0 %v1389
    %v1391 = vpop.xlane.xlu0 %1390
    %v1392 = vsel %vm527, %v303, 0.0
    %1393 = vadd.xlane.f32.xlu0 %v1392
    %v1394 = vpop.xlane.xlu0 %1393
    %v1395 = vsel %vm527, %v304, 0.0
    %1396 = vadd.xlane.f32.xlu0 %v1395
    %v1397 = vpop.xlane.xlu0 %1396
    %v1398 = vsel %vm527, %v305, 0.0
    %1399 = vadd.xlane.f32.xlu0 %v1398
    %v1400 = vpop.xlane.xlu0 %1399
    %v1401 = vsel %vm527, %v306, 0.0
    %1402 = vadd.xlane.f32.xlu0 %v1401
    %v1403 = vpop.xlane.xlu0 %1402
    %v1404 = vsel %vm527, %v307, 0.0
    %1405 = vadd.xlane.f32.xlu0 %v1404
    %v1406 = vpop.xlane.xlu0 %1405
    %v1407 = vsel %vm527, %v308, 0.0
    %1408 = vadd.xlane.f32.xlu0 %v1407
    %v1409 = vpop.xlane.xlu0 %1408
    %v1410 = vsel %vm527, %v309, 0.0
    %1411 = vadd.xlane.f32.xlu0 %v1410
    %v1412 = vpop.xlane.xlu0 %1411
    %v1413 = vsel %vm527, %v310, 0.0
    %1414 = vadd.xlane.f32.xlu0 %v1413
    %v1415 = vpop.xlane.xlu0 %1414
    %v1416 = vsel %vm527, %v311, 0.0
    %1417 = vadd.xlane.f32.xlu0 %v1416
    %v1418 = vpop.xlane.xlu0 %1417
    %v1419 = vsel %vm527, %v312, 0.0
    %1420 = vadd.xlane.f32.xlu0 %v1419
    %v1421 = vpop.xlane.xlu0 %1420
    %v1422 = vsel %vm527, %v313, 0.0
    %1423 = vadd.xlane.f32.xlu0 %v1422
    %v1424 = vpop.xlane.xlu0 %1423
    %v1425 = vsel %vm527, %v314, 0.0
    %1426 = vadd.xlane.f32.xlu0 %v1425
    %v1427 = vpop.xlane.xlu0 %1426
    %v1428 = vsel %vm527, %v315, 0.0
    %1429 = vadd.xlane.f32.xlu0 %v1428
    %v1430 = vpop.xlane.xlu0 %1429
    %v1431 = vsel %vm527, %v316, 0.0
    %1432 = vadd.xlane.f32.xlu0 %v1431
    %v1433 = vpop.xlane.xlu0 %1432
    %v1434 = vsel %vm527, %v317, 0.0
    %1435 = vadd.xlane.f32.xlu0 %v1434
    %v1436 = vpop.xlane.xlu0 %1435
    %v1437 = vsel %vm527, %v318, 0.0
    %1438 = vadd.xlane.f32.xlu0 %v1437
    %v1439 = vpop.xlane.xlu0 %1438
    %v1440 = vsel %vm527, %v319, 0.0
    %1441 = vadd.xlane.f32.xlu0 %v1440
    %v1442 = vpop.xlane.xlu0 %1441
    %v1443 = vsel %vm527, %v320, 0.0
    %1444 = vadd.xlane.f32.xlu0 %v1443
    %v1445 = vpop.xlane.xlu0 %1444
    %v1446 = vsel %vm527, %v321, 0.0
    %1447 = vadd.xlane.f32.xlu0 %v1446
    %v1448 = vpop.xlane.xlu0 %1447
    %v1449 = vsel %vm527, %v322, 0.0
    %1450 = vadd.xlane.f32.xlu0 %v1449
    %v1451 = vpop.xlane.xlu0 %1450
    %v1452 = vsel %vm527, %v323, 0.0
    %1453 = vadd.xlane.f32.xlu0 %v1452
    %v1454 = vpop.xlane.xlu0 %1453
    %v1455 = vsel %vm527, %v324, 0.0
    %1456 = vadd.xlane.f32.xlu0 %v1455
    %v1457 = vpop.xlane.xlu0 %1456
    %v1458 = vsel %vm527, %v325, 0.0
    %1459 = vadd.xlane.f32.xlu0 %v1458
    %v1460 = vpop.xlane.xlu0 %1459
    %v1461 = vsel %vm527, %v326, 0.0
    %1462 = vadd.xlane.f32.xlu0 %v1461
    %v1463 = vpop.xlane.xlu0 %1462
    %v1464 = vsel %vm527, %v327, 0.0
    %1465 = vadd.xlane.f32.xlu0 %v1464
    %v1466 = vpop.xlane.xlu0 %1465
    %v1467 = vsel %vm527, %v328, 0.0
    %1468 = vadd.xlane.f32.xlu0 %v1467
    %v1469 = vpop.xlane.xlu0 %1468
    %v1470 = vsel %vm527, %v329, 0.0
    %1471 = vadd.xlane.f32.xlu0 %v1470
    %v1472 = vpop.xlane.xlu0 %1471
    %v1473 = vsel %vm527, %v330, 0.0
    %1474 = vadd.xlane.f32.xlu0 %v1473
    %v1475 = vpop.xlane.xlu0 %1474
    %v1476 = vsel %vm527, %v331, 0.0
    %1477 = vadd.xlane.f32.xlu0 %v1476
    %v1478 = vpop.xlane.xlu0 %1477
    %v1479 = vsel %vm527, %v332, 0.0
    %1480 = vadd.xlane.f32.xlu0 %v1479
    %v1481 = vpop.xlane.xlu0 %1480
    %v1482 = vsel %vm527, %v333, 0.0
    %1483 = vadd.xlane.f32.xlu0 %v1482
    %v1484 = vpop.xlane.xlu0 %1483
    %v1485 = vsel %vm527, %v334, 0.0
    %1486 = vadd.xlane.f32.xlu0 %v1485
    %v1487 = vpop.xlane.xlu0 %1486
    %v1488 = vsel %vm527, %v335, 0.0
    %1489 = vadd.xlane.f32.xlu0 %v1488
    %v1490 = vpop.xlane.xlu0 %1489
    %v1491 = vsel %vm527, %v336, 0.0
    %1492 = vadd.xlane.f32.xlu0 %v1491
    %v1493 = vpop.xlane.xlu0 %1492
    %v1494 = vsel %vm527, %v337, 0.0
    %1495 = vadd.xlane.f32.xlu0 %v1494
    %v1496 = vpop.xlane.xlu0 %1495
    %v1497 = vsel %vm527, %v338, 0.0
    %1498 = vadd.xlane.f32.xlu0 %v1497
    %v1499 = vpop.xlane.xlu0 %1498
    %v1500 = vsel %vm527, %v339, 0.0
    %1501 = vadd.xlane.f32.xlu0 %v1500
    %v1502 = vpop.xlane.xlu0 %1501
    %v1503 = vsel %vm527, %v340, 0.0
    %1504 = vadd.xlane.f32.xlu0 %v1503
    %v1505 = vpop.xlane.xlu0 %1504
    %v1506 = vsel %vm527, %v341, 0.0
    %1507 = vadd.xlane.f32.xlu0 %v1506
    %v1508 = vpop.xlane.xlu0 %1507
    %v1509 = vsel %vm527, %v342, 0.0
    %1510 = vadd.xlane.f32.xlu0 %v1509
    %v1511 = vpop.xlane.xlu0 %1510
    %v1512 = vsel %vm527, %v343, 0.0
    %1513 = vadd.xlane.f32.xlu0 %v1512
    %v1514 = vpop.xlane.xlu0 %1513
    %v1515 = vsel %vm527, %v344, 0.0
    %1516 = vadd.xlane.f32.xlu0 %v1515
    %v1517 = vpop.xlane.xlu0 %1516
    %v1518 = vsel %vm527, %v345, 0.0
    %1519 = vadd.xlane.f32.xlu0 %v1518
    %v1520 = vpop.xlane.xlu0 %1519
    %v1521 = vsel %vm527, %v346, 0.0
    %1522 = vadd.xlane.f32.xlu0 %v1521
    %v1523 = vpop.xlane.xlu0 %1522
    %v1524 = vsel %vm527, %v347, 0.0
    %1525 = vadd.xlane.f32.xlu0 %v1524
    %v1526 = vpop.xlane.xlu0 %1525
    %v1527 = vsel %vm527, %v348, 0.0
    %1528 = vadd.xlane.f32.xlu0 %v1527
    %v1529 = vpop.xlane.xlu0 %1528
    %v1530 = vsel %vm527, %v349, 0.0
    %1531 = vadd.xlane.f32.xlu0 %v1530
    %v1532 = vpop.xlane.xlu0 %1531
    %v1533 = vsel %vm527, %v350, 0.0
    %1534 = vadd.xlane.f32.xlu0 %v1533
    %v1535 = vpop.xlane.xlu0 %1534
    %v1536 = vsel %vm527, %v351, 0.0
    %1537 = vadd.xlane.f32.xlu0 %v1536
    %v1538 = vpop.xlane.xlu0 %1537
    %v1539 = vsel %vm527, %v352, 0.0
    %1540 = vadd.xlane.f32.xlu0 %v1539
    %v1541 = vpop.xlane.xlu0 %1540
    %v1542 = vsel %vm527, %v353, 0.0
    %1543 = vadd.xlane.f32.xlu0 %v1542
    %v1544 = vpop.xlane.xlu0 %1543
    %v1545 = vsel %vm527, %v354, 0.0
    %1546 = vadd.xlane.f32.xlu0 %v1545
    %v1547 = vpop.xlane.xlu0 %1546
    %v1548 = vsel %vm527, %v355, 0.0
    %1549 = vadd.xlane.f32.xlu0 %v1548
    %v1550 = vpop.xlane.xlu0 %1549
    %v1551 = vsel %vm527, %v356, 0.0
    %1552 = vadd.xlane.f32.xlu0 %v1551
    %v1553 = vpop.xlane.xlu0 %1552
    %v1554 = vsel %vm527, %v357, 0.0
    %1555 = vadd.xlane.f32.xlu0 %v1554
    %v1556 = vpop.xlane.xlu0 %1555
    %v1557 = vsel %vm527, %v358, 0.0
    %1558 = vadd.xlane.f32.xlu0 %v1557
    %v1559 = vpop.xlane.xlu0 %1558
    %v1560 = vsel %vm527, %v359, 0.0
    %1561 = vadd.xlane.f32.xlu0 %v1560
    %v1562 = vpop.xlane.xlu0 %1561
    %v1563 = vsel %vm527, %v360, 0.0
    %1564 = vadd.xlane.f32.xlu0 %v1563
    %v1565 = vpop.xlane.xlu0 %1564
    %v1566 = vsel %vm527, %v361, 0.0
    %1567 = vadd.xlane.f32.xlu0 %v1566
    %v1568 = vpop.xlane.xlu0 %1567
    %v1569 = vsel %vm527, %v362, 0.0
    %1570 = vadd.xlane.f32.xlu0 %v1569
    %v1571 = vpop.xlane.xlu0 %1570
    %v1572 = vsel %vm527, %v363, 0.0
    %1573 = vadd.xlane.f32.xlu0 %v1572
    %v1574 = vpop.xlane.xlu0 %1573
    %v1575 = vsel %vm527, %v364, 0.0
    %1576 = vadd.xlane.f32.xlu0 %v1575
    %v1577 = vpop.xlane.xlu0 %1576
    %v1578 = vsel %vm527, %v365, 0.0
    %1579 = vadd.xlane.f32.xlu0 %v1578
    %v1580 = vpop.xlane.xlu0 %1579
    %v1581 = vsel %vm527, %v366, 0.0
    %1582 = vadd.xlane.f32.xlu0 %v1581
    %v1583 = vpop.xlane.xlu0 %1582
    %v1584 = vsel %vm527, %v367, 0.0
    %1585 = vadd.xlane.f32.xlu0 %v1584
    %v1586 = vpop.xlane.xlu0 %1585
    %v1587 = vsel %vm527, %v368, 0.0
    %1588 = vadd.xlane.f32.xlu0 %v1587
    %v1589 = vpop.xlane.xlu0 %1588
    %v1590 = vsel %vm527, %v369, 0.0
    %1591 = vadd.xlane.f32.xlu0 %v1590
    %v1592 = vpop.xlane.xlu0 %1591
    %v1593 = vsel %vm527, %v370, 0.0
    %1594 = vadd.xlane.f32.xlu0 %v1593
    %v1595 = vpop.xlane.xlu0 %1594
    %v1596 = vsel %vm527, %v371, 0.0
    %1597 = vadd.xlane.f32.xlu0 %v1596
    %v1598 = vpop.xlane.xlu0 %1597
    %v1599 = vsel %vm527, %v372, 0.0
    %1600 = vadd.xlane.f32.xlu0 %v1599
    %v1601 = vpop.xlane.xlu0 %1600
    %v1602 = vsel %vm527, %v373, 0.0
    %1603 = vadd.xlane.f32.xlu0 %v1602
    %v1604 = vpop.xlane.xlu0 %1603
    %v1605 = vsel %vm527, %v374, 0.0
    %1606 = vadd.xlane.f32.xlu0 %v1605
    %v1607 = vpop.xlane.xlu0 %1606
    %v1608 = vsel %vm527, %v375, 0.0
    %1609 = vadd.xlane.f32.xlu0 %v1608
    %v1610 = vpop.xlane.xlu0 %1609
    %v1611 = vsel %vm527, %v376, 0.0
    %1612 = vadd.xlane.f32.xlu0 %v1611
    %v1613 = vpop.xlane.xlu0 %1612
    %v1614 = vsel %vm527, %v377, 0.0
    %1615 = vadd.xlane.f32.xlu0 %v1614
    %v1616 = vpop.xlane.xlu0 %1615
    %v1617 = vsel %vm527, %v378, 0.0
    %1618 = vadd.xlane.f32.xlu0 %v1617
    %v1619 = vpop.xlane.xlu0 %1618
    %v1620 = vsel %vm527, %v379, 0.0
    %1621 = vadd.xlane.f32.xlu0 %v1620
    %v1622 = vpop.xlane.xlu0 %1621
    %v1623 = vsel %vm527, %v380, 0.0
    %1624 = vadd.xlane.f32.xlu0 %v1623
    %v1625 = vpop.xlane.xlu0 %1624
    %v1626 = vsel %vm527, %v381, 0.0
    %1627 = vadd.xlane.f32.xlu0 %v1626
    %v1628 = vpop.xlane.xlu0 %1627
    %v1629 = vsel %vm527, %v382, 0.0
    %1630 = vadd.xlane.f32.xlu0 %v1629
    %v1631 = vpop.xlane.xlu0 %1630
    %v1632 = vsel %vm527, %v383, 0.0
    %1633 = vadd.xlane.f32.xlu0 %v1632
    %v1634 = vpop.xlane.xlu0 %1633
    %v1635 = vsel %vm527, %v384, 0.0
    %1636 = vadd.xlane.f32.xlu0 %v1635
    %v1637 = vpop.xlane.xlu0 %1636
    %v1638 = vsel %vm527, %v385, 0.0
    %1639 = vadd.xlane.f32.xlu0 %v1638
    %v1640 = vpop.xlane.xlu0 %1639
    %v1641 = vsel %vm527, %v386, 0.0
    %1642 = vadd.xlane.f32.xlu0 %v1641
    %v1643 = vpop.xlane.xlu0 %1642
    %v1644 = vsel %vm527, %v387, 0.0
    %1645 = vadd.xlane.f32.xlu0 %v1644
    %v1646 = vpop.xlane.xlu0 %1645
    %v1647 = vsel %vm527, %v388, 0.0
    %1648 = vadd.xlane.f32.xlu0 %v1647
    %v1649 = vpop.xlane.xlu0 %1648
    %v1650 = vsel %vm527, %v389, 0.0
    %1651 = vadd.xlane.f32.xlu0 %v1650
    %v1652 = vpop.xlane.xlu0 %1651
    %v1653 = vsel %vm527, %v390, 0.0
    %1654 = vadd.xlane.f32.xlu0 %v1653
    %v1655 = vpop.xlane.xlu0 %1654
    %v1656 = vsel %vm527, %v391, 0.0
    %1657 = vadd.xlane.f32.xlu0 %v1656
    %v1658 = vpop.xlane.xlu0 %1657
    %v1659 = vsel %vm527, %v392, 0.0
    %1660 = vadd.xlane.f32.xlu0 %v1659
    %v1661 = vpop.xlane.xlu0 %1660
    %v1662 = vsel %vm527, %v393, 0.0
    %1663 = vadd.xlane.f32.xlu0 %v1662
    %v1664 = vpop.xlane.xlu0 %1663
    %v1665 = vsel %vm527, %v394, 0.0
    %1666 = vadd.xlane.f32.xlu0 %v1665
    %v1667 = vpop.xlane.xlu0 %1666
    %v1668 = vsel %vm527, %v395, 0.0
    %1669 = vadd.xlane.f32.xlu0 %v1668
    %v1670 = vpop.xlane.xlu0 %1669
    %v1671 = vsel %vm527, %v396, 0.0
    %1672 = vadd.xlane.f32.xlu0 %v1671
    %v1673 = vpop.xlane.xlu0 %1672
    %v1674 = vsel %vm527, %v397, 0.0
    %1675 = vadd.xlane.f32.xlu0 %v1674
    %v1676 = vpop.xlane.xlu0 %1675
    %v1677 = vsel %vm527, %v398, 0.0
    %1678 = vadd.xlane.f32.xlu0 %v1677
    %v1679 = vpop.xlane.xlu0 %1678
    %v1680 = vsel %vm527, %v399, 0.0
    %1681 = vadd.xlane.f32.xlu0 %v1680
    %v1682 = vpop.xlane.xlu0 %1681
    %v1683 = vsel %vm527, %v400, 0.0
    %1684 = vadd.xlane.f32.xlu0 %v1683
    %v1685 = vpop.xlane.xlu0 %1684
    %v1686 = vsel %vm527, %v401, 0.0
    %1687 = vadd.xlane.f32.xlu0 %v1686
    %v1688 = vpop.xlane.xlu0 %1687
    %v1689 = vsel %vm527, %v402, 0.0
    %1690 = vadd.xlane.f32.xlu0 %v1689
    %v1691 = vpop.xlane.xlu0 %1690
    %v1692 = vsel %vm527, %v403, 0.0
    %1693 = vadd.xlane.f32.xlu0 %v1692
    %v1694 = vpop.xlane.xlu0 %1693
    %v1695 = vsel %vm527, %v404, 0.0
    %1696 = vadd.xlane.f32.xlu0 %v1695
    %v1697 = vpop.xlane.xlu0 %1696
    %v1698 = vsel %vm527, %v405, 0.0
    %1699 = vadd.xlane.f32.xlu0 %v1698
    %v1700 = vpop.xlane.xlu0 %1699
    %v1701 = vsel %vm527, %v406, 0.0
    %1702 = vadd.xlane.f32.xlu0 %v1701
    %v1703 = vpop.xlane.xlu0 %1702
    %v1704 = vsel %vm527, %v407, 0.0
    %1705 = vadd.xlane.f32.xlu0 %v1704
    %v1706 = vpop.xlane.xlu0 %1705
    %v1707 = vsel %vm527, %v408, 0.0
    %1708 = vadd.xlane.f32.xlu0 %v1707
    %v1709 = vpop.xlane.xlu0 %1708
    %v1710 = vsel %vm527, %v409, 0.0
    %1711 = vadd.xlane.f32.xlu0 %v1710
    %v1712 = vpop.xlane.xlu0 %1711
    %v1713 = vsel %vm527, %v410, 0.0
    %1714 = vadd.xlane.f32.xlu0 %v1713
    %v1715 = vpop.xlane.xlu0 %1714
    %v1716 = vsel %vm527, %v411, 0.0
    %1717 = vadd.xlane.f32.xlu0 %v1716
    %v1718 = vpop.xlane.xlu0 %1717
    %v1719 = vsel %vm527, %v412, 0.0
    %1720 = vadd.xlane.f32.xlu0 %v1719
    %v1721 = vpop.xlane.xlu0 %1720
    %v1722 = vsel %vm527, %v413, 0.0
    %1723 = vadd.xlane.f32.xlu0 %v1722
    %v1724 = vpop.xlane.xlu0 %1723
    %v1725 = vsel %vm527, %v414, 0.0
    %1726 = vadd.xlane.f32.xlu0 %v1725
    %v1727 = vpop.xlane.xlu0 %1726
    %v1728 = vsel %vm527, %v415, 0.0
    %1729 = vadd.xlane.f32.xlu0 %v1728
    %v1730 = vpop.xlane.xlu0 %1729
    %v1731 = vsel %vm527, %v416, 0.0
    %1732 = vadd.xlane.f32.xlu0 %v1731
    %v1733 = vpop.xlane.xlu0 %1732
    %v1734 = vsel %vm527, %v417, 0.0
    %1735 = vadd.xlane.f32.xlu0 %v1734
    %v1736 = vpop.xlane.xlu0 %1735
    %v1737 = vsel %vm527, %v418, 0.0
    %1738 = vadd.xlane.f32.xlu0 %v1737
    %v1739 = vpop.xlane.xlu0 %1738
    %v1740 = vsel %vm527, %v419, 0.0
    %1741 = vadd.xlane.f32.xlu0 %v1740
    %v1742 = vpop.xlane.xlu0 %1741
    %v1743 = vsel %vm527, %v420, 0.0
    %1744 = vadd.xlane.f32.xlu0 %v1743
    %v1745 = vpop.xlane.xlu0 %1744
    %v1746 = vsel %vm527, %v421, 0.0
    %1747 = vadd.xlane.f32.xlu0 %v1746
    %v1748 = vpop.xlane.xlu0 %1747
    %v1749 = vsel %vm527, %v422, 0.0
    %1750 = vadd.xlane.f32.xlu0 %v1749
    %v1751 = vpop.xlane.xlu0 %1750
    %v1752 = vsel %vm527, %v423, 0.0
    %1753 = vadd.xlane.f32.xlu0 %v1752
    %v1754 = vpop.xlane.xlu0 %1753
    %v1755 = vsel %vm527, %v424, 0.0
    %1756 = vadd.xlane.f32.xlu0 %v1755
    %v1757 = vpop.xlane.xlu0 %1756
    %v1758 = vsel %vm527, %v425, 0.0
    %1759 = vadd.xlane.f32.xlu0 %v1758
    %v1760 = vpop.xlane.xlu0 %1759
    %v1761 = vsel %vm527, %v426, 0.0
    %1762 = vadd.xlane.f32.xlu0 %v1761
    %v1763 = vpop.xlane.xlu0 %1762
    %v1764 = vsel %vm527, %v427, 0.0
    %1765 = vadd.xlane.f32.xlu0 %v1764
    %v1766 = vpop.xlane.xlu0 %1765
    %v1767 = vsel %vm527, %v428, 0.0
    %1768 = vadd.xlane.f32.xlu0 %v1767
    %v1769 = vpop.xlane.xlu0 %1768
    %v1770 = vsel %vm527, %v429, 0.0
    %1771 = vadd.xlane.f32.xlu0 %v1770
    %v1772 = vpop.xlane.xlu0 %1771
    %v1773 = vsel %vm527, %v430, 0.0
    %1774 = vadd.xlane.f32.xlu0 %v1773
    %v1775 = vpop.xlane.xlu0 %1774
    %v1776 = vsel %vm527, %v431, 0.0
    %1777 = vadd.xlane.f32.xlu0 %v1776
    %v1778 = vpop.xlane.xlu0 %1777
    %v1779 = vsel %vm527, %v432, 0.0
    %1780 = vadd.xlane.f32.xlu0 %v1779
    %v1781 = vpop.xlane.xlu0 %1780
    %v1782 = vsel %vm527, %v433, 0.0
    %1783 = vadd.xlane.f32.xlu0 %v1782
    %v1784 = vpop.xlane.xlu0 %1783
    %v1785 = vsel %vm527, %v434, 0.0
    %1786 = vadd.xlane.f32.xlu0 %v1785
    %v1787 = vpop.xlane.xlu0 %1786
    %v1788 = vsel %vm527, %v435, 0.0
    %1789 = vadd.xlane.f32.xlu0 %v1788
    %v1790 = vpop.xlane.xlu0 %1789
    %v1791 = vsel %vm527, %v436, 0.0
    %1792 = vadd.xlane.f32.xlu0 %v1791
    %v1793 = vpop.xlane.xlu0 %1792
    %v1794 = vsel %vm527, %v437, 0.0
    %1795 = vadd.xlane.f32.xlu0 %v1794
    %v1796 = vpop.xlane.xlu0 %1795
    %v1797 = vsel %vm527, %v438, 0.0
    %1798 = vadd.xlane.f32.xlu0 %v1797
    %v1799 = vpop.xlane.xlu0 %1798
    %v1800 = vsel %vm527, %v439, 0.0
    %1801 = vadd.xlane.f32.xlu0 %v1800
    %v1802 = vpop.xlane.xlu0 %1801
    %v1803 = vsel %vm527, %v440, 0.0
    %1804 = vadd.xlane.f32.xlu0 %v1803
    %v1805 = vpop.xlane.xlu0 %1804
    %v1806 = vsel %vm527, %v441, 0.0
    %1807 = vadd.xlane.f32.xlu0 %v1806
    %v1808 = vpop.xlane.xlu0 %1807
    %v1809 = vsel %vm527, %v442, 0.0
    %1810 = vadd.xlane.f32.xlu0 %v1809
    %v1811 = vpop.xlane.xlu0 %1810
    %v1812 = vsel %vm527, %v443, 0.0
    %1813 = vadd.xlane.f32.xlu0 %v1812
    %v1814 = vpop.xlane.xlu0 %1813
    %v1815 = vsel %vm527, %v444, 0.0
    %1816 = vadd.xlane.f32.xlu0 %v1815
    %v1817 = vpop.xlane.xlu0 %1816
    %v1818 = vsel %vm527, %v445, 0.0
    %1819 = vadd.xlane.f32.xlu0 %v1818
    %v1820 = vpop.xlane.xlu0 %1819
    %v1821 = vsel %vm527, %v446, 0.0
    %1822 = vadd.xlane.f32.xlu0 %v1821
    %v1823 = vpop.xlane.xlu0 %1822
    %v1824 = vsel %vm527, %v447, 0.0
    %1825 = vadd.xlane.f32.xlu0 %v1824
    %v1826 = vpop.xlane.xlu0 %1825
    %v1827 = vsel %vm527, %v448, 0.0
    %1828 = vadd.xlane.f32.xlu0 %v1827
    %v1829 = vpop.xlane.xlu0 %1828
    %v1830 = vsel %vm527, %v449, 0.0
    %1831 = vadd.xlane.f32.xlu0 %v1830
    %v1832 = vpop.xlane.xlu0 %1831
    %v1833 = vsel %vm527, %v450, 0.0
    %1834 = vadd.xlane.f32.xlu0 %v1833
    %v1835 = vpop.xlane.xlu0 %1834
    %v1836 = vsel %vm527, %v451, 0.0
    %1837 = vadd.xlane.f32.xlu0 %v1836
    %v1838 = vpop.xlane.xlu0 %1837
    %v1839 = vsel %vm527, %v452, 0.0
    %1840 = vadd.xlane.f32.xlu0 %v1839
    %v1841 = vpop.xlane.xlu0 %1840
    %v1842 = vsel %vm527, %v453, 0.0
    %1843 = vadd.xlane.f32.xlu0 %v1842
    %v1844 = vpop.xlane.xlu0 %1843
    %v1845 = vsel %vm527, %v454, 0.0
    %1846 = vadd.xlane.f32.xlu0 %v1845
    %v1847 = vpop.xlane.xlu0 %1846
    %v1848 = vsel %vm527, %v455, 0.0
    %1849 = vadd.xlane.f32.xlu0 %v1848
    %v1850 = vpop.xlane.xlu0 %1849
    %v1851 = vsel %vm527, %v456, 0.0
    %1852 = vadd.xlane.f32.xlu0 %v1851
    %v1853 = vpop.xlane.xlu0 %1852
    %v1854 = vsel %vm527, %v457, 0.0
    %1855 = vadd.xlane.f32.xlu0 %v1854
    %v1856 = vpop.xlane.xlu0 %1855
    %v1857 = vsel %vm527, %v458, 0.0
    %1858 = vadd.xlane.f32.xlu0 %v1857
    %v1859 = vpop.xlane.xlu0 %1858
    %v1860 = vsel %vm527, %v459, 0.0
    %1861 = vadd.xlane.f32.xlu0 %v1860
    %v1862 = vpop.xlane.xlu0 %1861
    %v1863 = vsel %vm527, %v460, 0.0
    %1864 = vadd.xlane.f32.xlu0 %v1863
    %v1865 = vpop.xlane.xlu0 %1864
    %v1866 = vsel %vm527, %v461, 0.0
    %1867 = vadd.xlane.f32.xlu0 %v1866
    %v1868 = vpop.xlane.xlu0 %1867
    %v1869 = vsel %vm527, %v462, 0.0
    %1870 = vadd.xlane.f32.xlu0 %v1869
    %v1871 = vpop.xlane.xlu0 %1870
    %v1872 = vsel %vm527, %v463, 0.0
    %1873 = vadd.xlane.f32.xlu0 %v1872
    %v1874 = vpop.xlane.xlu0 %1873
    %v1875 = vsel %vm527, %v464, 0.0
    %1876 = vadd.xlane.f32.xlu0 %v1875
    %v1877 = vpop.xlane.xlu0 %1876
    %v1878 = vsel %vm527, %v465, 0.0
    %1879 = vadd.xlane.f32.xlu0 %v1878
    %v1880 = vpop.xlane.xlu0 %1879
    %v1881 = vsel %vm527, %v466, 0.0
    %1882 = vadd.xlane.f32.xlu0 %v1881
    %v1883 = vpop.xlane.xlu0 %1882
    %v1884 = vsel %vm527, %v467, 0.0
    %1885 = vadd.xlane.f32.xlu0 %v1884
    %v1886 = vpop.xlane.xlu0 %1885
    %v1887 = vsel %vm527, %v468, 0.0
    %1888 = vadd.xlane.f32.xlu0 %v1887
    %v1889 = vpop.xlane.xlu0 %1888
    %v1890 = vsel %vm527, %v469, 0.0
    %1891 = vadd.xlane.f32.xlu0 %v1890
    %v1892 = vpop.xlane.xlu0 %1891
    %v1893 = vsel %vm527, %v470, 0.0
    %1894 = vadd.xlane.f32.xlu0 %v1893
    %v1895 = vpop.xlane.xlu0 %1894
    %v1896 = vsel %vm527, %v471, 0.0
    %1897 = vadd.xlane.f32.xlu0 %v1896
    %v1898 = vpop.xlane.xlu0 %1897
    %v1899 = vsel %vm527, %v472, 0.0
    %1900 = vadd.xlane.f32.xlu0 %v1899
    %v1901 = vpop.xlane.xlu0 %1900
    %v1902 = vsel %vm527, %v473, 0.0
    %1903 = vadd.xlane.f32.xlu0 %v1902
    %v1904 = vpop.xlane.xlu0 %1903
    %v1905 = vsel %vm527, %v474, 0.0
    %1906 = vadd.xlane.f32.xlu0 %v1905
    %v1907 = vpop.xlane.xlu0 %1906
    %v1908 = vsel %vm527, %v475, 0.0
    %1909 = vadd.xlane.f32.xlu0 %v1908
    %v1910 = vpop.xlane.xlu0 %1909
    %v1911 = vsel %vm527, %v476, 0.0
    %1912 = vadd.xlane.f32.xlu0 %v1911
    %v1913 = vpop.xlane.xlu0 %1912
    %v1914 = vsel %vm527, %v477, 0.0
    %1915 = vadd.xlane.f32.xlu0 %v1914
    %v1916 = vpop.xlane.xlu0 %1915
    %v1917 = vsel %vm527, %v478, 0.0
    %1918 = vadd.xlane.f32.xlu0 %v1917
    %v1919 = vpop.xlane.xlu0 %1918
    %v1920 = vsel %vm527, %v479, 0.0
    %1921 = vadd.xlane.f32.xlu0 %v1920
    %v1922 = vpop.xlane.xlu0 %1921
    %v1923 = vsel %vm527, %v480, 0.0
    %1924 = vadd.xlane.f32.xlu0 %v1923
    %v1925 = vpop.xlane.xlu0 %1924
    %v1926 = vsel %vm527, %v481, 0.0
    %1927 = vadd.xlane.f32.xlu0 %v1926
    %v1928 = vpop.xlane.xlu0 %1927
    %v1929 = vsel %vm527, %v482, 0.0
    %1930 = vadd.xlane.f32.xlu0 %v1929
    %v1931 = vpop.xlane.xlu0 %1930
    %v1932 = vsel %vm527, %v483, 0.0
    %1933 = vadd.xlane.f32.xlu0 %v1932
    %v1934 = vpop.xlane.xlu0 %1933
    %v1935 = vsel %vm527, %v484, 0.0
    %1936 = vadd.xlane.f32.xlu0 %v1935
    %v1937 = vpop.xlane.xlu0 %1936
    %v1938 = vsel %vm527, %v485, 0.0
    %1939 = vadd.xlane.f32.xlu0 %v1938
    %v1940 = vpop.xlane.xlu0 %1939
    %v1941 = vsel %vm527, %v486, 0.0
    %1942 = vadd.xlane.f32.xlu0 %v1941
    %v1943 = vpop.xlane.xlu0 %1942
    %v1944 = vsel %vm527, %v487, 0.0
    %1945 = vadd.xlane.f32.xlu0 %v1944
    %v1946 = vpop.xlane.xlu0 %1945
    %v1947 = vsel %vm527, %v488, 0.0
    %1948 = vadd.xlane.f32.xlu0 %v1947
    %v1949 = vpop.xlane.xlu0 %1948
    %v1950 = vsel %vm527, %v489, 0.0
    %1951 = vadd.xlane.f32.xlu0 %v1950
    %v1952 = vpop.xlane.xlu0 %1951
    %v1953 = vsel %vm527, %v490, 0.0
    %1954 = vadd.xlane.f32.xlu0 %v1953
    %v1955 = vpop.xlane.xlu0 %1954
    %v1956 = vsel %vm527, %v491, 0.0
    %1957 = vadd.xlane.f32.xlu0 %v1956
    %v1958 = vpop.xlane.xlu0 %1957
    %v1959 = vsel %vm527, %v492, 0.0
    %1960 = vadd.xlane.f32.xlu0 %v1959
    %v1961 = vpop.xlane.xlu0 %1960
    %v1962 = vsel %vm527, %v493, 0.0
    %1963 = vadd.xlane.f32.xlu0 %v1962
    %v1964 = vpop.xlane.xlu0 %1963
    %v1965 = vsel %vm527, %v494, 0.0
    %1966 = vadd.xlane.f32.xlu0 %v1965
    %v1967 = vpop.xlane.xlu0 %1966
    %v1968 = vsel %vm527, %v495, 0.0
    %1969 = vadd.xlane.f32.xlu0 %v1968
    %v1970 = vpop.xlane.xlu0 %1969
    %v1971 = vsel %vm527, %v496, 0.0
    %1972 = vadd.xlane.f32.xlu0 %v1971
    %v1973 = vpop.xlane.xlu0 %1972
    %v1974 = vsel %vm527, %v497, 0.0
    %1975 = vadd.xlane.f32.xlu0 %v1974
    %v1976 = vpop.xlane.xlu0 %1975
    %v1977 = vsel %vm527, %v498, 0.0
    %1978 = vadd.xlane.f32.xlu0 %v1977
    %v1979 = vpop.xlane.xlu0 %1978
    %v1980 = vsel %vm527, %v499, 0.0
    %1981 = vadd.xlane.f32.xlu0 %v1980
    %v1982 = vpop.xlane.xlu0 %1981
    %v1983 = vsel %vm527, %v500, 0.0
    %1984 = vadd.xlane.f32.xlu0 %v1983
    %v1985 = vpop.xlane.xlu0 %1984
    %v1986 = vsel %vm527, %v501, 0.0
    %1987 = vadd.xlane.f32.xlu0 %v1986
    %v1988 = vpop.xlane.xlu0 %1987
    %v1989 = vsel %vm527, %v502, 0.0
    %1990 = vadd.xlane.f32.xlu0 %v1989
    %v1991 = vpop.xlane.xlu0 %1990
    %v1992 = vsel %vm527, %v503, 0.0
    %1993 = vadd.xlane.f32.xlu0 %v1992
    %v1994 = vpop.xlane.xlu0 %1993
    %v1995 = vsel %vm527, %v504, 0.0
    %1996 = vadd.xlane.f32.xlu0 %v1995
    %v1997 = vpop.xlane.xlu0 %1996
    %v1998 = vsel %vm527, %v505, 0.0
    %1999 = vadd.xlane.f32.xlu0 %v1998
    %v2000 = vpop.xlane.xlu0 %1999
    %v2001 = vsel %vm527, %v506, 0.0
    %2002 = vadd.xlane.f32.xlu0 %v2001
    %v2003 = vpop.xlane.xlu0 %2002
    %v2004 = vsel %vm527, %v507, 0.0
    %2005 = vadd.xlane.f32.xlu0 %v2004
    %v2006 = vpop.xlane.xlu0 %2005
    %v2007 = vsel %vm527, %v508, 0.0
    %2008 = vadd.xlane.f32.xlu0 %v2007
    %v2009 = vpop.xlane.xlu0 %2008
    %v2010 = vsel %vm527, %v509, 0.0
    %2011 = vadd.xlane.f32.xlu0 %v2010
    %v2012 = vpop.xlane.xlu0 %2011
    %v2013 = vsel %vm527, %v510, 0.0
    %2014 = vadd.xlane.f32.xlu0 %v2013
    %v2015 = vpop.xlane.xlu0 %2014
    %v2016 = vsel %vm527, %v511, 0.0
    %2017 = vadd.xlane.f32.xlu0 %v2016
    %v2018 = vpop.xlane.xlu0 %2017
    %v2019 = vsel %vm527, %v512, 0.0
    %2020 = vadd.xlane.f32.xlu0 %v2019
    %v2021 = vpop.xlane.xlu0 %2020
    %v2022 = vsel %vm527, %v513, 0.0
    %2023 = vadd.xlane.f32.xlu0 %v2022
    %v2024 = vpop.xlane.xlu0 %2023
    %v2025 = vsel %vm527, %v514, 0.0
    %2026 = vadd.xlane.f32.xlu0 %v2025
    %v2027 = vpop.xlane.xlu0 %2026
    %v2028 = vsel %vm527, %v515, 0.0
    %2029 = vadd.xlane.f32.xlu0 %v2028
    %v2030 = vpop.xlane.xlu0 %2029
    %v2031 = vsel %vm527, %v516, 0.0
    %2032 = vadd.xlane.f32.xlu0 %v2031
    %v2033 = vpop.xlane.xlu0 %2032
    %v2034 = vsel %vm527, %v517, 0.0
    %2035 = vadd.xlane.f32.xlu0 %v2034
    %v2036 = vpop.xlane.xlu0 %2035
    %v2037 = vsel %vm527, %v518, 0.0
    %2038 = vadd.xlane.f32.xlu0 %v2037
    %v2039 = vpop.xlane.xlu0 %2038
    %v2040 = vsel %vm527, %v519, 0.0
    %2041 = vadd.xlane.f32.xlu0 %v2040
    %v2042 = vpop.xlane.xlu0 %2041
    %v2043 = vsel %vm527, %v520, 0.0
    %2044 = vadd.xlane.f32.xlu0 %v2043
    %v2045 = vpop.xlane.xlu0 %2044
    %v2046 = vsel %vm527, %v521, 0.0
    %2047 = vadd.xlane.f32.xlu0 %v2046
    %v2048 = vpop.xlane.xlu0 %2047
    %v2049 = vsel %vm527, %v522, 0.0
    %2050 = vadd.xlane.f32.xlu0 %v2049
    %v2051 = vpop.xlane.xlu0 %2050
    %v2052 = vsel %vm527, %v523, 0.0
    %2053 = vadd.xlane.f32.xlu0 %v2052
    %v2054 = vpop.xlane.xlu0 %2053
    %v2055 = vsel %vm527, %v524, 0.0
    %2056 = vadd.xlane.f32.xlu0 %v2055
    %v2057 = vpop.xlane.xlu0 %2056
    %v2058 = vsel %vm527, %v525, 0.0
    %2059 = vadd.xlane.f32.xlu0 %v2058
    %v2060 = vpop.xlane.xlu0 %2059
    %v2061 = vsel %vm527, %v526, 0.0
    %2062 = vadd.xlane.f32.xlu0 %v2061
    %v2063 = vpop.xlane.xlu0 %2062
    %v2064 = vld [vmem:[%s1] sm:$0xff]
    %v2065 = vld [vmem:[%s1 + $0x8] sm:$0xff]
    %v2066 = vld [vmem:[%s1 + $0x10] sm:$0xff]
    %v2067 = vld [vmem:[%s1 + $0x18] sm:$0xff]
    %v2068 = vld [vmem:[%s1 + $0x20] sm:$0xff]
    %v2069 = vld [vmem:[%s1 + $0x28] sm:$0xff]
    %v2070 = vld [vmem:[%s1 + $0x30] sm:$0xff]
    %v2071 = vld [vmem:[%s1 + $0x38] sm:$0xff]
    %v2072 = vld [vmem:[%s1 + $0x40] sm:$0xff]
    %v2073 = vld [vmem:[%s1 + $0x48] sm:$0xff]
    %v2074 = vld [vmem:[%s1 + $0x50] sm:$0xff]
    %v2075 = vld [vmem:[%s1 + $0x58] sm:$0xff]
    %v2076 = vld [vmem:[%s1 + $0x60] sm:$0xff]
    %v2077 = vld [vmem:[%s1 + $0x68] sm:$0xff]
    %v2078 = vld [vmem:[%s1 + $0x70] sm:$0xff]
    %v2079 = vld [vmem:[%s1 + $0x78] sm:$0xff]
    %v2080 = vld [vmem:[%s1 + $0x80] sm:$0xff]
    %v2081 = vld [vmem:[%s1 + $0x88] sm:$0xff]
    %v2082 = vld [vmem:[%s1 + $0x90] sm:$0xff]
    %v2083 = vld [vmem:[%s1 + $0x98] sm:$0xff]
    %v2084 = vld [vmem:[%s1 + $0xa0] sm:$0xff]
    %v2085 = vld [vmem:[%s1 + $0xa8] sm:$0xff]
    %v2086 = vld [vmem:[%s1 + $0xb0] sm:$0xff]
    %v2087 = vld [vmem:[%s1 + $0xb8] sm:$0xff]
    %v2088 = vld [vmem:[%s1 + $0xc0] sm:$0xff]
    %v2089 = vld [vmem:[%s1 + $0xc8] sm:$0xff]
    %v2090 = vld [vmem:[%s1 + $0xd0] sm:$0xff]
    %v2091 = vld [vmem:[%s1 + $0xd8] sm:$0xff]
    %v2092 = vld [vmem:[%s1 + $0xe0] sm:$0xff]
    %v2093 = vld [vmem:[%s1 + $0xe8] sm:$0xff]
    %v2094 = vld [vmem:[%s1 + $0xf0] sm:$0xff]
    %v2095 = vld [vmem:[%s1 + $0xf8] sm:$0xff]
    %v2096 = vld [vmem:[%s1 + $0x100] sm:$0xff]
    %v2097 = vld [vmem:[%s1 + $0x108] sm:$0xff]
    %v2098 = vld [vmem:[%s1 + $0x110] sm:$0xff]
    %v2099 = vld [vmem:[%s1 + $0x118] sm:$0xff]
    %v2100 = vld [vmem:[%s1 + $0x120] sm:$0xff]
    %v2101 = vld [vmem:[%s1 + $0x128] sm:$0xff]
    %v2102 = vld [vmem:[%s1 + $0x130] sm:$0xff]
    %v2103 = vld [vmem:[%s1 + $0x138] sm:$0xff]
    %v2104 = vld [vmem:[%s1 + $0x140] sm:$0xff]
    %v2105 = vld [vmem:[%s1 + $0x148] sm:$0xff]
    %v2106 = vld [vmem:[%s1 + $0x150] sm:$0xff]
    %v2107 = vld [vmem:[%s1 + $0x158] sm:$0xff]
    %v2108 = vld [vmem:[%s1 + $0x160] sm:$0xff]
    %v2109 = vld [vmem:[%s1 + $0x168] sm:$0xff]
    %v2110 = vld [vmem:[%s1 + $0x170] sm:$0xff]
    %v2111 = vld [vmem:[%s1 + $0x178] sm:$0xff]
    %v2112 = vld [vmem:[%s1 + $0x180] sm:$0xff]
    %v2113 = vld [vmem:[%s1 + $0x188] sm:$0xff]
    %v2114 = vld [vmem:[%s1 + $0x190] sm:$0xff]
    %v2115 = vld [vmem:[%s1 + $0x198] sm:$0xff]
    %v2116 = vld [vmem:[%s1 + $0x1a0] sm:$0xff]
    %v2117 = vld [vmem:[%s1 + $0x1a8] sm:$0xff]
    %v2118 = vld [vmem:[%s1 + $0x1b0] sm:$0xff]
    %v2119 = vld [vmem:[%s1 + $0x1b8] sm:$0xff]
    %v2120 = vld [vmem:[%s1 + $0x1c0] sm:$0xff]
    %v2121 = vld [vmem:[%s1 + $0x1c8] sm:$0xff]
    %v2122 = vld [vmem:[%s1 + $0x1d0] sm:$0xff]
    %v2123 = vld [vmem:[%s1 + $0x1d8] sm:$0xff]
    %v2124 = vld [vmem:[%s1 + $0x1e0] sm:$0xff]
    %v2125 = vld [vmem:[%s1 + $0x1e8] sm:$0xff]
    %v2126 = vld [vmem:[%s1 + $0x1f0] sm:$0xff]
    %v2127 = vld [vmem:[%s1 + $0x1f8] sm:$0xff]
    %v2128 = vld [vmem:[%s1 + $0x200] sm:$0xff]
    %v2129 = vld [vmem:[%s1 + $0x208] sm:$0xff]
    %v2130 = vld [vmem:[%s1 + $0x210] sm:$0xff]
    %v2131 = vld [vmem:[%s1 + $0x218] sm:$0xff]
    %v2132 = vld [vmem:[%s1 + $0x220] sm:$0xff]
    %v2133 = vld [vmem:[%s1 + $0x228] sm:$0xff]
    %v2134 = vld [vmem:[%s1 + $0x230] sm:$0xff]
    %v2135 = vld [vmem:[%s1 + $0x238] sm:$0xff]
    %v2136 = vld [vmem:[%s1 + $0x240] sm:$0xff]
    %v2137 = vld [vmem:[%s1 + $0x248] sm:$0xff]
    %v2138 = vld [vmem:[%s1 + $0x250] sm:$0xff]
    %v2139 = vld [vmem:[%s1 + $0x258] sm:$0xff]
    %v2140 = vld [vmem:[%s1 + $0x260] sm:$0xff]
    %v2141 = vld [vmem:[%s1 + $0x268] sm:$0xff]
    %v2142 = vld [vmem:[%s1 + $0x270] sm:$0xff]
    %v2143 = vld [vmem:[%s1 + $0x278] sm:$0xff]
    %v2144 = vld [vmem:[%s1 + $0x280] sm:$0xff]
    %v2145 = vld [vmem:[%s1 + $0x288] sm:$0xff]
    %v2146 = vld [vmem:[%s1 + $0x290] sm:$0xff]
    %v2147 = vld [vmem:[%s1 + $0x298] sm:$0xff]
    %v2148 = vld [vmem:[%s1 + $0x2a0] sm:$0xff]
    %v2149 = vld [vmem:[%s1 + $0x2a8] sm:$0xff]
    %v2150 = vld [vmem:[%s1 + $0x2b0] sm:$0xff]
    %v2151 = vld [vmem:[%s1 + $0x2b8] sm:$0xff]
    %v2152 = vld [vmem:[%s1 + $0x2c0] sm:$0xff]
    %v2153 = vld [vmem:[%s1 + $0x2c8] sm:$0xff]
    %v2154 = vld [vmem:[%s1 + $0x2d0] sm:$0xff]
    %v2155 = vld [vmem:[%s1 + $0x2d8] sm:$0xff]
    %v2156 = vld [vmem:[%s1 + $0x2e0] sm:$0xff]
    %v2157 = vld [vmem:[%s1 + $0x2e8] sm:$0xff]
    %v2158 = vld [vmem:[%s1 + $0x2f0] sm:$0xff]
    %v2159 = vld [vmem:[%s1 + $0x2f8] sm:$0xff]
    %v2160 = vld [vmem:[%s1 + $0x300] sm:$0xff]
    %v2161 = vld [vmem:[%s1 + $0x308] sm:$0xff]
    %v2162 = vld [vmem:[%s1 + $0x310] sm:$0xff]
    %v2163 = vld [vmem:[%s1 + $0x318] sm:$0xff]
    %v2164 = vld [vmem:[%s1 + $0x320] sm:$0xff]
    %v2165 = vld [vmem:[%s1 + $0x328] sm:$0xff]
    %v2166 = vld [vmem:[%s1 + $0x330] sm:$0xff]
    %v2167 = vld [vmem:[%s1 + $0x338] sm:$0xff]
    %v2168 = vld [vmem:[%s1 + $0x340] sm:$0xff]
    %v2169 = vld [vmem:[%s1 + $0x348] sm:$0xff]
    %v2170 = vld [vmem:[%s1 + $0x350] sm:$0xff]
    %v2171 = vld [vmem:[%s1 + $0x358] sm:$0xff]
    %v2172 = vld [vmem:[%s1 + $0x360] sm:$0xff]
    %v2173 = vld [vmem:[%s1 + $0x368] sm:$0xff]
    %v2174 = vld [vmem:[%s1 + $0x370] sm:$0xff]
    %v2175 = vld [vmem:[%s1 + $0x378] sm:$0xff]
    %v2176 = vld [vmem:[%s1 + $0x380] sm:$0xff]
    %v2177 = vld [vmem:[%s1 + $0x388] sm:$0xff]
    %v2178 = vld [vmem:[%s1 + $0x390] sm:$0xff]
    %v2179 = vld [vmem:[%s1 + $0x398] sm:$0xff]
    %v2180 = vld [vmem:[%s1 + $0x3a0] sm:$0xff]
    %v2181 = vld [vmem:[%s1 + $0x3a8] sm:$0xff]
    %v2182 = vld [vmem:[%s1 + $0x3b0] sm:$0xff]
    %v2183 = vld [vmem:[%s1 + $0x3b8] sm:$0xff]
    %v2184 = vld [vmem:[%s1 + $0x3c0] sm:$0xff]
    %v2185 = vld [vmem:[%s1 + $0x3c8] sm:$0xff]
    %v2186 = vld [vmem:[%s1 + $0x3d0] sm:$0xff]
    %v2187 = vld [vmem:[%s1 + $0x3d8] sm:$0xff]
    %v2188 = vld [vmem:[%s1 + $0x3e0] sm:$0xff]
    %v2189 = vld [vmem:[%s1 + $0x3e8] sm:$0xff]
    %v2190 = vld [vmem:[%s1 + $0x3f0] sm:$0xff]
    %v2191 = vld [vmem:[%s1 + $0x3f8] sm:$0xff]
    %v2192 = vld [vmem:[%s1 + $0x400] sm:$0xff]
    %v2193 = vld [vmem:[%s1 + $0x408] sm:$0xff]
    %v2194 = vld [vmem:[%s1 + $0x410] sm:$0xff]
    %v2195 = vld [vmem:[%s1 + $0x418] sm:$0xff]
    %v2196 = vld [vmem:[%s1 + $0x420] sm:$0xff]
    %v2197 = vld [vmem:[%s1 + $0x428] sm:$0xff]
    %v2198 = vld [vmem:[%s1 + $0x430] sm:$0xff]
    %v2199 = vld [vmem:[%s1 + $0x438] sm:$0xff]
    %v2200 = vld [vmem:[%s1 + $0x440] sm:$0xff]
    %v2201 = vld [vmem:[%s1 + $0x448] sm:$0xff]
    %v2202 = vld [vmem:[%s1 + $0x450] sm:$0xff]
    %v2203 = vld [vmem:[%s1 + $0x458] sm:$0xff]
    %v2204 = vld [vmem:[%s1 + $0x460] sm:$0xff]
    %v2205 = vld [vmem:[%s1 + $0x468] sm:$0xff]
    %v2206 = vld [vmem:[%s1 + $0x470] sm:$0xff]
    %v2207 = vld [vmem:[%s1 + $0x478] sm:$0xff]
    %v2208 = vld [vmem:[%s1 + $0x480] sm:$0xff]
    %v2209 = vld [vmem:[%s1 + $0x488] sm:$0xff]
    %v2210 = vld [vmem:[%s1 + $0x490] sm:$0xff]
    %v2211 = vld [vmem:[%s1 + $0x498] sm:$0xff]
    %v2212 = vld [vmem:[%s1 + $0x4a0] sm:$0xff]
    %v2213 = vld [vmem:[%s1 + $0x4a8] sm:$0xff]
    %v2214 = vld [vmem:[%s1 + $0x4b0] sm:$0xff]
    %v2215 = vld [vmem:[%s1 + $0x4b8] sm:$0xff]
    %v2216 = vld [vmem:[%s1 + $0x4c0] sm:$0xff]
    %v2217 = vld [vmem:[%s1 + $0x4c8] sm:$0xff]
    %v2218 = vld [vmem:[%s1 + $0x4d0] sm:$0xff]
    %v2219 = vld [vmem:[%s1 + $0x4d8] sm:$0xff]
    %v2220 = vld [vmem:[%s1 + $0x4e0] sm:$0xff]
    %v2221 = vld [vmem:[%s1 + $0x4e8] sm:$0xff]
    %v2222 = vld [vmem:[%s1 + $0x4f0] sm:$0xff]
    %v2223 = vld [vmem:[%s1 + $0x4f8] sm:$0xff]
    %v2224 = vld [vmem:[%s1 + $0x500] sm:$0xff]
    %v2225 = vld [vmem:[%s1 + $0x508] sm:$0xff]
    %v2226 = vld [vmem:[%s1 + $0x510] sm:$0xff]
    %v2227 = vld [vmem:[%s1 + $0x518] sm:$0xff]
    %v2228 = vld [vmem:[%s1 + $0x520] sm:$0xff]
    %v2229 = vld [vmem:[%s1 + $0x528] sm:$0xff]
    %v2230 = vld [vmem:[%s1 + $0x530] sm:$0xff]
    %v2231 = vld [vmem:[%s1 + $0x538] sm:$0xff]
    %v2232 = vld [vmem:[%s1 + $0x540] sm:$0xff]
    %v2233 = vld [vmem:[%s1 + $0x548] sm:$0xff]
    %v2234 = vld [vmem:[%s1 + $0x550] sm:$0xff]
    %v2235 = vld [vmem:[%s1 + $0x558] sm:$0xff]
    %v2236 = vld [vmem:[%s1 + $0x560] sm:$0xff]
    %v2237 = vld [vmem:[%s1 + $0x568] sm:$0xff]
    %v2238 = vld [vmem:[%s1 + $0x570] sm:$0xff]
    %v2239 = vld [vmem:[%s1 + $0x578] sm:$0xff]
    %v2240 = vld [vmem:[%s1 + $0x580] sm:$0xff]
    %v2241 = vld [vmem:[%s1 + $0x588] sm:$0xff]
    %v2242 = vld [vmem:[%s1 + $0x590] sm:$0xff]
    %v2243 = vld [vmem:[%s1 + $0x598] sm:$0xff]
    %v2244 = vld [vmem:[%s1 + $0x5a0] sm:$0xff]
    %v2245 = vld [vmem:[%s1 + $0x5a8] sm:$0xff]
    %v2246 = vld [vmem:[%s1 + $0x5b0] sm:$0xff]
    %v2247 = vld [vmem:[%s1 + $0x5b8] sm:$0xff]
    %v2248 = vld [vmem:[%s1 + $0x5c0] sm:$0xff]
    %v2249 = vld [vmem:[%s1 + $0x5c8] sm:$0xff]
    %v2250 = vld [vmem:[%s1 + $0x5d0] sm:$0xff]
    %v2251 = vld [vmem:[%s1 + $0x5d8] sm:$0xff]
    %v2252 = vld [vmem:[%s1 + $0x5e0] sm:$0xff]
    %v2253 = vld [vmem:[%s1 + $0x5e8] sm:$0xff]
    %v2254 = vld [vmem:[%s1 + $0x5f0] sm:$0xff]
    %v2255 = vld [vmem:[%s1 + $0x5f8] sm:$0xff]
    %v2256 = vld [vmem:[%s1 + $0x600] sm:$0xff]
    %v2257 = vld [vmem:[%s1 + $0x608] sm:$0xff]
    %v2258 = vld [vmem:[%s1 + $0x610] sm:$0xff]
    %v2259 = vld [vmem:[%s1 + $0x618] sm:$0xff]
    %v2260 = vld [vmem:[%s1 + $0x620] sm:$0xff]
    %v2261 = vld [vmem:[%s1 + $0x628] sm:$0xff]
    %v2262 = vld [vmem:[%s1 + $0x630] sm:$0xff]
    %v2263 = vld [vmem:[%s1 + $0x638] sm:$0xff]
    %v2264 = vld [vmem:[%s1 + $0x640] sm:$0xff]
    %v2265 = vld [vmem:[%s1 + $0x648] sm:$0xff]
    %v2266 = vld [vmem:[%s1 + $0x650] sm:$0xff]
    %v2267 = vld [vmem:[%s1 + $0x658] sm:$0xff]
    %v2268 = vld [vmem:[%s1 + $0x660] sm:$0xff]
    %v2269 = vld [vmem:[%s1 + $0x668] sm:$0xff]
    %v2270 = vld [vmem:[%s1 + $0x670] sm:$0xff]
    %v2271 = vld [vmem:[%s1 + $0x678] sm:$0xff]
    %v2272 = vld [vmem:[%s1 + $0x680] sm:$0xff]
    %v2273 = vld [vmem:[%s1 + $0x688] sm:$0xff]
    %v2274 = vld [vmem:[%s1 + $0x690] sm:$0xff]
    %v2275 = vld [vmem:[%s1 + $0x698] sm:$0xff]
    %v2276 = vld [vmem:[%s1 + $0x6a0] sm:$0xff]
    %v2277 = vld [vmem:[%s1 + $0x6a8] sm:$0xff]
    %v2278 = vld [vmem:[%s1 + $0x6b0] sm:$0xff]
    %v2279 = vld [vmem:[%s1 + $0x6b8] sm:$0xff]
    %v2280 = vld [vmem:[%s1 + $0x6c0] sm:$0xff]
    %v2281 = vld [vmem:[%s1 + $0x6c8] sm:$0xff]
    %v2282 = vld [vmem:[%s1 + $0x6d0] sm:$0xff]
    %v2283 = vld [vmem:[%s1 + $0x6d8] sm:$0xff]
    %v2284 = vld [vmem:[%s1 + $0x6e0] sm:$0xff]
    %v2285 = vld [vmem:[%s1 + $0x6e8] sm:$0xff]
    %v2286 = vld [vmem:[%s1 + $0x6f0] sm:$0xff]
    %v2287 = vld [vmem:[%s1 + $0x6f8] sm:$0xff]
    %v2288 = vld [vmem:[%s1 + $0x700] sm:$0xff]
    %v2289 = vld [vmem:[%s1 + $0x708] sm:$0xff]
    %v2290 = vld [vmem:[%s1 + $0x710] sm:$0xff]
    %v2291 = vld [vmem:[%s1 + $0x718] sm:$0xff]
    %v2292 = vld [vmem:[%s1 + $0x720] sm:$0xff]
    %v2293 = vld [vmem:[%s1 + $0x728] sm:$0xff]
    %v2294 = vld [vmem:[%s1 + $0x730] sm:$0xff]
    %v2295 = vld [vmem:[%s1 + $0x738] sm:$0xff]
    %v2296 = vld [vmem:[%s1 + $0x740] sm:$0xff]
    %v2297 = vld [vmem:[%s1 + $0x748] sm:$0xff]
    %v2298 = vld [vmem:[%s1 + $0x750] sm:$0xff]
    %v2299 = vld [vmem:[%s1 + $0x758] sm:$0xff]
    %v2300 = vld [vmem:[%s1 + $0x760] sm:$0xff]
    %v2301 = vld [vmem:[%s1 + $0x768] sm:$0xff]
    %v2302 = vld [vmem:[%s1 + $0x770] sm:$0xff]
    %v2303 = vld [vmem:[%s1 + $0x778] sm:$0xff]
    %v2304 = vld [vmem:[%s1 + $0x780] sm:$0xff]
    %v2305 = vld [vmem:[%s1 + $0x788] sm:$0xff]
    %v2306 = vld [vmem:[%s1 + $0x790] sm:$0xff]
    %v2307 = vld [vmem:[%s1 + $0x798] sm:$0xff]
    %v2308 = vld [vmem:[%s1 + $0x7a0] sm:$0xff]
    %v2309 = vld [vmem:[%s1 + $0x7a8] sm:$0xff]
    %v2310 = vld [vmem:[%s1 + $0x7b0] sm:$0xff]
    %v2311 = vld [vmem:[%s1 + $0x7b8] sm:$0xff]
    %v2312 = vld [vmem:[%s1 + $0x7c0] sm:$0xff]
    %v2313 = vld [vmem:[%s1 + $0x7c8] sm:$0xff]
    %v2314 = vld [vmem:[%s1 + $0x7d0] sm:$0xff]
    %v2315 = vld [vmem:[%s1 + $0x7d8] sm:$0xff]
    %v2316 = vld [vmem:[%s1 + $0x7e0] sm:$0xff]
    %v2317 = vld [vmem:[%s1 + $0x7e8] sm:$0xff]
    %v2318 = vld [vmem:[%s1 + $0x7f0] sm:$0xff]
    %v2319 = vld [vmem:[%s1 + $0x7f8] sm:$0xff]
    %v2320 = vld [vmem:[%s2] sm:$0x1]
    %v2322 = vperm.slane %v2320, 0
    %v2836 = vlaneseq
    %v2837 = vand.u32 %v2836, 127
    %v2838 = vperm.slane %v530, %v2837
    %v2839 = vadd.s32 %v2837, 4294967288
    %v2840 = vperm.slane %v533, %v2839
    %vm2841 = vcmask 130112
    %v2842 = vsel %vm2841, %v2840, %v2838
    %v2843 = vadd.s32 %v2837, 4294967280
    %v2844 = vperm.slane %v536, %v2843
    %vm2845 = vcmask 195712
    %v2846 = vsel %vm2845, %v2844, %v2842
    %v2847 = vadd.s32 %v2837, 4294967272
    %v2848 = vperm.slane %v539, %v2847
    %vm2849 = vcmask 261312
    %v2850 = vsel %vm2849, %v2848, %v2846
    %v2851 = vadd.s32 %v2837, 4294967264
    %v2852 = vperm.slane %v542, %v2851
    %vm2853 = vcmask 326912
    %v2854 = vsel %vm2853, %v2852, %v2850
    %v2855 = vadd.s32 %v2837, 4294967256
    %v2856 = vperm.slane %v545, %v2855
    %vm2857 = vcmask 392512
    %v2858 = vsel %vm2857, %v2856, %v2854
    %v2859 = vadd.s32 %v2837, 4294967248
    %v2860 = vperm.slane %v548, %v2859
    %vm2861 = vcmask 458112
    %v2862 = vsel %vm2861, %v2860, %v2858
    %v2863 = vadd.s32 %v2837, 4294967240
    %v2864 = vperm.slane %v551, %v2863
    %vm2865 = vcmask 523712
    %v2866 = vsel %vm2865, %v2864, %v2862
    %v2867 = vadd.s32 %v2837, 4294967232
    %v2868 = vperm.slane %v554, %v2867
    %vm2869 = vcmask 589312
    %v2870 = vsel %vm2869, %v2868, %v2866
    %v2871 = vadd.s32 %v2837, 4294967224
    %v2872 = vperm.slane %v557, %v2871
    %vm2873 = vcmask 654912
    %v2874 = vsel %vm2873, %v2872, %v2870
    %v2875 = vadd.s32 %v2837, 4294967216
    %v2876 = vperm.slane %v560, %v2875
    %vm2877 = vcmask 720512
    %v2878 = vsel %vm2877, %v2876, %v2874
    %v2879 = vadd.s32 %v2837, 4294967208
    %v2880 = vperm.slane %v563, %v2879
    %vm2881 = vcmask 786112
    %v2882 = vsel %vm2881, %v2880, %v2878
    %v2883 = vadd.s32 %v2837, 4294967200
    %v2884 = vperm.slane %v566, %v2883
    %vm2885 = vcmask 851712
    %v2886 = vsel %vm2885, %v2884, %v2882
    %v2887 = vadd.s32 %v2837, 4294967192
    %v2888 = vperm.slane %v569, %v2887
    %vm2889 = vcmask 917312
    %v2890 = vsel %vm2889, %v2888, %v2886
    %v2891 = vadd.s32 %v2837, 4294967184
    %v2892 = vperm.slane %v572, %v2891
    %vm2893 = vcmask 982912
    %v2894 = vsel %vm2893, %v2892, %v2890
    %v2895 = vadd.s32 %v2837, 4294967176
    %v2896 = vperm.slane %v575, %v2895
    %vm2897 = vcmask 1048512
    %v2898 = vsel %vm2897, %v2896, %v2894
    %v2899 = vperm.slane %v578, %v2837
    %v2900 = vperm.slane %v581, %v2839
    %v2901 = vsel %vm2841, %v2900, %v2899
    %v2902 = vperm.slane %v584, %v2843
    %v2903 = vsel %vm2845, %v2902, %v2901
    %v2904 = vperm.slane %v587, %v2847
    %v2905 = vsel %vm2849, %v2904, %v2903
    %v2906 = vperm.slane %v590, %v2851
    %v2907 = vsel %vm2853, %v2906, %v2905
    %v2908 = vperm.slane %v593, %v2855
    %v2909 = vsel %vm2857, %v2908, %v2907
    %v2910 = vperm.slane %v596, %v2859
    %v2911 = vsel %vm2861, %v2910, %v2909
    %v2912 = vperm.slane %v599, %v2863
    %v2913 = vsel %vm2865, %v2912, %v2911
    %v2914 = vperm.slane %v602, %v2867
    %v2915 = vsel %vm2869, %v2914, %v2913
    %v2916 = vperm.slane %v605, %v2871
    %v2917 = vsel %vm2873, %v2916, %v2915
    %v2918 = vperm.slane %v608, %v2875
    %v2919 = vsel %vm2877, %v2918, %v2917
    %v2920 = vperm.slane %v611, %v2879
    %v2921 = vsel %vm2881, %v2920, %v2919
    %v2922 = vperm.slane %v614, %v2883
    %v2923 = vsel %vm2885, %v2922, %v2921
    %v2924 = vperm.slane %v617, %v2887
    %v2925 = vsel %vm2889, %v2924, %v2923
    %v2926 = vperm.slane %v620, %v2891
    %v2927 = vsel %vm2893, %v2926, %v2925
    %v2928 = vperm.slane %v623, %v2895
    %v2929 = vsel %vm2897, %v2928, %v2927
    %v2930 = vperm.slane %v626, %v2837
    %v2931 = vperm.slane %v629, %v2839
    %v2932 = vsel %vm2841, %v2931, %v2930
    %v2933 = vperm.slane %v632, %v2843
    %v2934 = vsel %vm2845, %v2933, %v2932
    %v2935 = vperm.slane %v635, %v2847
    %v2936 = vsel %vm2849, %v2935, %v2934
    %v2937 = vperm.slane %v638, %v2851
    %v2938 = vsel %vm2853, %v2937, %v2936
    %v2939 = vperm.slane %v641, %v2855
    %v2940 = vsel %vm2857, %v2939, %v2938
    %v2941 = vperm.slane %v644, %v2859
    %v2942 = vsel %vm2861, %v2941, %v2940
    %v2943 = vperm.slane %v647, %v2863
    %v2944 = vsel %vm2865, %v2943, %v2942
    %v2945 = vperm.slane %v650, %v2867
    %v2946 = vsel %vm2869, %v2945, %v2944
    %v2947 = vperm.slane %v653, %v2871
    %v2948 = vsel %vm2873, %v2947, %v2946
    %v2949 = vperm.slane %v656, %v2875
    %v2950 = vsel %vm2877, %v2949, %v2948
    %v2951 = vperm.slane %v659, %v2879
    %v2952 = vsel %vm2881, %v2951, %v2950
    %v2953 = vperm.slane %v662, %v2883
    %v2954 = vsel %vm2885, %v2953, %v2952
    %v2955 = vperm.slane %v665, %v2887
    %v2956 = vsel %vm2889, %v2955, %v2954
    %v2957 = vperm.slane %v668, %v2891
    %v2958 = vsel %vm2893, %v2957, %v2956
    %v2959 = vperm.slane %v671, %v2895
    %v2960 = vsel %vm2897, %v2959, %v2958
    %v2961 = vperm.slane %v674, %v2837
    %v2962 = vperm.slane %v677, %v2839
    %v2963 = vsel %vm2841, %v2962, %v2961
    %v2964 = vperm.slane %v680, %v2843
    %v2965 = vsel %vm2845, %v2964, %v2963
    %v2966 = vperm.slane %v683, %v2847
    %v2967 = vsel %vm2849, %v2966, %v2965
    %v2968 = vperm.slane %v686, %v2851
    %v2969 = vsel %vm2853, %v2968, %v2967
    %v2970 = vperm.slane %v689, %v2855
    %v2971 = vsel %vm2857, %v2970, %v2969
    %v2972 = vperm.slane %v692, %v2859
    %v2973 = vsel %vm2861, %v2972, %v2971
    %v2974 = vperm.slane %v695, %v2863
    %v2975 = vsel %vm2865, %v2974, %v2973
    %v2976 = vperm.slane %v698, %v2867
    %v2977 = vsel %vm2869, %v2976, %v2975
    %v2978 = vperm.slane %v701, %v2871
    %v2979 = vsel %vm2873, %v2978, %v2977
    %v2980 = vperm.slane %v704, %v2875
    %v2981 = vsel %vm2877, %v2980, %v2979
    %v2982 = vperm.slane %v707, %v2879
    %v2983 = vsel %vm2881, %v2982, %v2981
    %v2984 = vperm.slane %v710, %v2883
    %v2985 = vsel %vm2885, %v2984, %v2983
    %v2986 = vperm.slane %v713, %v2887
    %v2987 = vsel %vm2889, %v2986, %v2985
    %v2988 = vperm.slane %v716, %v2891
    %v2989 = vsel %vm2893, %v2988, %v2987
    %v2990 = vperm.slane %v719, %v2895
    %v2991 = vsel %vm2897, %v2990, %v2989
    %v2992 = vperm.slane %v722, %v2837
    %v2993 = vperm.slane %v725, %v2839
    %v2994 = vsel %vm2841, %v2993, %v2992
    %v2995 = vperm.slane %v728, %v2843
    %v2996 = vsel %vm2845, %v2995, %v2994
    %v2997 = vperm.slane %v731, %v2847
    %v2998 = vsel %vm2849, %v2997, %v2996
    %v2999 = vperm.slane %v734, %v2851
    %v3000 = vsel %vm2853, %v2999, %v2998
    %v3001 = vperm.slane %v737, %v2855
    %v3002 = vsel %vm2857, %v3001, %v3000
    %v3003 = vperm.slane %v740, %v2859
    %v3004 = vsel %vm2861, %v3003, %v3002
    %v3005 = vperm.slane %v743, %v2863
    %v3006 = vsel %vm2865, %v3005, %v3004
    %v3007 = vperm.slane %v746, %v2867
    %v3008 = vsel %vm2869, %v3007, %v3006
    %v3009 = vperm.slane %v749, %v2871
    %v3010 = vsel %vm2873, %v3009, %v3008
    %v3011 = vperm.slane %v752, %v2875
    %v3012 = vsel %vm2877, %v3011, %v3010
    %v3013 = vperm.slane %v755, %v2879
    %v3014 = vsel %vm2881, %v3013, %v3012
    %v3015 = vperm.slane %v758, %v2883
    %v3016 = vsel %vm2885, %v3015, %v3014
    %v3017 = vperm.slane %v761, %v2887
    %v3018 = vsel %vm2889, %v3017, %v3016
    %v3019 = vperm.slane %v764, %v2891
    %v3020 = vsel %vm2893, %v3019, %v3018
    %v3021 = vperm.slane %v767, %v2895
    %v3022 = vsel %vm2897, %v3021, %v3020
    %v3023 = vperm.slane %v770, %v2837
    %v3024 = vperm.slane %v773, %v2839
    %v3025 = vsel %vm2841, %v3024, %v3023
    %v3026 = vperm.slane %v776, %v2843
    %v3027 = vsel %vm2845, %v3026, %v3025
    %v3028 = vperm.slane %v779, %v2847
    %v3029 = vsel %vm2849, %v3028, %v3027
    %v3030 = vperm.slane %v782, %v2851
    %v3031 = vsel %vm2853, %v3030, %v3029
    %v3032 = vperm.slane %v785, %v2855
    %v3033 = vsel %vm2857, %v3032, %v3031
    %v3034 = vperm.slane %v788, %v2859
    %v3035 = vsel %vm2861, %v3034, %v3033
    %v3036 = vperm.slane %v791, %v2863
    %v3037 = vsel %vm2865, %v3036, %v3035
    %v3038 = vperm.slane %v794, %v2867
    %v3039 = vsel %vm2869, %v3038, %v3037
    %v3040 = vperm.slane %v797, %v2871
    %v3041 = vsel %vm2873, %v3040, %v3039
    %v3042 = vperm.slane %v800, %v2875
    %v3043 = vsel %vm2877, %v3042, %v3041
    %v3044 = vperm.slane %v803, %v2879
    %v3045 = vsel %vm2881, %v3044, %v3043
    %v3046 = vperm.slane %v806, %v2883
    %v3047 = vsel %vm2885, %v3046, %v3045
    %v3048 = vperm.slane %v809, %v2887
    %v3049 = vsel %vm2889, %v3048, %v3047
    %v3050 = vperm.slane %v812, %v2891
    %v3051 = vsel %vm2893, %v3050, %v3049
    %v3052 = vperm.slane %v815, %v2895
    %v3053 = vsel %vm2897, %v3052, %v3051
    %v3054 = vperm.slane %v818, %v2837
    %v3055 = vperm.slane %v821, %v2839
    %v3056 = vsel %vm2841, %v3055, %v3054
    %v3057 = vperm.slane %v824, %v2843
    %v3058 = vsel %vm2845, %v3057, %v3056
    %v3059 = vperm.slane %v827, %v2847
    %v3060 = vsel %vm2849, %v3059, %v3058
    %v3061 = vperm.slane %v830, %v2851
    %v3062 = vsel %vm2853, %v3061, %v3060
    %v3063 = vperm.slane %v833, %v2855
    %v3064 = vsel %vm2857, %v3063, %v3062
    %v3065 = vperm.slane %v836, %v2859
    %v3066 = vsel %vm2861, %v3065, %v3064
    %v3067 = vperm.slane %v839, %v2863
    %v3068 = vsel %vm2865, %v3067, %v3066
    %v3069 = vperm.slane %v842, %v2867
    %v3070 = vsel %vm2869, %v3069, %v3068
    %v3071 = vperm.slane %v845, %v2871
    %v3072 = vsel %vm2873, %v3071, %v3070
    %v3073 = vperm.slane %v848, %v2875
    %v3074 = vsel %vm2877, %v3073, %v3072
    %v3075 = vperm.slane %v851, %v2879
    %v3076 = vsel %vm2881, %v3075, %v3074
    %v3077 = vperm.slane %v854, %v2883
    %v3078 = vsel %vm2885, %v3077, %v3076
    %v3079 = vperm.slane %v857, %v2887
    %v3080 = vsel %vm2889, %v3079, %v3078
    %v3081 = vperm.slane %v860, %v2891
    %v3082 = vsel %vm2893, %v3081, %v3080
    %v3083 = vperm.slane %v863, %v2895
    %v3084 = vsel %vm2897, %v3083, %v3082
    %v3085 = vperm.slane %v866, %v2837
    %v3086 = vperm.slane %v869, %v2839
    %v3087 = vsel %vm2841, %v3086, %v3085
    %v3088 = vperm.slane %v872, %v2843
    %v3089 = vsel %vm2845, %v3088, %v3087
    %v3090 = vperm.slane %v875, %v2847
    %v3091 = vsel %vm2849, %v3090, %v3089
    %v3092 = vperm.slane %v878, %v2851
    %v3093 = vsel %vm2853, %v3092, %v3091
    %v3094 = vperm.slane %v881, %v2855
    %v3095 = vsel %vm2857, %v3094, %v3093
    %v3096 = vperm.slane %v884, %v2859
    %v3097 = vsel %vm2861, %v3096, %v3095
    %v3098 = vperm.slane %v887, %v2863
    %v3099 = vsel %vm2865, %v3098, %v3097
    %v3100 = vperm.slane %v890, %v2867
    %v3101 = vsel %vm2869, %v3100, %v3099
    %v3102 = vperm.slane %v893, %v2871
    %v3103 = vsel %vm2873, %v3102, %v3101
    %v3104 = vperm.slane %v896, %v2875
    %v3105 = vsel %vm2877, %v3104, %v3103
    %v3106 = vperm.slane %v899, %v2879
    %v3107 = vsel %vm2881, %v3106, %v3105
    %v3108 = vperm.slane %v902, %v2883
    %v3109 = vsel %vm2885, %v3108, %v3107
    %v3110 = vperm.slane %v905, %v2887
    %v3111 = vsel %vm2889, %v3110, %v3109
    %v3112 = vperm.slane %v908, %v2891
    %v3113 = vsel %vm2893, %v3112, %v3111
    %v3114 = vperm.slane %v911, %v2895
    %v3115 = vsel %vm2897, %v3114, %v3113
    %v3116 = vperm.slane %v914, %v2837
    %v3117 = vperm.slane %v917, %v2839
    %v3118 = vsel %vm2841, %v3117, %v3116
    %v3119 = vperm.slane %v920, %v2843
    %v3120 = vsel %vm2845, %v3119, %v3118
    %v3121 = vperm.slane %v923, %v2847
    %v3122 = vsel %vm2849, %v3121, %v3120
    %v3123 = vperm.slane %v926, %v2851
    %v3124 = vsel %vm2853, %v3123, %v3122
    %v3125 = vperm.slane %v929, %v2855
    %v3126 = vsel %vm2857, %v3125, %v3124
    %v3127 = vperm.slane %v932, %v2859
    %v3128 = vsel %vm2861, %v3127, %v3126
    %v3129 = vperm.slane %v935, %v2863
    %v3130 = vsel %vm2865, %v3129, %v3128
    %v3131 = vperm.slane %v938, %v2867
    %v3132 = vsel %vm2869, %v3131, %v3130
    %v3133 = vperm.slane %v941, %v2871
    %v3134 = vsel %vm2873, %v3133, %v3132
    %v3135 = vperm.slane %v944, %v2875
    %v3136 = vsel %vm2877, %v3135, %v3134
    %v3137 = vperm.slane %v947, %v2879
    %v3138 = vsel %vm2881, %v3137, %v3136
    %v3139 = vperm.slane %v950, %v2883
    %v3140 = vsel %vm2885, %v3139, %v3138
    %v3141 = vperm.slane %v953, %v2887
    %v3142 = vsel %vm2889, %v3141, %v3140
    %v3143 = vperm.slane %v956, %v2891
    %v3144 = vsel %vm2893, %v3143, %v3142
    %v3145 = vperm.slane %v959, %v2895
    %v3146 = vsel %vm2897, %v3145, %v3144
    %v3147 = vperm.slane %v962, %v2837
    %v3148 = vperm.slane %v965, %v2839
    %v3149 = vsel %vm2841, %v3148, %v3147
    %v3150 = vperm.slane %v968, %v2843
    %v3151 = vsel %vm2845, %v3150, %v3149
    %v3152 = vperm.slane %v971, %v2847
    %v3153 = vsel %vm2849, %v3152, %v3151
    %v3154 = vperm.slane %v974, %v2851
    %v3155 = vsel %vm2853, %v3154, %v3153
    %v3156 = vperm.slane %v977, %v2855
    %v3157 = vsel %vm2857, %v3156, %v3155
    %v3158 = vperm.slane %v980, %v2859
    %v3159 = vsel %vm2861, %v3158, %v3157
    %v3160 = vperm.slane %v983, %v2863
    %v3161 = vsel %vm2865, %v3160, %v3159
    %v3162 = vperm.slane %v986, %v2867
    %v3163 = vsel %vm2869, %v3162, %v3161
    %v3164 = vperm.slane %v989, %v2871
    %v3165 = vsel %vm2873, %v3164, %v3163
    %v3166 = vperm.slane %v992, %v2875
    %v3167 = vsel %vm2877, %v3166, %v3165
    %v3168 = vperm.slane %v995, %v2879
    %v3169 = vsel %vm2881, %v3168, %v3167
    %v3170 = vperm.slane %v998, %v2883
    %v3171 = vsel %vm2885, %v3170, %v3169
    %v3172 = vperm.slane %v1001, %v2887
    %v3173 = vsel %vm2889, %v3172, %v3171
    %v3174 = vperm.slane %v1004, %v2891
    %v3175 = vsel %vm2893, %v3174, %v3173
    %v3176 = vperm.slane %v1007, %v2895
    %v3177 = vsel %vm2897, %v3176, %v3175
    %v3178 = vperm.slane %v1010, %v2837
    %v3179 = vperm.slane %v1013, %v2839
    %v3180 = vsel %vm2841, %v3179, %v3178
    %v3181 = vperm.slane %v1016, %v2843
    %v3182 = vsel %vm2845, %v3181, %v3180
    %v3183 = vperm.slane %v1019, %v2847
    %v3184 = vsel %vm2849, %v3183, %v3182
    %v3185 = vperm.slane %v1022, %v2851
    %v3186 = vsel %vm2853, %v3185, %v3184
    %v3187 = vperm.slane %v1025, %v2855
    %v3188 = vsel %vm2857, %v3187, %v3186
    %v3189 = vperm.slane %v1028, %v2859
    %v3190 = vsel %vm2861, %v3189, %v3188
    %v3191 = vperm.slane %v1031, %v2863
    %v3192 = vsel %vm2865, %v3191, %v3190
    %v3193 = vperm.slane %v1034, %v2867
    %v3194 = vsel %vm2869, %v3193, %v3192
    %v3195 = vperm.slane %v1037, %v2871
    %v3196 = vsel %vm2873, %v3195, %v3194
    %v3197 = vperm.slane %v1040, %v2875
    %v3198 = vsel %vm2877, %v3197, %v3196
    %v3199 = vperm.slane %v1043, %v2879
    %v3200 = vsel %vm2881, %v3199, %v3198
    %v3201 = vperm.slane %v1046, %v2883
    %v3202 = vsel %vm2885, %v3201, %v3200
    %v3203 = vperm.slane %v1049, %v2887
    %v3204 = vsel %vm2889, %v3203, %v3202
    %v3205 = vperm.slane %v1052, %v2891
    %v3206 = vsel %vm2893, %v3205, %v3204
    %v3207 = vperm.slane %v1055, %v2895
    %v3208 = vsel %vm2897, %v3207, %v3206
    %v3209 = vperm.slane %v1058, %v2837
    %v3210 = vperm.slane %v1061, %v2839
    %v3211 = vsel %vm2841, %v3210, %v3209
    %v3212 = vperm.slane %v1064, %v2843
    %v3213 = vsel %vm2845, %v3212, %v3211
    %v3214 = vperm.slane %v1067, %v2847
    %v3215 = vsel %vm2849, %v3214, %v3213
    %v3216 = vperm.slane %v1070, %v2851
    %v3217 = vsel %vm2853, %v3216, %v3215
    %v3218 = vperm.slane %v1073, %v2855
    %v3219 = vsel %vm2857, %v3218, %v3217
    %v3220 = vperm.slane %v1076, %v2859
    %v3221 = vsel %vm2861, %v3220, %v3219
    %v3222 = vperm.slane %v1079, %v2863
    %v3223 = vsel %vm2865, %v3222, %v3221
    %v3224 = vperm.slane %v1082, %v2867
    %v3225 = vsel %vm2869, %v3224, %v3223
    %v3226 = vperm.slane %v1085, %v2871
    %v3227 = vsel %vm2873, %v3226, %v3225
    %v3228 = vperm.slane %v1088, %v2875
    %v3229 = vsel %vm2877, %v3228, %v3227
    %v3230 = vperm.slane %v1091, %v2879
    %v3231 = vsel %vm2881, %v3230, %v3229
    %v3232 = vperm.slane %v1094, %v2883
    %v3233 = vsel %vm2885, %v3232, %v3231
    %v3234 = vperm.slane %v1097, %v2887
    %v3235 = vsel %vm2889, %v3234, %v3233
    %v3236 = vperm.slane %v1100, %v2891
    %v3237 = vsel %vm2893, %v3236, %v3235
    %v3238 = vperm.slane %v1103, %v2895
    %v3239 = vsel %vm2897, %v3238, %v3237
    %v3240 = vperm.slane %v1106, %v2837
    %v3241 = vperm.slane %v1109, %v2839
    %v3242 = vsel %vm2841, %v3241, %v3240
    %v3243 = vperm.slane %v1112, %v2843
    %v3244 = vsel %vm2845, %v3243, %v3242
    %v3245 = vperm.slane %v1115, %v2847
    %v3246 = vsel %vm2849, %v3245, %v3244
    %v3247 = vperm.slane %v1118, %v2851
    %v3248 = vsel %vm2853, %v3247, %v3246
    %v3249 = vperm.slane %v1121, %v2855
    %v3250 = vsel %vm2857, %v3249, %v3248
    %v3251 = vperm.slane %v1124, %v2859
    %v3252 = vsel %vm2861, %v3251, %v3250
    %v3253 = vperm.slane %v1127, %v2863
    %v3254 = vsel %vm2865, %v3253, %v3252
    %v3255 = vperm.slane %v1130, %v2867
    %v3256 = vsel %vm2869, %v3255, %v3254
    %v3257 = vperm.slane %v1133, %v2871
    %v3258 = vsel %vm2873, %v3257, %v3256
    %v3259 = vperm.slane %v1136, %v2875
    %v3260 = vsel %vm2877, %v3259, %v3258
    %v3261 = vperm.slane %v1139, %v2879
    %v3262 = vsel %vm2881, %v3261, %v3260
    %v3263 = vperm.slane %v1142, %v2883
    %v3264 = vsel %vm2885, %v3263, %v3262
    %v3265 = vperm.slane %v1145, %v2887
    %v3266 = vsel %vm2889, %v3265, %v3264
    %v3267 = vperm.slane %v1148, %v2891
    %v3268 = vsel %vm2893, %v3267, %v3266
    %v3269 = vperm.slane %v1151, %v2895
    %v3270 = vsel %vm2897, %v3269, %v3268
    %v3271 = vperm.slane %v1154, %v2837
    %v3272 = vperm.slane %v1157, %v2839
    %v3273 = vsel %vm2841, %v3272, %v3271
    %v3274 = vperm.slane %v1160, %v2843
    %v3275 = vsel %vm2845, %v3274, %v3273
    %v3276 = vperm.slane %v1163, %v2847
    %v3277 = vsel %vm2849, %v3276, %v3275
    %v3278 = vperm.slane %v1166, %v2851
    %v3279 = vsel %vm2853, %v3278, %v3277
    %v3280 = vperm.slane %v1169, %v2855
    %v3281 = vsel %vm2857, %v3280, %v3279
    %v3282 = vperm.slane %v1172, %v2859
    %v3283 = vsel %vm2861, %v3282, %v3281
    %v3284 = vperm.slane %v1175, %v2863
    %v3285 = vsel %vm2865, %v3284, %v3283
    %v3286 = vperm.slane %v1178, %v2867
    %v3287 = vsel %vm2869, %v3286, %v3285
    %v3288 = vperm.slane %v1181, %v2871
    %v3289 = vsel %vm2873, %v3288, %v3287
    %v3290 = vperm.slane %v1184, %v2875
    %v3291 = vsel %vm2877, %v3290, %v3289
    %v3292 = vperm.slane %v1187, %v2879
    %v3293 = vsel %vm2881, %v3292, %v3291
    %v3294 = vperm.slane %v1190, %v2883
    %v3295 = vsel %vm2885, %v3294, %v3293
    %v3296 = vperm.slane %v1193, %v2887
    %v3297 = vsel %vm2889, %v3296, %v3295
    %v3298 = vperm.slane %v1196, %v2891
    %v3299 = vsel %vm2893, %v3298, %v3297
    %v3300 = vperm.slane %v1199, %v2895
    %v3301 = vsel %vm2897, %v3300, %v3299
    %v3302 = vperm.slane %v1202, %v2837
    %v3303 = vperm.slane %v1205, %v2839
    %v3304 = vsel %vm2841, %v3303, %v3302
    %v3305 = vperm.slane %v1208, %v2843
    %v3306 = vsel %vm2845, %v3305, %v3304
    %v3307 = vperm.slane %v1211, %v2847
    %v3308 = vsel %vm2849, %v3307, %v3306
    %v3309 = vperm.slane %v1214, %v2851
    %v3310 = vsel %vm2853, %v3309, %v3308
    %v3311 = vperm.slane %v1217, %v2855
    %v3312 = vsel %vm2857, %v3311, %v3310
    %v3313 = vperm.slane %v1220, %v2859
    %v3314 = vsel %vm2861, %v3313, %v3312
    %v3315 = vperm.slane %v1223, %v2863
    %v3316 = vsel %vm2865, %v3315, %v3314
    %v3317 = vperm.slane %v1226, %v2867
    %v3318 = vsel %vm2869, %v3317, %v3316
    %v3319 = vperm.slane %v1229, %v2871
    %v3320 = vsel %vm2873, %v3319, %v3318
    %v3321 = vperm.slane %v1232, %v2875
    %v3322 = vsel %vm2877, %v3321, %v3320
    %v3323 = vperm.slane %v1235, %v2879
    %v3324 = vsel %vm2881, %v3323, %v3322
    %v3325 = vperm.slane %v1238, %v2883
    %v3326 = vsel %vm2885, %v3325, %v3324
    %v3327 = vperm.slane %v1241, %v2887
    %v3328 = vsel %vm2889, %v3327, %v3326
    %v3329 = vperm.slane %v1244, %v2891
    %v3330 = vsel %vm2893, %v3329, %v3328
    %v3331 = vperm.slane %v1247, %v2895
    %v3332 = vsel %vm2897, %v3331, %v3330
    %v3333 = vperm.slane %v1250, %v2837
    %v3334 = vperm.slane %v1253, %v2839
    %v3335 = vsel %vm2841, %v3334, %v3333
    %v3336 = vperm.slane %v1256, %v2843
    %v3337 = vsel %vm2845, %v3336, %v3335
    %v3338 = vperm.slane %v1259, %v2847
    %v3339 = vsel %vm2849, %v3338, %v3337
    %v3340 = vperm.slane %v1262, %v2851
    %v3341 = vsel %vm2853, %v3340, %v3339
    %v3342 = vperm.slane %v1265, %v2855
    %v3343 = vsel %vm2857, %v3342, %v3341
    %v3344 = vperm.slane %v1268, %v2859
    %v3345 = vsel %vm2861, %v3344, %v3343
    %v3346 = vperm.slane %v1271, %v2863
    %v3347 = vsel %vm2865, %v3346, %v3345
    %v3348 = vperm.slane %v1274, %v2867
    %v3349 = vsel %vm2869, %v3348, %v3347
    %v3350 = vperm.slane %v1277, %v2871
    %v3351 = vsel %vm2873, %v3350, %v3349
    %v3352 = vperm.slane %v1280, %v2875
    %v3353 = vsel %vm2877, %v3352, %v3351
    %v3354 = vperm.slane %v1283, %v2879
    %v3355 = vsel %vm2881, %v3354, %v3353
    %v3356 = vperm.slane %v1286, %v2883
    %v3357 = vsel %vm2885, %v3356, %v3355
    %v3358 = vperm.slane %v1289, %v2887
    %v3359 = vsel %vm2889, %v3358, %v3357
    %v3360 = vperm.slane %v1292, %v2891
    %v3361 = vsel %vm2893, %v3360, %v3359
    %v3362 = vperm.slane %v1295, %v2895
    %v3363 = vsel %vm2897, %v3362, %v3361
    %v3364 = vperm.slane %v1298, %v2837
    %v3365 = vperm.slane %v1301, %v2839
    %v3366 = vsel %vm2841, %v3365, %v3364
    %v3367 = vperm.slane %v1304, %v2843
    %v3368 = vsel %vm2845, %v3367, %v3366
    %v3369 = vperm.slane %v1307, %v2847
    %v3370 = vsel %vm2849, %v3369, %v3368
    %v3371 = vperm.slane %v1310, %v2851
    %v3372 = vsel %vm2853, %v3371, %v3370
    %v3373 = vperm.slane %v1313, %v2855
    %v3374 = vsel %vm2857, %v3373, %v3372
    %v3375 = vperm.slane %v1316, %v2859
    %v3376 = vsel %vm2861, %v3375, %v3374
    %v3377 = vperm.slane %v1319, %v2863
    %v3378 = vsel %vm2865, %v3377, %v3376
    %v3379 = vperm.slane %v1322, %v2867
    %v3380 = vsel %vm2869, %v3379, %v3378
    %v3381 = vperm.slane %v1325, %v2871
    %v3382 = vsel %vm2873, %v3381, %v3380
    %v3383 = vperm.slane %v1328, %v2875
    %v3384 = vsel %vm2877, %v3383, %v3382
    %v3385 = vperm.slane %v1331, %v2879
    %v3386 = vsel %vm2881, %v3385, %v3384
    %v3387 = vperm.slane %v1334, %v2883
    %v3388 = vsel %vm2885, %v3387, %v3386
    %v3389 = vperm.slane %v1337, %v2887
    %v3390 = vsel %vm2889, %v3389, %v3388
    %v3391 = vperm.slane %v1340, %v2891
    %v3392 = vsel %vm2893, %v3391, %v3390
    %v3393 = vperm.slane %v1343, %v2895
    %v3394 = vsel %vm2897, %v3393, %v3392
    %v3395 = vperm.slane %v1346, %v2837
    %v3396 = vperm.slane %v1349, %v2839
    %v3397 = vsel %vm2841, %v3396, %v3395
    %v3398 = vperm.slane %v1352, %v2843
    %v3399 = vsel %vm2845, %v3398, %v3397
    %v3400 = vperm.slane %v1355, %v2847
    %v3401 = vsel %vm2849, %v3400, %v3399
    %v3402 = vperm.slane %v1358, %v2851
    %v3403 = vsel %vm2853, %v3402, %v3401
    %v3404 = vperm.slane %v1361, %v2855
    %v3405 = vsel %vm2857, %v3404, %v3403
    %v3406 = vperm.slane %v1364, %v2859
    %v3407 = vsel %vm2861, %v3406, %v3405
    %v3408 = vperm.slane %v1367, %v2863
    %v3409 = vsel %vm2865, %v3408, %v3407
    %v3410 = vperm.slane %v1370, %v2867
    %v3411 = vsel %vm2869, %v3410, %v3409
    %v3412 = vperm.slane %v1373, %v2871
    %v3413 = vsel %vm2873, %v3412, %v3411
    %v3414 = vperm.slane %v1376, %v2875
    %v3415 = vsel %vm2877, %v3414, %v3413
    %v3416 = vperm.slane %v1379, %v2879
    %v3417 = vsel %vm2881, %v3416, %v3415
    %v3418 = vperm.slane %v1382, %v2883
    %v3419 = vsel %vm2885, %v3418, %v3417
    %v3420 = vperm.slane %v1385, %v2887
    %v3421 = vsel %vm2889, %v3420, %v3419
    %v3422 = vperm.slane %v1388, %v2891
    %v3423 = vsel %vm2893, %v3422, %v3421
    %v3424 = vperm.slane %v1391, %v2895
    %v3425 = vsel %vm2897, %v3424, %v3423
    %v3426 = vperm.slane %v1394, %v2837
    %v3427 = vperm.slane %v1397, %v2839
    %v3428 = vsel %vm2841, %v3427, %v3426
    %v3429 = vperm.slane %v1400, %v2843
    %v3430 = vsel %vm2845, %v3429, %v3428
    %v3431 = vperm.slane %v1403, %v2847
    %v3432 = vsel %vm2849, %v3431, %v3430
    %v3433 = vperm.slane %v1406, %v2851
    %v3434 = vsel %vm2853, %v3433, %v3432
    %v3435 = vperm.slane %v1409, %v2855
    %v3436 = vsel %vm2857, %v3435, %v3434
    %v3437 = vperm.slane %v1412, %v2859
    %v3438 = vsel %vm2861, %v3437, %v3436
    %v3439 = vperm.slane %v1415, %v2863
    %v3440 = vsel %vm2865, %v3439, %v3438
    %v3441 = vperm.slane %v1418, %v2867
    %v3442 = vsel %vm2869, %v3441, %v3440
    %v3443 = vperm.slane %v1421, %v2871
    %v3444 = vsel %vm2873, %v3443, %v3442
    %v3445 = vperm.slane %v1424, %v2875
    %v3446 = vsel %vm2877, %v3445, %v3444
    %v3447 = vperm.slane %v1427, %v2879
    %v3448 = vsel %vm2881, %v3447, %v3446
    %v3449 = vperm.slane %v1430, %v2883
    %v3450 = vsel %vm2885, %v3449, %v3448
    %v3451 = vperm.slane %v1433, %v2887
    %v3452 = vsel %vm2889, %v3451, %v3450
    %v3453 = vperm.slane %v1436, %v2891
    %v3454 = vsel %vm2893, %v3453, %v3452
    %v3455 = vperm.slane %v1439, %v2895
    %v3456 = vsel %vm2897, %v3455, %v3454
    %v3457 = vperm.slane %v1442, %v2837
    %v3458 = vperm.slane %v1445, %v2839
    %v3459 = vsel %vm2841, %v3458, %v3457
    %v3460 = vperm.slane %v1448, %v2843
    %v3461 = vsel %vm2845, %v3460, %v3459
    %v3462 = vperm.slane %v1451, %v2847
    %v3463 = vsel %vm2849, %v3462, %v3461
    %v3464 = vperm.slane %v1454, %v2851
    %v3465 = vsel %vm2853, %v3464, %v3463
    %v3466 = vperm.slane %v1457, %v2855
    %v3467 = vsel %vm2857, %v3466, %v3465
    %v3468 = vperm.slane %v1460, %v2859
    %v3469 = vsel %vm2861, %v3468, %v3467
    %v3470 = vperm.slane %v1463, %v2863
    %v3471 = vsel %vm2865, %v3470, %v3469
    %v3472 = vperm.slane %v1466, %v2867
    %v3473 = vsel %vm2869, %v3472, %v3471
    %v3474 = vperm.slane %v1469, %v2871
    %v3475 = vsel %vm2873, %v3474, %v3473
    %v3476 = vperm.slane %v1472, %v2875
    %v3477 = vsel %vm2877, %v3476, %v3475
    %v3478 = vperm.slane %v1475, %v2879
    %v3479 = vsel %vm2881, %v3478, %v3477
    %v3480 = vperm.slane %v1478, %v2883
    %v3481 = vsel %vm2885, %v3480, %v3479
    %v3482 = vperm.slane %v1481, %v2887
    %v3483 = vsel %vm2889, %v3482, %v3481
    %v3484 = vperm.slane %v1484, %v2891
    %v3485 = vsel %vm2893, %v3484, %v3483
    %v3486 = vperm.slane %v1487, %v2895
    %v3487 = vsel %vm2897, %v3486, %v3485
    %v3488 = vperm.slane %v1490, %v2837
    %v3489 = vperm.slane %v1493, %v2839
    %v3490 = vsel %vm2841, %v3489, %v3488
    %v3491 = vperm.slane %v1496, %v2843
    %v3492 = vsel %vm2845, %v3491, %v3490
    %v3493 = vperm.slane %v1499, %v2847
    %v3494 = vsel %vm2849, %v3493, %v3492
    %v3495 = vperm.slane %v1502, %v2851
    %v3496 = vsel %vm2853, %v3495, %v3494
    %v3497 = vperm.slane %v1505, %v2855
    %v3498 = vsel %vm2857, %v3497, %v3496
    %v3499 = vperm.slane %v1508, %v2859
    %v3500 = vsel %vm2861, %v3499, %v3498
    %v3501 = vperm.slane %v1511, %v2863
    %v3502 = vsel %vm2865, %v3501, %v3500
    %v3503 = vperm.slane %v1514, %v2867
    %v3504 = vsel %vm2869, %v3503, %v3502
    %v3505 = vperm.slane %v1517, %v2871
    %v3506 = vsel %vm2873, %v3505, %v3504
    %v3507 = vperm.slane %v1520, %v2875
    %v3508 = vsel %vm2877, %v3507, %v3506
    %v3509 = vperm.slane %v1523, %v2879
    %v3510 = vsel %vm2881, %v3509, %v3508
    %v3511 = vperm.slane %v1526, %v2883
    %v3512 = vsel %vm2885, %v3511, %v3510
    %v3513 = vperm.slane %v1529, %v2887
    %v3514 = vsel %vm2889, %v3513, %v3512
    %v3515 = vperm.slane %v1532, %v2891
    %v3516 = vsel %vm2893, %v3515, %v3514
    %v3517 = vperm.slane %v1535, %v2895
    %v3518 = vsel %vm2897, %v3517, %v3516
    %v3519 = vperm.slane %v1538, %v2837
    %v3520 = vperm.slane %v1541, %v2839
    %v3521 = vsel %vm2841, %v3520, %v3519
    %v3522 = vperm.slane %v1544, %v2843
    %v3523 = vsel %vm2845, %v3522, %v3521
    %v3524 = vperm.slane %v1547, %v2847
    %v3525 = vsel %vm2849, %v3524, %v3523
    %v3526 = vperm.slane %v1550, %v2851
    %v3527 = vsel %vm2853, %v3526, %v3525
    %v3528 = vperm.slane %v1553, %v2855
    %v3529 = vsel %vm2857, %v3528, %v3527
    %v3530 = vperm.slane %v1556, %v2859
    %v3531 = vsel %vm2861, %v3530, %v3529
    %v3532 = vperm.slane %v1559, %v2863
    %v3533 = vsel %vm2865, %v3532, %v3531
    %v3534 = vperm.slane %v1562, %v2867
    %v3535 = vsel %vm2869, %v3534, %v3533
    %v3536 = vperm.slane %v1565, %v2871
    %v3537 = vsel %vm2873, %v3536, %v3535
    %v3538 = vperm.slane %v1568, %v2875
    %v3539 = vsel %vm2877, %v3538, %v3537
    %v3540 = vperm.slane %v1571, %v2879
    %v3541 = vsel %vm2881, %v3540, %v3539
    %v3542 = vperm.slane %v1574, %v2883
    %v3543 = vsel %vm2885, %v3542, %v3541
    %v3544 = vperm.slane %v1577, %v2887
    %v3545 = vsel %vm2889, %v3544, %v3543
    %v3546 = vperm.slane %v1580, %v2891
    %v3547 = vsel %vm2893, %v3546, %v3545
    %v3548 = vperm.slane %v1583, %v2895
    %v3549 = vsel %vm2897, %v3548, %v3547
    %v3550 = vperm.slane %v1586, %v2837
    %v3551 = vperm.slane %v1589, %v2839
    %v3552 = vsel %vm2841, %v3551, %v3550
    %v3553 = vperm.slane %v1592, %v2843
    %v3554 = vsel %vm2845, %v3553, %v3552
    %v3555 = vperm.slane %v1595, %v2847
    %v3556 = vsel %vm2849, %v3555, %v3554
    %v3557 = vperm.slane %v1598, %v2851
    %v3558 = vsel %vm2853, %v3557, %v3556
    %v3559 = vperm.slane %v1601, %v2855
    %v3560 = vsel %vm2857, %v3559, %v3558
    %v3561 = vperm.slane %v1604, %v2859
    %v3562 = vsel %vm2861, %v3561, %v3560
    %v3563 = vperm.slane %v1607, %v2863
    %v3564 = vsel %vm2865, %v3563, %v3562
    %v3565 = vperm.slane %v1610, %v2867
    %v3566 = vsel %vm2869, %v3565, %v3564
    %v3567 = vperm.slane %v1613, %v2871
    %v3568 = vsel %vm2873, %v3567, %v3566
    %v3569 = vperm.slane %v1616, %v2875
    %v3570 = vsel %vm2877, %v3569, %v3568
    %v3571 = vperm.slane %v1619, %v2879
    %v3572 = vsel %vm2881, %v3571, %v3570
    %v3573 = vperm.slane %v1622, %v2883
    %v3574 = vsel %vm2885, %v3573, %v3572
    %v3575 = vperm.slane %v1625, %v2887
    %v3576 = vsel %vm2889, %v3575, %v3574
    %v3577 = vperm.slane %v1628, %v2891
    %v3578 = vsel %vm2893, %v3577, %v3576
    %v3579 = vperm.slane %v1631, %v2895
    %v3580 = vsel %vm2897, %v3579, %v3578
    %v3581 = vperm.slane %v1634, %v2837
    %v3582 = vperm.slane %v1637, %v2839
    %v3583 = vsel %vm2841, %v3582, %v3581
    %v3584 = vperm.slane %v1640, %v2843
    %v3585 = vsel %vm2845, %v3584, %v3583
    %v3586 = vperm.slane %v1643, %v2847
    %v3587 = vsel %vm2849, %v3586, %v3585
    %v3588 = vperm.slane %v1646, %v2851
    %v3589 = vsel %vm2853, %v3588, %v3587
    %v3590 = vperm.slane %v1649, %v2855
    %v3591 = vsel %vm2857, %v3590, %v3589
    %v3592 = vperm.slane %v1652, %v2859
    %v3593 = vsel %vm2861, %v3592, %v3591
    %v3594 = vperm.slane %v1655, %v2863
    %v3595 = vsel %vm2865, %v3594, %v3593
    %v3596 = vperm.slane %v1658, %v2867
    %v3597 = vsel %vm2869, %v3596, %v3595
    %v3598 = vperm.slane %v1661, %v2871
    %v3599 = vsel %vm2873, %v3598, %v3597
    %v3600 = vperm.slane %v1664, %v2875
    %v3601 = vsel %vm2877, %v3600, %v3599
    %v3602 = vperm.slane %v1667, %v2879
    %v3603 = vsel %vm2881, %v3602, %v3601
    %v3604 = vperm.slane %v1670, %v2883
    %v3605 = vsel %vm2885, %v3604, %v3603
    %v3606 = vperm.slane %v1673, %v2887
    %v3607 = vsel %vm2889, %v3606, %v3605
    %v3608 = vperm.slane %v1676, %v2891
    %v3609 = vsel %vm2893, %v3608, %v3607
    %v3610 = vperm.slane %v1679, %v2895
    %v3611 = vsel %vm2897, %v3610, %v3609
    %v3612 = vperm.slane %v1682, %v2837
    %v3613 = vperm.slane %v1685, %v2839
    %v3614 = vsel %vm2841, %v3613, %v3612
    %v3615 = vperm.slane %v1688, %v2843
    %v3616 = vsel %vm2845, %v3615, %v3614
    %v3617 = vperm.slane %v1691, %v2847
    %v3618 = vsel %vm2849, %v3617, %v3616
    %v3619 = vperm.slane %v1694, %v2851
    %v3620 = vsel %vm2853, %v3619, %v3618
    %v3621 = vperm.slane %v1697, %v2855
    %v3622 = vsel %vm2857, %v3621, %v3620
    %v3623 = vperm.slane %v1700, %v2859
    %v3624 = vsel %vm2861, %v3623, %v3622
    %v3625 = vperm.slane %v1703, %v2863
    %v3626 = vsel %vm2865, %v3625, %v3624
    %v3627 = vperm.slane %v1706, %v2867
    %v3628 = vsel %vm2869, %v3627, %v3626
    %v3629 = vperm.slane %v1709, %v2871
    %v3630 = vsel %vm2873, %v3629, %v3628
    %v3631 = vperm.slane %v1712, %v2875
    %v3632 = vsel %vm2877, %v3631, %v3630
    %v3633 = vperm.slane %v1715, %v2879
    %v3634 = vsel %vm2881, %v3633, %v3632
    %v3635 = vperm.slane %v1718, %v2883
    %v3636 = vsel %vm2885, %v3635, %v3634
    %v3637 = vperm.slane %v1721, %v2887
    %v3638 = vsel %vm2889, %v3637, %v3636
    %v3639 = vperm.slane %v1724, %v2891
    %v3640 = vsel %vm2893, %v3639, %v3638
    %v3641 = vperm.slane %v1727, %v2895
    %v3642 = vsel %vm2897, %v3641, %v3640
    %v3643 = vperm.slane %v1730, %v2837
    %v3644 = vperm.slane %v1733, %v2839
    %v3645 = vsel %vm2841, %v3644, %v3643
    %v3646 = vperm.slane %v1736, %v2843
    %v3647 = vsel %vm2845, %v3646, %v3645
    %v3648 = vperm.slane %v1739, %v2847
    %v3649 = vsel %vm2849, %v3648, %v3647
    %v3650 = vperm.slane %v1742, %v2851
    %v3651 = vsel %vm2853, %v3650, %v3649
    %v3652 = vperm.slane %v1745, %v2855
    %v3653 = vsel %vm2857, %v3652, %v3651
    %v3654 = vperm.slane %v1748, %v2859
    %v3655 = vsel %vm2861, %v3654, %v3653
    %v3656 = vperm.slane %v1751, %v2863
    %v3657 = vsel %vm2865, %v3656, %v3655
    %v3658 = vperm.slane %v1754, %v2867
    %v3659 = vsel %vm2869, %v3658, %v3657
    %v3660 = vperm.slane %v1757, %v2871
    %v3661 = vsel %vm2873, %v3660, %v3659
    %v3662 = vperm.slane %v1760, %v2875
    %v3663 = vsel %vm2877, %v3662, %v3661
    %v3664 = vperm.slane %v1763, %v2879
    %v3665 = vsel %vm2881, %v3664, %v3663
    %v3666 = vperm.slane %v1766, %v2883
    %v3667 = vsel %vm2885, %v3666, %v3665
    %v3668 = vperm.slane %v1769, %v2887
    %v3669 = vsel %vm2889, %v3668, %v3667
    %v3670 = vperm.slane %v1772, %v2891
    %v3671 = vsel %vm2893, %v3670, %v3669
    %v3672 = vperm.slane %v1775, %v2895
    %v3673 = vsel %vm2897, %v3672, %v3671
    %v3674 = vperm.slane %v1778, %v2837
    %v3675 = vperm.slane %v1781, %v2839
    %v3676 = vsel %vm2841, %v3675, %v3674
    %v3677 = vperm.slane %v1784, %v2843
    %v3678 = vsel %vm2845, %v3677, %v3676
    %v3679 = vperm.slane %v1787, %v2847
    %v3680 = vsel %vm2849, %v3679, %v3678
    %v3681 = vperm.slane %v1790, %v2851
    %v3682 = vsel %vm2853, %v3681, %v3680
    %v3683 = vperm.slane %v1793, %v2855
    %v3684 = vsel %vm2857, %v3683, %v3682
    %v3685 = vperm.slane %v1796, %v2859
    %v3686 = vsel %vm2861, %v3685, %v3684
    %v3687 = vperm.slane %v1799, %v2863
    %v3688 = vsel %vm2865, %v3687, %v3686
    %v3689 = vperm.slane %v1802, %v2867
    %v3690 = vsel %vm2869, %v3689, %v3688
    %v3691 = vperm.slane %v1805, %v2871
    %v3692 = vsel %vm2873, %v3691, %v3690
    %v3693 = vperm.slane %v1808, %v2875
    %v3694 = vsel %vm2877, %v3693, %v3692
    %v3695 = vperm.slane %v1811, %v2879
    %v3696 = vsel %vm2881, %v3695, %v3694
    %v3697 = vperm.slane %v1814, %v2883
    %v3698 = vsel %vm2885, %v3697, %v3696
    %v3699 = vperm.slane %v1817, %v2887
    %v3700 = vsel %vm2889, %v3699, %v3698
    %v3701 = vperm.slane %v1820, %v2891
    %v3702 = vsel %vm2893, %v3701, %v3700
    %v3703 = vperm.slane %v1823, %v2895
    %v3704 = vsel %vm2897, %v3703, %v3702
    %v3705 = vperm.slane %v1826, %v2837
    %v3706 = vperm.slane %v1829, %v2839
    %v3707 = vsel %vm2841, %v3706, %v3705
    %v3708 = vperm.slane %v1832, %v2843
    %v3709 = vsel %vm2845, %v3708, %v3707
    %v3710 = vperm.slane %v1835, %v2847
    %v3711 = vsel %vm2849, %v3710, %v3709
    %v3712 = vperm.slane %v1838, %v2851
    %v3713 = vsel %vm2853, %v3712, %v3711
    %v3714 = vperm.slane %v1841, %v2855
    %v3715 = vsel %vm2857, %v3714, %v3713
    %v3716 = vperm.slane %v1844, %v2859
    %v3717 = vsel %vm2861, %v3716, %v3715
    %v3718 = vperm.slane %v1847, %v2863
    %v3719 = vsel %vm2865, %v3718, %v3717
    %v3720 = vperm.slane %v1850, %v2867
    %v3721 = vsel %vm2869, %v3720, %v3719
    %v3722 = vperm.slane %v1853, %v2871
    %v3723 = vsel %vm2873, %v3722, %v3721
    %v3724 = vperm.slane %v1856, %v2875
    %v3725 = vsel %vm2877, %v3724, %v3723
    %v3726 = vperm.slane %v1859, %v2879
    %v3727 = vsel %vm2881, %v3726, %v3725
    %v3728 = vperm.slane %v1862, %v2883
    %v3729 = vsel %vm2885, %v3728, %v3727
    %v3730 = vperm.slane %v1865, %v2887
    %v3731 = vsel %vm2889, %v3730, %v3729
    %v3732 = vperm.slane %v1868, %v2891
    %v3733 = vsel %vm2893, %v3732, %v3731
    %v3734 = vperm.slane %v1871, %v2895
    %v3735 = vsel %vm2897, %v3734, %v3733
    %v3736 = vperm.slane %v1874, %v2837
    %v3737 = vperm.slane %v1877, %v2839
    %v3738 = vsel %vm2841, %v3737, %v3736
    %v3739 = vperm.slane %v1880, %v2843
    %v3740 = vsel %vm2845, %v3739, %v3738
    %v3741 = vperm.slane %v1883, %v2847
    %v3742 = vsel %vm2849, %v3741, %v3740
    %v3743 = vperm.slane %v1886, %v2851
    %v3744 = vsel %vm2853, %v3743, %v3742
    %v3745 = vperm.slane %v1889, %v2855
    %v3746 = vsel %vm2857, %v3745, %v3744
    %v3747 = vperm.slane %v1892, %v2859
    %v3748 = vsel %vm2861, %v3747, %v3746
    %v3749 = vperm.slane %v1895, %v2863
    %v3750 = vsel %vm2865, %v3749, %v3748
    %v3751 = vperm.slane %v1898, %v2867
    %v3752 = vsel %vm2869, %v3751, %v3750
    %v3753 = vperm.slane %v1901, %v2871
    %v3754 = vsel %vm2873, %v3753, %v3752
    %v3755 = vperm.slane %v1904, %v2875
    %v3756 = vsel %vm2877, %v3755, %v3754
    %v3757 = vperm.slane %v1907, %v2879
    %v3758 = vsel %vm2881, %v3757, %v3756
    %v3759 = vperm.slane %v1910, %v2883
    %v3760 = vsel %vm2885, %v3759, %v3758
    %v3761 = vperm.slane %v1913, %v2887
    %v3762 = vsel %vm2889, %v3761, %v3760
    %v3763 = vperm.slane %v1916, %v2891
    %v3764 = vsel %vm2893, %v3763, %v3762
    %v3765 = vperm.slane %v1919, %v2895
    %v3766 = vsel %vm2897, %v3765, %v3764
    %v3767 = vperm.slane %v1922, %v2837
    %v3768 = vperm.slane %v1925, %v2839
    %v3769 = vsel %vm2841, %v3768, %v3767
    %v3770 = vperm.slane %v1928, %v2843
    %v3771 = vsel %vm2845, %v3770, %v3769
    %v3772 = vperm.slane %v1931, %v2847
    %v3773 = vsel %vm2849, %v3772, %v3771
    %v3774 = vperm.slane %v1934, %v2851
    %v3775 = vsel %vm2853, %v3774, %v3773
    %v3776 = vperm.slane %v1937, %v2855
    %v3777 = vsel %vm2857, %v3776, %v3775
    %v3778 = vperm.slane %v1940, %v2859
    %v3779 = vsel %vm2861, %v3778, %v3777
    %v3780 = vperm.slane %v1943, %v2863
    %v3781 = vsel %vm2865, %v3780, %v3779
    %v3782 = vperm.slane %v1946, %v2867
    %v3783 = vsel %vm2869, %v3782, %v3781
    %v3784 = vperm.slane %v1949, %v2871
    %v3785 = vsel %vm2873, %v3784, %v3783
    %v3786 = vperm.slane %v1952, %v2875
    %v3787 = vsel %vm2877, %v3786, %v3785
    %v3788 = vperm.slane %v1955, %v2879
    %v3789 = vsel %vm2881, %v3788, %v3787
    %v3790 = vperm.slane %v1958, %v2883
    %v3791 = vsel %vm2885, %v3790, %v3789
    %v3792 = vperm.slane %v1961, %v2887
    %v3793 = vsel %vm2889, %v3792, %v3791
    %v3794 = vperm.slane %v1964, %v2891
    %v3795 = vsel %vm2893, %v3794, %v3793
    %v3796 = vperm.slane %v1967, %v2895
    %v3797 = vsel %vm2897, %v3796, %v3795
    %v3798 = vperm.slane %v1970, %v2837
    %v3799 = vperm.slane %v1973, %v2839
    %v3800 = vsel %vm2841, %v3799, %v3798
    %v3801 = vperm.slane %v1976, %v2843
    %v3802 = vsel %vm2845, %v3801, %v3800
    %v3803 = vperm.slane %v1979, %v2847
    %v3804 = vsel %vm2849, %v3803, %v3802
    %v3805 = vperm.slane %v1982, %v2851
    %v3806 = vsel %vm2853, %v3805, %v3804
    %v3807 = vperm.slane %v1985, %v2855
    %v3808 = vsel %vm2857, %v3807, %v3806
    %v3809 = vperm.slane %v1988, %v2859
    %v3810 = vsel %vm2861, %v3809, %v3808
    %v3811 = vperm.slane %v1991, %v2863
    %v3812 = vsel %vm2865, %v3811, %v3810
    %v3813 = vperm.slane %v1994, %v2867
    %v3814 = vsel %vm2869, %v3813, %v3812
    %v3815 = vperm.slane %v1997, %v2871
    %v3816 = vsel %vm2873, %v3815, %v3814
    %v3817 = vperm.slane %v2000, %v2875
    %v3818 = vsel %vm2877, %v3817, %v3816
    %v3819 = vperm.slane %v2003, %v2879
    %v3820 = vsel %vm2881, %v3819, %v3818
    %v3821 = vperm.slane %v2006, %v2883
    %v3822 = vsel %vm2885, %v3821, %v3820
    %v3823 = vperm.slane %v2009, %v2887
    %v3824 = vsel %vm2889, %v3823, %v3822
    %v3825 = vperm.slane %v2012, %v2891
    %v3826 = vsel %vm2893, %v3825, %v3824
    %v3827 = vperm.slane %v2015, %v2895
    %v3828 = vsel %vm2897, %v3827, %v3826
    %v3829 = vperm.slane %v2018, %v2837
    %v3830 = vperm.slane %v2021, %v2839
    %v3831 = vsel %vm2841, %v3830, %v3829
    %v3832 = vperm.slane %v2024, %v2843
    %v3833 = vsel %vm2845, %v3832, %v3831
    %v3834 = vperm.slane %v2027, %v2847
    %v3835 = vsel %vm2849, %v3834, %v3833
    %v3836 = vperm.slane %v2030, %v2851
    %v3837 = vsel %vm2853, %v3836, %v3835
    %v3838 = vperm.slane %v2033, %v2855
    %v3839 = vsel %vm2857, %v3838, %v3837
    %v3840 = vperm.slane %v2036, %v2859
    %v3841 = vsel %vm2861, %v3840, %v3839
    %v3842 = vperm.slane %v2039, %v2863
    %v3843 = vsel %vm2865, %v3842, %v3841
    %v3844 = vperm.slane %v2042, %v2867
    %v3845 = vsel %vm2869, %v3844, %v3843
    %v3846 = vperm.slane %v2045, %v2871
    %v3847 = vsel %vm2873, %v3846, %v3845
    %v3848 = vperm.slane %v2048, %v2875
    %v3849 = vsel %vm2877, %v3848, %v3847
    %v3850 = vperm.slane %v2051, %v2879
    %v3851 = vsel %vm2881, %v3850, %v3849
    %v3852 = vperm.slane %v2054, %v2883
    %v3853 = vsel %vm2885, %v3852, %v3851
    %v3854 = vperm.slane %v2057, %v2887
    %v3855 = vsel %vm2889, %v3854, %v3853
    %v3856 = vperm.slane %v2060, %v2891
    %v3857 = vsel %vm2893, %v3856, %v3855
    %v3858 = vperm.slane %v2063, %v2895
    %v3859 = vsel %vm2897, %v3858, %v3857
    %vm3860 = vcmask 1041409
    %v3861 = vsel %vm3860, %v3394, %v2898
    %v3862 = vsel %vm3860, %v3425, %v2929
    %v3863 = vsel %vm3860, %v3456, %v2960
    %v3864 = vsel %vm3860, %v3487, %v2991
    %v3865 = vsel %vm3860, %v3518, %v3022
    %v3866 = vsel %vm3860, %v3549, %v3053
    %v3867 = vsel %vm3860, %v3580, %v3084
    %v3868 = vsel %vm3860, %v3611, %v3115
    %v3869 = vsel %vm3860, %v3642, %v3146
    %v3870 = vsel %vm3860, %v3673, %v3177
    %v3871 = vsel %vm3860, %v3704, %v3208
    %v3872 = vsel %vm3860, %v3735, %v3239
    %v3873 = vsel %vm3860, %v3766, %v3270
    %v3874 = vsel %vm3860, %v3797, %v3301
    %v3875 = vsel %vm3860, %v3828, %v3332
    %v3876 = vsel %vm3860, %v3859, %v3363
    %3893 = vmatpush.msra.mxu0 %v2079
    %3894 = vmatpush.msra.mxu0 %v2078
    %3895 = vmatpush.msra.mxu0 %v2077
    %3896 = vmatpush.msra.mxu0 %v2076
    %3897 = vmatpush.msra.mxu0 %v2075
    %3898 = vmatpush.msra.mxu0 %v2074
    %3899 = vmatpush.msra.mxu0 %v2073
    %3900 = vmatpush.msra.mxu0 %v2072
    %3901 = vmatpush.msra.mxu0 %v2071
    %3902 = vmatpush.msra.mxu0 %v2070
    %3903 = vmatpush.msra.mxu0 %v2069
    %3904 = vmatpush.msra.mxu0 %v2068
    %3905 = vmatpush.msra.mxu0 %v2067
    %3906 = vmatpush.msra.mxu0 %v2066
    %3907 = vmatpush.msra.mxu0 %v2065
    %3908 = vmatpush.msra.mxu0 %v2064
    %3909 = vmatmul.f32.gmra.mxu0 %v3861
    %v3910 = vpop.f32.mrf.mxu0
    %v3911 = vadd.f32 %v2322, %v3910
    %3912 = vdwg.mxu0
    %3913 = vmatpush.msra.mxu0 %v2095
    %3914 = vmatpush.msra.mxu0 %v2094
    %3915 = vmatpush.msra.mxu0 %v2093
    %3916 = vmatpush.msra.mxu0 %v2092
    %3917 = vmatpush.msra.mxu0 %v2091
    %3918 = vmatpush.msra.mxu0 %v2090
    %3919 = vmatpush.msra.mxu0 %v2089
    %3920 = vmatpush.msra.mxu0 %v2088
    %3921 = vmatpush.msra.mxu0 %v2087
    %3922 = vmatpush.msra.mxu0 %v2086
    %3923 = vmatpush.msra.mxu0 %v2085
    %3924 = vmatpush.msra.mxu0 %v2084
    %3925 = vmatpush.msra.mxu0 %v2083
    %3926 = vmatpush.msra.mxu0 %v2082
    %3927 = vmatpush.msra.mxu0 %v2081
    %3928 = vmatpush.msra.mxu0 %v2080
    %3929 = vmatmul.f32.gmra.mxu0 %v3862
    %v3930 = vpop.f32.mrf.mxu0
    %v3931 = vadd.f32 %v3911, %v3930
    %3932 = vdwg.mxu0
    %3933 = vmatpush.msra.mxu0 %v2111
    %3934 = vmatpush.msra.mxu0 %v2110
    %3935 = vmatpush.msra.mxu0 %v2109
    %3936 = vmatpush.msra.mxu0 %v2108
    %3937 = vmatpush.msra.mxu0 %v2107
    %3938 = vmatpush.msra.mxu0 %v2106
    %3939 = vmatpush.msra.mxu0 %v2105
    %3940 = vmatpush.msra.mxu0 %v2104
    %3941 = vmatpush.msra.mxu0 %v2103
    %3942 = vmatpush.msra.mxu0 %v2102
    %3943 = vmatpush.msra.mxu0 %v2101
    %3944 = vmatpush.msra.mxu0 %v2100
    %3945 = vmatpush.msra.mxu0 %v2099
    %3946 = vmatpush.msra.mxu0 %v2098
    %3947 = vmatpush.msra.mxu0 %v2097
    %3948 = vmatpush.msra.mxu0 %v2096
    %3949 = vmatmul.f32.gmra.mxu0 %v3863
    %v3950 = vpop.f32.mrf.mxu0
    %v3951 = vadd.f32 %v3931, %v3950
    %3952 = vdwg.mxu0
    %3953 = vmatpush.msra.mxu0 %v2127
    %3954 = vmatpush.msra.mxu0 %v2126
    %3955 = vmatpush.msra.mxu0 %v2125
    %3956 = vmatpush.msra.mxu0 %v2124
    %3957 = vmatpush.msra.mxu0 %v2123
    %3958 = vmatpush.msra.mxu0 %v2122
    %3959 = vmatpush.msra.mxu0 %v2121
    %3960 = vmatpush.msra.mxu0 %v2120
    %3961 = vmatpush.msra.mxu0 %v2119
    %3962 = vmatpush.msra.mxu0 %v2118
    %3963 = vmatpush.msra.mxu0 %v2117
    %3964 = vmatpush.msra.mxu0 %v2116
    %3965 = vmatpush.msra.mxu0 %v2115
    %3966 = vmatpush.msra.mxu0 %v2114
    %3967 = vmatpush.msra.mxu0 %v2113
    %3968 = vmatpush.msra.mxu0 %v2112
    %3969 = vmatmul.f32.gmra.mxu0 %v3864
    %v3970 = vpop.f32.mrf.mxu0
    %v3971 = vadd.f32 %v3951, %v3970
    %3972 = vdwg.mxu0
    %3973 = vmatpush.msra.mxu0 %v2143
    %3974 = vmatpush.msra.mxu0 %v2142
    %3975 = vmatpush.msra.mxu0 %v2141
    %3976 = vmatpush.msra.mxu0 %v2140
    %3977 = vmatpush.msra.mxu0 %v2139
    %3978 = vmatpush.msra.mxu0 %v2138
    %3979 = vmatpush.msra.mxu0 %v2137
    %3980 = vmatpush.msra.mxu0 %v2136
    %3981 = vmatpush.msra.mxu0 %v2135
    %3982 = vmatpush.msra.mxu0 %v2134
    %3983 = vmatpush.msra.mxu0 %v2133
    %3984 = vmatpush.msra.mxu0 %v2132
    %3985 = vmatpush.msra.mxu0 %v2131
    %3986 = vmatpush.msra.mxu0 %v2130
    %3987 = vmatpush.msra.mxu0 %v2129
    %3988 = vmatpush.msra.mxu0 %v2128
    %3989 = vmatmul.f32.gmra.mxu0 %v3865
    %v3990 = vpop.f32.mrf.mxu0
    %v3991 = vadd.f32 %v3971, %v3990
    %3992 = vdwg.mxu0
    %3993 = vmatpush.msra.mxu0 %v2159
    %3994 = vmatpush.msra.mxu0 %v2158
    %3995 = vmatpush.msra.mxu0 %v2157
    %3996 = vmatpush.msra.mxu0 %v2156
    %3997 = vmatpush.msra.mxu0 %v2155
    %3998 = vmatpush.msra.mxu0 %v2154
    %3999 = vmatpush.msra.mxu0 %v2153
    %4000 = vmatpush.msra.mxu0 %v2152
    %4001 = vmatpush.msra.mxu0 %v2151
    %4002 = vmatpush.msra.mxu0 %v2150
    %4003 = vmatpush.msra.mxu0 %v2149
    %4004 = vmatpush.msra.mxu0 %v2148
    %4005 = vmatpush.msra.mxu0 %v2147
    %4006 = vmatpush.msra.mxu0 %v2146
    %4007 = vmatpush.msra.mxu0 %v2145
    %4008 = vmatpush.msra.mxu0 %v2144
    %4009 = vmatmul.f32.gmra.mxu0 %v3866
    %v4010 = vpop.f32.mrf.mxu0
    %v4011 = vadd.f32 %v3991, %v4010
    %4012 = vdwg.mxu0
    %4013 = vmatpush.msra.mxu0 %v2175
    %4014 = vmatpush.msra.mxu0 %v2174
    %4015 = vmatpush.msra.mxu0 %v2173
    %4016 = vmatpush.msra.mxu0 %v2172
    %4017 = vmatpush.msra.mxu0 %v2171
    %4018 = vmatpush.msra.mxu0 %v2170
    %4019 = vmatpush.msra.mxu0 %v2169
    %4020 = vmatpush.msra.mxu0 %v2168
    %4021 = vmatpush.msra.mxu0 %v2167
    %4022 = vmatpush.msra.mxu0 %v2166
    %4023 = vmatpush.msra.mxu0 %v2165
    %4024 = vmatpush.msra.mxu0 %v2164
    %4025 = vmatpush.msra.mxu0 %v2163
    %4026 = vmatpush.msra.mxu0 %v2162
    %4027 = vmatpush.msra.mxu0 %v2161
    %4028 = vmatpush.msra.mxu0 %v2160
    %4029 = vmatmul.f32.gmra.mxu0 %v3867
    %v4030 = vpop.f32.mrf.mxu0
    %v4031 = vadd.f32 %v4011, %v4030
    %4032 = vdwg.mxu0
    %4033 = vmatpush.msra.mxu0 %v2191
    %4034 = vmatpush.msra.mxu0 %v2190
    %4035 = vmatpush.msra.mxu0 %v2189
    %4036 = vmatpush.msra.mxu0 %v2188
    %4037 = vmatpush.msra.mxu0 %v2187
    %4038 = vmatpush.msra.mxu0 %v2186
    %4039 = vmatpush.msra.mxu0 %v2185
    %4040 = vmatpush.msra.mxu0 %v2184
    %4041 = vmatpush.msra.mxu0 %v2183
    %4042 = vmatpush.msra.mxu0 %v2182
    %4043 = vmatpush.msra.mxu0 %v2181
    %4044 = vmatpush.msra.mxu0 %v2180
    %4045 = vmatpush.msra.mxu0 %v2179
    %4046 = vmatpush.msra.mxu0 %v2178
    %4047 = vmatpush.msra.mxu0 %v2177
    %4048 = vmatpush.msra.mxu0 %v2176
    %4049 = vmatmul.f32.gmra.mxu0 %v3868
    %v4050 = vpop.f32.mrf.mxu0
    %v4051 = vadd.f32 %v4031, %v4050
    %4052 = vdwg.mxu0
    %4053 = vmatpush.msra.mxu0 %v2207
    %4054 = vmatpush.msra.mxu0 %v2206
    %4055 = vmatpush.msra.mxu0 %v2205
    %4056 = vmatpush.msra.mxu0 %v2204
    %4057 = vmatpush.msra.mxu0 %v2203
    %4058 = vmatpush.msra.mxu0 %v2202
    %4059 = vmatpush.msra.mxu0 %v2201
    %4060 = vmatpush.msra.mxu0 %v2200
    %4061 = vmatpush.msra.mxu0 %v2199
    %4062 = vmatpush.msra.mxu0 %v2198
    %4063 = vmatpush.msra.mxu0 %v2197
    %4064 = vmatpush.msra.mxu0 %v2196
    %4065 = vmatpush.msra.mxu0 %v2195
    %4066 = vmatpush.msra.mxu0 %v2194
    %4067 = vmatpush.msra.mxu0 %v2193
    %4068 = vmatpush.msra.mxu0 %v2192
    %4069 = vmatmul.f32.gmra.mxu0 %v3869
    %v4070 = vpop.f32.mrf.mxu0
    %v4071 = vadd.f32 %v4051, %v4070
    %4072 = vdwg.mxu0
    %4073 = vmatpush.msra.mxu0 %v2223
    %4074 = vmatpush.msra.mxu0 %v2222
    %4075 = vmatpush.msra.mxu0 %v2221
    %4076 = vmatpush.msra.mxu0 %v2220
    %4077 = vmatpush.msra.mxu0 %v2219
    %4078 = vmatpush.msra.mxu0 %v2218
    %4079 = vmatpush.msra.mxu0 %v2217
    %4080 = vmatpush.msra.mxu0 %v2216
    %4081 = vmatpush.msra.mxu0 %v2215
    %4082 = vmatpush.msra.mxu0 %v2214
    %4083 = vmatpush.msra.mxu0 %v2213
    %4084 = vmatpush.msra.mxu0 %v2212
    %4085 = vmatpush.msra.mxu0 %v2211
    %4086 = vmatpush.msra.mxu0 %v2210
    %4087 = vmatpush.msra.mxu0 %v2209
    %4088 = vmatpush.msra.mxu0 %v2208
    %4089 = vmatmul.f32.gmra.mxu0 %v3870
    %v4090 = vpop.f32.mrf.mxu0
    %v4091 = vadd.f32 %v4071, %v4090
    %4092 = vdwg.mxu0
    %4093 = vmatpush.msra.mxu0 %v2239
    %4094 = vmatpush.msra.mxu0 %v2238
    %4095 = vmatpush.msra.mxu0 %v2237
    %4096 = vmatpush.msra.mxu0 %v2236
    %4097 = vmatpush.msra.mxu0 %v2235
    %4098 = vmatpush.msra.mxu0 %v2234
    %4099 = vmatpush.msra.mxu0 %v2233
    %4100 = vmatpush.msra.mxu0 %v2232
    %4101 = vmatpush.msra.mxu0 %v2231
    %4102 = vmatpush.msra.mxu0 %v2230
    %4103 = vmatpush.msra.mxu0 %v2229
    %4104 = vmatpush.msra.mxu0 %v2228
    %4105 = vmatpush.msra.mxu0 %v2227
    %4106 = vmatpush.msra.mxu0 %v2226
    %4107 = vmatpush.msra.mxu0 %v2225
    %4108 = vmatpush.msra.mxu0 %v2224
    %4109 = vmatmul.f32.gmra.mxu0 %v3871
    %v4110 = vpop.f32.mrf.mxu0
    %v4111 = vadd.f32 %v4091, %v4110
    %4112 = vdwg.mxu0
    %4113 = vmatpush.msra.mxu0 %v2255
    %4114 = vmatpush.msra.mxu0 %v2254
    %4115 = vmatpush.msra.mxu0 %v2253
    %4116 = vmatpush.msra.mxu0 %v2252
    %4117 = vmatpush.msra.mxu0 %v2251
    %4118 = vmatpush.msra.mxu0 %v2250
    %4119 = vmatpush.msra.mxu0 %v2249
    %4120 = vmatpush.msra.mxu0 %v2248
    %4121 = vmatpush.msra.mxu0 %v2247
    %4122 = vmatpush.msra.mxu0 %v2246
    %4123 = vmatpush.msra.mxu0 %v2245
    %4124 = vmatpush.msra.mxu0 %v2244
    %4125 = vmatpush.msra.mxu0 %v2243
    %4126 = vmatpush.msra.mxu0 %v2242
    %4127 = vmatpush.msra.mxu0 %v2241
    %4128 = vmatpush.msra.mxu0 %v2240
    %4129 = vmatmul.f32.gmra.mxu0 %v3872
    %v4130 = vpop.f32.mrf.mxu0
    %v4131 = vadd.f32 %v4111, %v4130
    %4132 = vdwg.mxu0
    %4133 = vmatpush.msra.mxu0 %v2271
    %4134 = vmatpush.msra.mxu0 %v2270
    %4135 = vmatpush.msra.mxu0 %v2269
    %4136 = vmatpush.msra.mxu0 %v2268
    %4137 = vmatpush.msra.mxu0 %v2267
    %4138 = vmatpush.msra.mxu0 %v2266
    %4139 = vmatpush.msra.mxu0 %v2265
    %4140 = vmatpush.msra.mxu0 %v2264
    %4141 = vmatpush.msra.mxu0 %v2263
    %4142 = vmatpush.msra.mxu0 %v2262
    %4143 = vmatpush.msra.mxu0 %v2261
    %4144 = vmatpush.msra.mxu0 %v2260
    %4145 = vmatpush.msra.mxu0 %v2259
    %4146 = vmatpush.msra.mxu0 %v2258
    %4147 = vmatpush.msra.mxu0 %v2257
    %4148 = vmatpush.msra.mxu0 %v2256
    %4149 = vmatmul.f32.gmra.mxu0 %v3873
    %v4150 = vpop.f32.mrf.mxu0
    %v4151 = vadd.f32 %v4131, %v4150
    %4152 = vdwg.mxu0
    %4153 = vmatpush.msra.mxu0 %v2287
    %4154 = vmatpush.msra.mxu0 %v2286
    %4155 = vmatpush.msra.mxu0 %v2285
    %4156 = vmatpush.msra.mxu0 %v2284
    %4157 = vmatpush.msra.mxu0 %v2283
    %4158 = vmatpush.msra.mxu0 %v2282
    %4159 = vmatpush.msra.mxu0 %v2281
    %4160 = vmatpush.msra.mxu0 %v2280
    %4161 = vmatpush.msra.mxu0 %v2279
    %4162 = vmatpush.msra.mxu0 %v2278
    %4163 = vmatpush.msra.mxu0 %v2277
    %4164 = vmatpush.msra.mxu0 %v2276
    %4165 = vmatpush.msra.mxu0 %v2275
    %4166 = vmatpush.msra.mxu0 %v2274
    %4167 = vmatpush.msra.mxu0 %v2273
    %4168 = vmatpush.msra.mxu0 %v2272
    %4169 = vmatmul.f32.gmra.mxu0 %v3874
    %v4170 = vpop.f32.mrf.mxu0
    %v4171 = vadd.f32 %v4151, %v4170
    %4172 = vdwg.mxu0
    %4173 = vmatpush.msra.mxu0 %v2303
    %4174 = vmatpush.msra.mxu0 %v2302
    %4175 = vmatpush.msra.mxu0 %v2301
    %4176 = vmatpush.msra.mxu0 %v2300
    %4177 = vmatpush.msra.mxu0 %v2299
    %4178 = vmatpush.msra.mxu0 %v2298
    %4179 = vmatpush.msra.mxu0 %v2297
    %4180 = vmatpush.msra.mxu0 %v2296
    %4181 = vmatpush.msra.mxu0 %v2295
    %4182 = vmatpush.msra.mxu0 %v2294
    %4183 = vmatpush.msra.mxu0 %v2293
    %4184 = vmatpush.msra.mxu0 %v2292
    %4185 = vmatpush.msra.mxu0 %v2291
    %4186 = vmatpush.msra.mxu0 %v2290
    %4187 = vmatpush.msra.mxu0 %v2289
    %4188 = vmatpush.msra.mxu0 %v2288
    %4189 = vmatmul.f32.gmra.mxu0 %v3875
    %v4190 = vpop.f32.mrf.mxu0
    %v4191 = vadd.f32 %v4171, %v4190
    %4192 = vdwg.mxu0
    %4193 = vmatpush.msra.mxu0 %v2319
    %4194 = vmatpush.msra.mxu0 %v2318
    %4195 = vmatpush.msra.mxu0 %v2317
    %4196 = vmatpush.msra.mxu0 %v2316
    %4197 = vmatpush.msra.mxu0 %v2315
    %4198 = vmatpush.msra.mxu0 %v2314
    %4199 = vmatpush.msra.mxu0 %v2313
    %4200 = vmatpush.msra.mxu0 %v2312
    %4201 = vmatpush.msra.mxu0 %v2311
    %4202 = vmatpush.msra.mxu0 %v2310
    %4203 = vmatpush.msra.mxu0 %v2309
    %4204 = vmatpush.msra.mxu0 %v2308
    %4205 = vmatpush.msra.mxu0 %v2307
    %4206 = vmatpush.msra.mxu0 %v2306
    %4207 = vmatpush.msra.mxu0 %v2305
    %4208 = vmatpush.msra.mxu0 %v2304
    %4209 = vmatmul.f32.gmra.mxu0 %v3876
    %v4210 = vpop.f32.mrf.mxu0
    %v4211 = vadd.f32 %v4191, %v4210
    %4212 = vdwg.mxu0
    %4213 = vst [vmem:[#allocation2] sm:$0x3] %v4211
    // Predicated region
    $region14: #{tpu_custom_call.1} parent=1 // pred_check
      _
    $region15: #{tpu_custom_call.1} parent=1 // pred_check_branch
      %4215 = sbr.rel (0) target = $region17
    $region16: #{tpu_custom_call.1} parent=1 // pred_region
      %4217 = vsyncadd [#allocation3], 0
      %s4219 = sshll.u32 [#allocation2], 4
      %s4220 = int_to_ptr.vmem [resolvable:$true] %s4219
      %s4221 = sshll.u32 %s3, 4
      %s4222 = int_to_ptr.hbm [resolvable:$true] %s4221
      %4224 = dma.vmem_to_hbm [thread:$0]  %s4220, 32, %s4222, [#allocation3]
    $region17: #{tpu_custom_call.1} parent=1 // pred_fallthru
      _
    // Predicated region
    $region18: #{tpu_custom_call.1} parent=1 // pred_check
      _
    $region19: #{tpu_custom_call.1} parent=1 // pred_check_branch
      %4226 = sbr.rel (0) target = $region21
    $region20: #{tpu_custom_call.1} parent=1 // pred_region
      %4228 = dma.done [#allocation3], 32
    $region21: #{tpu_custom_call.1} parent=1 // pred_fallthru
      _
    %4229 = vsyncpa [#allocation3], 1

</llo_original>
